<compile_context>
chip_gen: v6e
topology: v6e:2x2x1
jax: 0.10.0
libtpu: 0.0.40
codegen_flags: <defaults>
</compile_context>

<pallas_src>
import jax
import jax.numpy as jnp
import numpy as np
from jax import lax
from jax.experimental import pallas as pl
from jax.experimental.pallas import tpu as pltpu


# ----------------------------- Pallas kernels -------------------------------

def _conv_stack_kernel(x1e_ref, x1o_ref, w1_ref, w2_ref, w3_ref, o_ref,
                       pad1, pad2, cb2, cb3):
    """Fused conv1+pool -> conv2+pool -> conv3+pool for ONE sample (grid over batch).

    x1e_ref/x1o_ref : (1, H, W/2, 25) bf16  im2col'd conv1 input, even/odd output cols
    w1_ref          : (25, 64)  bf16        conv1 weight, taps on the contraction axis
    w2_ref, w3_ref  : HWIO bf16             3x3 conv weights
    o_ref           : (1, H/8, W/8, 32) bf16 pooled conv3 output (NHWC)
    pad1, pad2      : zero-bordered pooled activations feeding the next stage
    cb2, cb3        : tiny per-row-block conv scratch for the fused pooling
    """
    H2p2, W2p2, C1 = pad1.shape                  # (H/2+2, W/2+2, 64)
    H3p2, W3p2, C2 = pad2.shape                  # (H/4+2, W/4+2, 32)
    H2, W2 = H2p2 - 2, W2p2 - 2
    H3, W3 = H3p2 - 2, W3p2 - 2
    C3 = o_ref.shape[3]
    _, H, Wh1, K1 = x1e_ref.shape                # Wh1 = W/2
    RB1 = min(8, H)
    RB2 = cb2.shape[0]
    RB3 = cb3.shape[0]

    # ---- zero only the 1-px border of the padded inter-stage buffers -------
    def zero_border(pad, Hi, Wi, C):
        zr = jnp.zeros((1, Wi + 2, C), pad.dtype)
        pad[pl.ds(0, 1), :, :] = zr
        pad[pl.ds(Hi + 1, 1), :, :] = zr
        zc = jnp.zeros((Hi + 2, 1, C), pad.dtype)
        pad[:, pl.ds(0, 1), :] = zc
        pad[:, pl.ds(Wi + 1, 1), :] = zc

    zero_border(pad1, H2, W2, C1)
    zero_border(pad2, H3, W3, C2)

    # ---- stage 1: Conv2d(1, 64, 5, padding=2) + MaxPool2d(2, 2), fully fused ----
    # One MXU dot per column parity per row block; pooling happens in registers,
    # so the full-resolution conv1 activation is never materialised.
    def s1_body(i, carry):
        h0 = pl.multiple_of(i * RB1, RB1)

        def half(ref):
            patch = ref[0, pl.ds(h0, RB1), :, :].reshape(RB1 * Wh1, K1)
            return jnp.dot(patch, w1_ref[...], preferred_element_type=jnp.float32)

        wmax = jnp.maximum(half(x1e_ref), half(x1o_ref)).reshape(RB1, Wh1, C1)
        t = wmax.reshape(RB1 // 2, 2, Wh1, C1)
        pooled = jnp.maximum(t[:, 0], t[:, 1])                  # (RB1/2, W/2, 64)
        pad1[pl.ds(1 + i * (RB1 // 2), RB1 // 2), pl.ds(1, Wh1), :] = \
            pooled.astype(pad1.dtype)
        return carry

    lax.fori_loop(0, H // RB1, s1_body, 0)

    # ---- stages 2/3: 3x3 conv (per-tap MXU dots, f32 acc, first tap inits acc)
    #      + 2x2 maxpool fused via a tiny per-row-block scratch ---------------
    def conv3x3_pool(src, w_ref, cbuf, Hout, Wout, Cin, Cout, rb, store):
        Wh = Wout // 2

        def body(i, carry):
            h0 = pl.multiple_of(i * rb, rb)
            acc = None
            for kh in range(3):
                for kw in range(3):
                    patch = src[pl.ds(h0 + kh, rb), pl.ds(kw, Wout), :]
                    patch = patch.reshape(rb * Wout, Cin)
                    d = jnp.dot(patch, w_ref[kh, kw],
                                preferred_element_type=jnp.float32)
                    acc = d if acc is None else acc + d
            cbuf[...] = acc.reshape(rb, Wout, Cout)
            wmax = jnp.maximum(cbuf[:, pl.ds(0, Wh, 2), :],
                               cbuf[:, pl.ds(1, Wh, 2), :])     # (rb, Wh, Cout)
            t = wmax.reshape(rb // 2, 2, Wh, Cout)
            store(i, jnp.maximum(t[:, 0], t[:, 1]))             # (rb/2, Wh, Cout)
            return carry

        lax.fori_loop(0, Hout // rb, body, 0)

    def store2(i, pooled):
        pad2[pl.ds(1 + i * (RB2 // 2), RB2 // 2), pl.ds(1, W3), :] = \
            pooled.astype(pad2.dtype)

    def store3(i, pooled):
        o_ref[0, pl.ds(i * (RB3 // 2), RB3 // 2), :, :] = pooled.astype(o_ref.dtype)

    conv3x3_pool(pad1, w2_ref, cb2, H2, W2, C1, C2, RB2, store2)
    conv3x3_pool(pad2, w3_ref, cb3, H3, W3, C2, C3, RB3, store3)


def _head_kernel(xf_ref, wfc_ref, bfc_ref, wp_ref, bp_ref,
                 ws1_ref, bs1_ref, g_ref, b_ref, ws2_ref, bs2_ref,
                 pred_ref, sel_ref):
    """fc1 -> {predict head, select head (Linear/ReLU/BatchNorm1d(train)/Linear/Sigmoid)}.

    Whole batch lives in one block (required for correct BatchNorm batch statistics).
    xf and fc1_w are bf16 (MXU), all post-fc1 math stays in f32.
    """
    h = jnp.dot(xf_ref[...], wfc_ref[...],
                preferred_element_type=jnp.float32) + bfc_ref[...]
    # predict head: Linear(256, 9)
    pred_ref[...] = jnp.dot(h, wp_ref[...],
                            preferred_element_type=jnp.float32) + bp_ref[...]
    # select head
    s = jnp.dot(h, ws1_ref[...], preferred_element_type=jnp.float32) + bs1_ref[...]
    s = jnp.maximum(s, 0.0)                                     # ReLU
    mu = jnp.mean(s, axis=0, keepdims=True)                     # BatchNorm1d (training stats)
    var = jnp.mean((s - mu) ** 2, axis=0, keepdims=True)        # biased variance
    sn = (s - mu) * lax.rsqrt(var + 1e-5)
    sn = sn * g_ref[...] + b_ref[...]
    z = jnp.dot(sn, ws2_ref[...], preferred_element_type=jnp.float32) + bs2_ref[...]
    sel_ref[...] = 1.0 / (1.0 + jnp.exp(-z))                    # Sigmoid


# ------------------------------ model wrapper --------------------------------

def conv_stack(x1e, x1o, w1mat, w2, w3):
    N, H, Wh1, K1 = x1e.shape
    W = Wh1 * 2
    H2, W2 = H // 2, W // 2
    H3, W3 = H // 4, W // 4
    Ho, Wo = H // 8, W // 8
    RB2 = min(8, H2)
    RB3 = min(8, H3)
    return pl.pallas_call(
        _conv_stack_kernel,
        out_shape=jax.ShapeDtypeStruct((N, Ho, Wo, 32), jnp.bfloat16),
        grid=(N,),
        in_specs=[pl.BlockSpec((1, H, Wh1, K1), lambda n: (n, 0, 0, 0)),
                  pl.BlockSpec((1, H, Wh1, K1), lambda n: (n, 0, 0, 0)),
                  pl.BlockSpec((K1, 64), lambda n: (0, 0)),
                  pl.BlockSpec((3, 3, 64, 32), lambda n: (0, 0, 0, 0)),
                  pl.BlockSpec((3, 3, 32, 32), lambda n: (0, 0, 0, 0))],
        out_specs=pl.BlockSpec((1, Ho, Wo, 32), lambda n: (n, 0, 0, 0)),
        scratch_shapes=[pltpu.VMEM((H2 + 2, W2 + 2, 64), jnp.bfloat16),   # pad1
                        pltpu.VMEM((H3 + 2, W3 + 2, 32), jnp.float32),    # pad2
                        pltpu.VMEM((RB2, W2, 32), jnp.float32),           # cb2 (row block)
                        pltpu.VMEM((RB3, W3, 32), jnp.float32)],          # cb3 (row block)
        compiler_params=pltpu.CompilerParams(
            dimension_semantics=("parallel",),          # v7x: consider CORE_PARALLEL
            vmem_limit_bytes=32 * 1024 * 1024),
    )(x1e, x1o, w1mat, w2, w3)


def init_params(key, fc_in):
    ks = jax.random.split(key, 11)
    s = 0.05
    p = {
        "conv1_w": s * jax.random.normal(ks[0], (5, 5, 1, 64), jnp.float32),
        "conv2_w": s * jax.random.normal(ks[1], (3, 3, 64, 32), jnp.float32),
        "conv3_w": s * jax.random.normal(ks[2], (3, 3, 32, 32), jnp.float32),
        "fc1_w": s * jax.random.normal(ks[3], (fc_in, 256), jnp.float32),   # CHW order
        "fc1_b": s * jax.random.normal(ks[4], (1, 256), jnp.float32),
        "pred_w": s * jax.random.normal(ks[5], (256, 9), jnp.float32),
        "pred_b": s * jax.random.normal(ks[6], (1, 9), jnp.float32),
        "sel1_w": s * jax.random.normal(ks[7], (256, 256), jnp.float32),
        "sel1_b": s * jax.random.normal(ks[8], (1, 256), jnp.float32),
        "bn_gamma": jnp.ones((1, 256), jnp.float32),
        "bn_beta": jnp.zeros((1, 256), jnp.float32),
        "sel2_w": s * jax.random.normal(ks[9], (256, 1), jnp.float32),
        "sel2_b": s * jax.random.normal(ks[10], (1, 1), jnp.float32),
    }
    return p


def model_forward(x_nchw, p):
    N, _, H, W = x_nchw.shape
    assert H % 8 == 0 and W % 8 == 0 and (W // 2) % 8 == 0
    Ho, Wo = H // 8, W // 8

    # conv1 im2col (wrapper-side layout plumbing): 25 taps on the contraction axis,
    # pre-split by output-column parity so the W-half of pool1 fuses into the dot.
    x2d = x_nchw[:, 0, :, :].astype(jnp.float32)
    xp = jnp.pad(x2d, ((0, 0), (2, 2), (2, 2)))                 # 'same' padding for 5x5
    taps = jnp.stack([xp[:, kh:kh + H, kw:kw + W]
                      for kh in range(5) for kw in range(5)], axis=-1)   # (N, H, W, 25)
    x1e = taps[:, :, 0::2, :].astype(jnp.bfloat16)
    x1o = taps[:, :, 1::2, :].astype(jnp.bfloat16)

    w1mat = p["conv1_w"].reshape(25, 64).astype(jnp.bfloat16)
    w2 = p["conv2_w"].astype(jnp.bfloat16)
    w3 = p["conv3_w"].astype(jnp.bfloat16)

    pooled = conv_stack(x1e, x1o, w1mat, w2, w3)                # (N, Ho, Wo, 32) bf16
    xf = pooled.reshape(N, Ho * Wo * 32)                        # free HWC flatten

    # Permute fc1's input rows once from PyTorch CHW-flatten order to HWC order so no
    # transpose is needed between the two kernels.
    fc1_w_hwc = (p["fc1_w"].reshape(32, Ho, Wo, 256)
                 .transpose(1, 2, 0, 3)
                 .reshape(Ho * Wo * 32, 256)).astype(jnp.bfloat16)

    pred, sel = pl.pallas_call(
        _head_kernel,
        out_shape=(jax.ShapeDtypeStruct((N, 9), jnp.float32),
                   jax.ShapeDtypeStruct((N, 1), jnp.float32)),
    )(xf, fc1_w_hwc, p["fc1_b"], p["pred_w"], p["pred_b"],
      p["sel1_w"], p["sel1_b"], p["bn_gamma"], p["bn_beta"],
      p["sel2_w"], p["sel2_b"])
    return pred, sel


# ------------------------------ pure-JAX reference ---------------------------

def ref_forward(x_nchw, p):
    hp = lax.Precision.HIGHEST
    x = jnp.transpose(x_nchw, (0, 2, 3, 1)).astype(jnp.float32)

    def conv(x, w, pad):
        return lax.conv_general_dilated(
            x, w, window_strides=(1, 1), padding=[(pad, pad), (pad, pad)],
            dimension_numbers=("NHWC", "HWIO", "NHWC"), precision=hp)

    def pool(x):
        return lax.reduce_window(x, -jnp.inf, lax.max,
                                 (1, 2, 2, 1), (1, 2, 2, 1), "VALID")

    x = pool(conv(x, p["conv1_w"], 2))
    x = pool(conv(x, p["conv2_w"], 1))
    x = pool(conv(x, p["conv3_w"], 1))
    N = x.shape[0]
    xf = jnp.transpose(x, (0, 3, 1, 2)).reshape(N, -1)          # PyTorch CHW flatten
    h = jnp.dot(xf, p["fc1_w"], precision=hp) + p["fc1_b"]
    pred = jnp.dot(h, p["pred_w"], precision=hp) + p["pred_b"]
    s = jnp.maximum(jnp.dot(h, p["sel1_w"], precision=hp) + p["sel1_b"], 0.0)
    mu = jnp.mean(s, axis=0, keepdims=True)
    var = jnp.mean((s - mu) ** 2, axis=0, keepdims=True)
    sn = (s - mu) / jnp.sqrt(var + 1e-5)
    sn = sn * p["bn_gamma"] + p["bn_beta"]
    z = jnp.dot(sn, p["sel2_w"], precision=hp) + p["sel2_b"]
    sel = 1.0 / (1.0 + jnp.exp(-z))
    return pred, sel


# ----------------------------------- main ------------------------------------

if __name__ == "__main__":
    key = jax.random.PRNGKey(0)
    kx, kp = jax.random.split(key)

    N, H, W = 4, 32, 32                       # small stand-in for the 1x256x256 input
    x = jax.random.normal(kx, (N, 1, H, W), jnp.float32)   # NCHW, like PyTorch
    fc_in = 32 * (H // 8) * (W // 8)          # = 512 here (32768 in the original module)
    params = init_params(kp, fc_in)

    fwd = jax.jit(model_forward)
    pred, sel = fwd(x, params)
    jax.block_until_ready((pred, sel))

    ref_pred, ref_sel = ref_forward(x, params)
    assert pred.shape == (N, 9) and sel.shape == (N, 1)
    # Tolerance reflects bf16 MXU operands (f32 accumulation) vs the f32 HIGHEST reference.
    np.testing.assert_allclose(np.asarray(pred), np.asarray(ref_pred), rtol=3e-2, atol=1e-2)
    np.testing.assert_allclose(np.asarray(sel), np.asarray(ref_sel), rtol=3e-2, atol=1e-2)

    print("KERNEL_OK")
</pallas_src>

<mosaic_0001>
module attributes {stable_mosaic.version = 11 : i64} {
  func.func @_conv_stack_kernel(%arg0: i32, %arg1: memref<1x32x16x25xbf16, #tpu.memory_space<vmem>>, %arg2: memref<1x32x16x25xbf16, #tpu.memory_space<vmem>>, %arg3: memref<25x64xbf16, #tpu.memory_space<vmem>>, %arg4: memref<3x3x64x32xbf16, #tpu.memory_space<vmem>>, %arg5: memref<3x3x32x32xbf16, #tpu.memory_space<vmem>>, %arg6: memref<1x4x4x32xbf16, #tpu.memory_space<vmem>>, %arg7: memref<18x18x64xbf16, #tpu.memory_space<vmem>>, %arg8: memref<10x10x32xf32, #tpu.memory_space<vmem>>, %arg9: memref<8x16x32xf32, #tpu.memory_space<vmem>>, %arg10: memref<8x8x32xf32, #tpu.memory_space<vmem>>) attributes {dimension_semantics = [#tpu.dimension_semantics<parallel>], iteration_bounds = array<i64: 4>, scalar_prefetch = 0 : i64, scratch_operands = 4 : i64, tpu.core_type = #tpu.core_type<tc>, window_params = [{transform_indices = @transform_0, window_bounds = array<i64: 1, 32, 16, 25>}, {transform_indices = @transform_1, window_bounds = array<i64: 1, 32, 16, 25>}, {pipeline_mode = #tpu.pipeline_mode<synchronous>, transform_indices = @transform_2, window_bounds = array<i64: 25, 64>}, {pipeline_mode = #tpu.pipeline_mode<synchronous>, transform_indices = @transform_3, window_bounds = array<i64: 3, 3, 64, 32>}, {pipeline_mode = #tpu.pipeline_mode<synchronous>, transform_indices = @transform_4, window_bounds = array<i64: 3, 3, 32, 32>}, {transform_indices = @transform_5, window_bounds = array<i64: 1, 4, 4, 32>}]} {
    %cst = arith.constant 0.000000e+00 : bf16
    %0 = vector.broadcast %cst : bf16 to vector<1x18x64xbf16>
    %c0 = arith.constant 0 : index
    %c0_0 = arith.constant 0 : index
    %c0_1 = arith.constant 0 : index
    %1 = vector.load %arg7[%c0, %c0_0, %c0_1] : memref<18x18x64xbf16, #tpu.memory_space<vmem>>, vector<1x18x64xbf16>
    tpu.vector_store %arg7[%c0, %c0_0, %c0_1], %0 {strides = array<i32>} : memref<18x18x64xbf16, #tpu.memory_space<vmem>>, vector<1x18x64xbf16>,
    %c17 = arith.constant 17 : index
    %c0_2 = arith.constant 0 : index
    %c0_3 = arith.constant 0 : index
    %2 = vector.load %arg7[%c17, %c0_2, %c0_3] : memref<18x18x64xbf16, #tpu.memory_space<vmem>>, vector<1x18x64xbf16>
    tpu.vector_store %arg7[%c17, %c0_2, %c0_3], %0 {strides = array<i32>} : memref<18x18x64xbf16, #tpu.memory_space<vmem>>, vector<1x18x64xbf16>,
    %cst_4 = arith.constant 0.000000e+00 : bf16
    %3 = vector.broadcast %cst_4 : bf16 to vector<18x1x64xbf16>
    %c0_5 = arith.constant 0 : index
    %c0_6 = arith.constant 0 : index
    %c0_7 = arith.constant 0 : index
    %4 = vector.load %arg7[%c0_5, %c0_6, %c0_7] : memref<18x18x64xbf16, #tpu.memory_space<vmem>>, vector<18x1x64xbf16>
    tpu.vector_store %arg7[%c0_5, %c0_6, %c0_7], %3 {strides = array<i32>} : memref<18x18x64xbf16, #tpu.memory_space<vmem>>, vector<18x1x64xbf16>,
    %c0_8 = arith.constant 0 : index
    %c17_9 = arith.constant 17 : index
    %c0_10 = arith.constant 0 : index
    %5 = vector.load %arg7[%c0_8, %c17_9, %c0_10] : memref<18x18x64xbf16, #tpu.memory_space<vmem>>, vector<18x1x64xbf16>
    tpu.vector_store %arg7[%c0_8, %c17_9, %c0_10], %3 {strides = array<i32>} : memref<18x18x64xbf16, #tpu.memory_space<vmem>>, vector<18x1x64xbf16>,
    %cst_11 = arith.constant 0.000000e+00 : f32
    %6 = vector.broadcast %cst_11 : f32 to vector<1x10x32xf32>
    %c0_12 = arith.constant 0 : index
    %c0_13 = arith.constant 0 : index
    %c0_14 = arith.constant 0 : index
    %7 = vector.load %arg8[%c0_12, %c0_13, %c0_14] : memref<10x10x32xf32, #tpu.memory_space<vmem>>, vector<1x10x32xf32>
    tpu.vector_store %arg8[%c0_12, %c0_13, %c0_14], %6 {strides = array<i32>} : memref<10x10x32xf32, #tpu.memory_space<vmem>>, vector<1x10x32xf32>,
    %c9 = arith.constant 9 : index
    %c0_15 = arith.constant 0 : index
    %c0_16 = arith.constant 0 : index
    %8 = vector.load %arg8[%c9, %c0_15, %c0_16] : memref<10x10x32xf32, #tpu.memory_space<vmem>>, vector<1x10x32xf32>
    tpu.vector_store %arg8[%c9, %c0_15, %c0_16], %6 {strides = array<i32>} : memref<10x10x32xf32, #tpu.memory_space<vmem>>, vector<1x10x32xf32>,
    %cst_17 = arith.constant 0.000000e+00 : f32
    %9 = vector.broadcast %cst_17 : f32 to vector<10x1x32xf32>
    %c0_18 = arith.constant 0 : index
    %c0_19 = arith.constant 0 : index
    %c0_20 = arith.constant 0 : index
    %10 = vector.load %arg8[%c0_18, %c0_19, %c0_20] : memref<10x10x32xf32, #tpu.memory_space<vmem>>, vector<10x1x32xf32>
    tpu.vector_store %arg8[%c0_18, %c0_19, %c0_20], %9 {strides = array<i32>} : memref<10x10x32xf32, #tpu.memory_space<vmem>>, vector<10x1x32xf32>,
    %c0_21 = arith.constant 0 : index
    %c9_22 = arith.constant 9 : index
    %c0_23 = arith.constant 0 : index
    %11 = vector.load %arg8[%c0_21, %c9_22, %c0_23] : memref<10x10x32xf32, #tpu.memory_space<vmem>>, vector<10x1x32xf32>
    tpu.vector_store %arg8[%c0_21, %c9_22, %c0_23], %9 {strides = array<i32>} : memref<10x10x32xf32, #tpu.memory_space<vmem>>, vector<10x1x32xf32>,
    %c0_i32 = arith.constant 0 : i32
    %c4_i32 = arith.constant 4 : i32
    %12 = arith.addi %c0_i32, %c4_i32 : i32
    %c1_i32 = arith.constant 1 : i32
    scf.for %arg11 = %c0_i32 to %12 step %c1_i32  : i32 {
      %c8_i32_113 = arith.constant 8 : i32
      %104 = arith.muli %arg11, %c8_i32_113 : i32
      %105 = tpu.assume_multiple %104, 8 : i32
      %c0_114 = arith.constant 0 : index
      %106 = arith.index_cast %105 : i32 to index
      %c0_115 = arith.constant 0 : index
      %c0_116 = arith.constant 0 : index
      %107 = vector.load %arg1[%c0_114, %106, %c0_115, %c0_116] : memref<1x32x16x25xbf16, #tpu.memory_space<vmem>>, vector<1x8x16x25xbf16>
      %108 = vector.shape_cast %107 : vector<1x8x16x25xbf16> to vector<8x16x25xbf16>
      %109 = vector.shape_cast %108 : vector<8x16x25xbf16> to vector<128x25xbf16>
      %c0_117 = arith.constant 0 : index
      %c0_118 = arith.constant 0 : index
      %110 = vector.load %arg3[%c0_117, %c0_118] : memref<25x64xbf16, #tpu.memory_space<vmem>>, vector<25x64xbf16>
      %cst_119 = arith.constant dense<0.000000e+00> : vector<128x64xf32>
      %111 = tpu.matmul %109, %110, %cst_119 {dimension_numbers = #tpu.dot_dimension_numbers<[1], [0], [0], [1], [0, 0, 1, 1], [], []>} : vector<128x25xbf16>, vector<25x64xbf16>, vector<128x64xf32> -> vector<128x64xf32>
      %c0_120 = arith.constant 0 : index
      %112 = arith.index_cast %105 : i32 to index
      %c0_121 = arith.constant 0 : index
      %c0_122 = arith.constant 0 : index
      %113 = vector.load %arg2[%c0_120, %112, %c0_121, %c0_122] : memref<1x32x16x25xbf16, #tpu.memory_space<vmem>>, vector<1x8x16x25xbf16>
      %114 = vector.shape_cast %113 : vector<1x8x16x25xbf16> to vector<8x16x25xbf16>
      %115 = vector.shape_cast %114 : vector<8x16x25xbf16> to vector<128x25xbf16>
      %c0_123 = arith.constant 0 : index
      %c0_124 = arith.constant 0 : index
      %116 = vector.load %arg3[%c0_123, %c0_124] : memref<25x64xbf16, #tpu.memory_space<vmem>>, vector<25x64xbf16>
      %cst_125 = arith.constant dense<0.000000e+00> : vector<128x64xf32>
      %117 = tpu.matmul %115, %116, %cst_125 {dimension_numbers = #tpu.dot_dimension_numbers<[1], [0], [0], [1], [0, 0, 1, 1], [], []>} : vector<128x25xbf16>, vector<25x64xbf16>, vector<128x64xf32> -> vector<128x64xf32>
      %118 = arith.maximumf %111, %117 : vector<128x64xf32>
      %119 = vector.shape_cast %118 : vector<128x64xf32> to vector<8x16x64xf32>
      %120 = vector.shape_cast %119 : vector<8x16x64xf32> to vector<4x2x16x64xf32>
      %121 = vector.extract_strided_slice %120 {offsets = [0, 0, 0, 0], sizes = [4, 1, 16, 64], strides = [1, 1, 1, 1]} : vector<4x2x16x64xf32> to vector<4x1x16x64xf32>
      %122 = vector.shape_cast %121 : vector<4x1x16x64xf32> to vector<4x16x64xf32>
      %123 = vector.extract_strided_slice %120 {offsets = [0, 1, 0, 0], sizes = [4, 1, 16, 64], strides = [1, 1, 1, 1]} : vector<4x2x16x64xf32> to vector<4x1x16x64xf32>
      %124 = vector.shape_cast %123 : vector<4x1x16x64xf32> to vector<4x16x64xf32>
      %125 = arith.maximumf %122, %124 : vector<4x16x64xf32>
      %126 = arith.truncf %125 : vector<4x16x64xf32> to vector<4x16x64xbf16>
      %c4_i32_126 = arith.constant 4 : i32
      %127 = arith.muli %arg11, %c4_i32_126 : i32
      %c1_i32_127 = arith.constant 1 : i32
      %128 = arith.addi %c1_i32_127, %127 : i32
      %129 = arith.index_cast %128 : i32 to index
      %c1_128 = arith.constant 1 : index
      %c0_129 = arith.constant 0 : index
      %130 = vector.load %arg7[%129, %c1_128, %c0_129] : memref<18x18x64xbf16, #tpu.memory_space<vmem>>, vector<4x16x64xbf16>
      tpu.vector_store %arg7[%129, %c1_128, %c0_129], %126 {strides = array<i32>} : memref<18x18x64xbf16, #tpu.memory_space<vmem>>, vector<4x16x64xbf16>,
    }
    %c4_i32_24 = arith.constant 4 : i32
    %c0_i32_25 = arith.constant 0 : i32
    %c2_i32 = arith.constant 2 : i32
    %13 = arith.addi %c0_i32_25, %c2_i32 : i32
    %c1_i32_26 = arith.constant 1 : i32
    scf.for %arg11 = %c0_i32_25 to %13 step %c1_i32_26  : i32 {
      %c8_i32_113 = arith.constant 8 : i32
      %104 = arith.muli %arg11, %c8_i32_113 : i32
      %105 = tpu.assume_multiple %104, 8 : i32
      %c0_i32_114 = arith.constant 0 : i32
      %106 = arith.addi %105, %c0_i32_114 : i32
      %107 = arith.index_cast %106 : i32 to index
      %c0_115 = arith.constant 0 : index
      %c0_116 = arith.constant 0 : index
      %108 = vector.load %arg7[%107, %c0_115, %c0_116] : memref<18x18x64xbf16, #tpu.memory_space<vmem>>, vector<8x16x64xbf16>
      %109 = vector.shape_cast %108 : vector<8x16x64xbf16> to vector<128x64xbf16>
      %c0_117 = arith.constant 0 : index
      %c0_118 = arith.constant 0 : index
      %c0_119 = arith.constant 0 : index
      %c0_120 = arith.constant 0 : index
      %110 = vector.load %arg4[%c0_117, %c0_118, %c0_119, %c0_120] : memref<3x3x64x32xbf16, #tpu.memory_space<vmem>>, vector<1x1x64x32xbf16>
      %111 = vector.shape_cast %110 : vector<1x1x64x32xbf16> to vector<64x32xbf16>
      %cst_121 = arith.constant dense<0.000000e+00> : vector<128x32xf32>
      %112 = tpu.matmul %109, %111, %cst_121 {dimension_numbers = #tpu.dot_dimension_numbers<[1], [0], [0], [1], [0, 0, 1, 1], [], []>} : vector<128x64xbf16>, vector<64x32xbf16>, vector<128x32xf32> -> vector<128x32xf32>
      %c0_i32_122 = arith.constant 0 : i32
      %113 = arith.addi %105, %c0_i32_122 : i32
      %114 = arith.index_cast %113 : i32 to index
      %c1_123 = arith.constant 1 : index
      %c0_124 = arith.constant 0 : index
      %115 = vector.load %arg7[%114, %c1_123, %c0_124] : memref<18x18x64xbf16, #tpu.memory_space<vmem>>, vector<8x16x64xbf16>
      %116 = vector.shape_cast %115 : vector<8x16x64xbf16> to vector<128x64xbf16>
      %c0_125 = arith.constant 0 : index
      %c1_126 = arith.constant 1 : index
      %c0_127 = arith.constant 0 : index
      %c0_128 = arith.constant 0 : index
      %117 = vector.load %arg4[%c0_125, %c1_126, %c0_127, %c0_128] : memref<3x3x64x32xbf16, #tpu.memory_space<vmem>>, vector<1x1x64x32xbf16>
      %118 = vector.shape_cast %117 : vector<1x1x64x32xbf16> to vector<64x32xbf16>
      %cst_129 = arith.constant dense<0.000000e+00> : vector<128x32xf32>
      %119 = tpu.matmul %116, %118, %cst_129 {dimension_numbers = #tpu.dot_dimension_numbers<[1], [0], [0], [1], [0, 0, 1, 1], [], []>} : vector<128x64xbf16>, vector<64x32xbf16>, vector<128x32xf32> -> vector<128x32xf32>
      %120 = arith.addf %112, %119 : vector<128x32xf32>
      %c0_i32_130 = arith.constant 0 : i32
      %121 = arith.addi %105, %c0_i32_130 : i32
      %122 = arith.index_cast %121 : i32 to index
      %c2_131 = arith.constant 2 : index
      %c0_132 = arith.constant 0 : index
      %123 = vector.load %arg7[%122, %c2_131, %c0_132] : memref<18x18x64xbf16, #tpu.memory_space<vmem>>, vector<8x16x64xbf16>
      %124 = vector.shape_cast %123 : vector<8x16x64xbf16> to vector<128x64xbf16>
      %c0_133 = arith.constant 0 : index
      %c2_134 = arith.constant 2 : index
      %c0_135 = arith.constant 0 : index
      %c0_136 = arith.constant 0 : index
      %125 = vector.load %arg4[%c0_133, %c2_134, %c0_135, %c0_136] : memref<3x3x64x32xbf16, #tpu.memory_space<vmem>>, vector<1x1x64x32xbf16>
      %126 = vector.shape_cast %125 : vector<1x1x64x32xbf16> to vector<64x32xbf16>
      %cst_137 = arith.constant dense<0.000000e+00> : vector<128x32xf32>
      %127 = tpu.matmul %124, %126, %cst_137 {dimension_numbers = #tpu.dot_dimension_numbers<[1], [0], [0], [1], [0, 0, 1, 1], [], []>} : vector<128x64xbf16>, vector<64x32xbf16>, vector<128x32xf32> -> vector<128x32xf32>
      %128 = arith.addf %120, %127 : vector<128x32xf32>
      %c1_i32_138 = arith.constant 1 : i32
      %129 = arith.addi %105, %c1_i32_138 : i32
      %130 = arith.index_cast %129 : i32 to index
      %c0_139 = arith.constant 0 : index
      %c0_140 = arith.constant 0 : index
      %131 = vector.load %arg7[%130, %c0_139, %c0_140] : memref<18x18x64xbf16, #tpu.memory_space<vmem>>, vector<8x16x64xbf16>
      %132 = vector.shape_cast %131 : vector<8x16x64xbf16> to vector<128x64xbf16>
      %c1_141 = arith.constant 1 : index
      %c0_142 = arith.constant 0 : index
      %c0_143 = arith.constant 0 : index
      %c0_144 = arith.constant 0 : index
      %133 = vector.load %arg4[%c1_141, %c0_142, %c0_143, %c0_144] : memref<3x3x64x32xbf16, #tpu.memory_space<vmem>>, vector<1x1x64x32xbf16>
      %134 = vector.shape_cast %133 : vector<1x1x64x32xbf16> to vector<64x32xbf16>
      %cst_145 = arith.constant dense<0.000000e+00> : vector<128x32xf32>
      %135 = tpu.matmul %132, %134, %cst_145 {dimension_numbers = #tpu.dot_dimension_numbers<[1], [0], [0], [1], [0, 0, 1, 1], [], []>} : vector<128x64xbf16>, vector<64x32xbf16>, vector<128x32xf32> -> vector<128x32xf32>
      %136 = arith.addf %128, %135 : vector<128x32xf32>
      %c1_i32_146 = arith.constant 1 : i32
      %137 = arith.addi %105, %c1_i32_146 : i32
      %138 = arith.index_cast %137 : i32 to index
      %c1_147 = arith.constant 1 : index
      %c0_148 = arith.constant 0 : index
      %139 = vector.load %arg7[%138, %c1_147, %c0_148] : memref<18x18x64xbf16, #tpu.memory_space<vmem>>, vector<8x16x64xbf16>
      %140 = vector.shape_cast %139 : vector<8x16x64xbf16> to vector<128x64xbf16>
      %c1_149 = arith.constant 1 : index
      %c1_150 = arith.constant 1 : index
      %c0_151 = arith.constant 0 : index
      %c0_152 = arith.constant 0 : index
      %141 = vector.load %arg4[%c1_149, %c1_150, %c0_151, %c0_152] : memref<3x3x64x32xbf16, #tpu.memory_space<vmem>>, vector<1x1x64x32xbf16>
      %142 = vector.shape_cast %141 : vector<1x1x64x32xbf16> to vector<64x32xbf16>
      %cst_153 = arith.constant dense<0.000000e+00> : vector<128x32xf32>
      %143 = tpu.matmul %140, %142, %cst_153 {dimension_numbers = #tpu.dot_dimension_numbers<[1], [0], [0], [1], [0, 0, 1, 1], [], []>} : vector<128x64xbf16>, vector<64x32xbf16>, vector<128x32xf32> -> vector<128x32xf32>
      %144 = arith.addf %136, %143 : vector<128x32xf32>
      %c1_i32_154 = arith.constant 1 : i32
      %145 = arith.addi %105, %c1_i32_154 : i32
      %146 = arith.index_cast %145 : i32 to index
      %c2_155 = arith.constant 2 : index
      %c0_156 = arith.constant 0 : index
      %147 = vector.load %arg7[%146, %c2_155, %c0_156] : memref<18x18x64xbf16, #tpu.memory_space<vmem>>, vector<8x16x64xbf16>
      %148 = vector.shape_cast %147 : vector<8x16x64xbf16> to vector<128x64xbf16>
      %c1_157 = arith.constant 1 : index
      %c2_158 = arith.constant 2 : index
      %c0_159 = arith.constant 0 : index
      %c0_160 = arith.constant 0 : index
      %149 = vector.load %arg4[%c1_157, %c2_158, %c0_159, %c0_160] : memref<3x3x64x32xbf16, #tpu.memory_space<vmem>>, vector<1x1x64x32xbf16>
      %150 = vector.shape_cast %149 : vector<1x1x64x32xbf16> to vector<64x32xbf16>
      %cst_161 = arith.constant dense<0.000000e+00> : vector<128x32xf32>
      %151 = tpu.matmul %148, %150, %cst_161 {dimension_numbers = #tpu.dot_dimension_numbers<[1], [0], [0], [1], [0, 0, 1, 1], [], []>} : vector<128x64xbf16>, vector<64x32xbf16>, vector<128x32xf32> -> vector<128x32xf32>
      %152 = arith.addf %144, %151 : vector<128x32xf32>
      %c2_i32_162 = arith.constant 2 : i32
      %153 = arith.addi %105, %c2_i32_162 : i32
      %154 = arith.index_cast %153 : i32 to index
      %c0_163 = arith.constant 0 : index
      %c0_164 = arith.constant 0 : index
      %155 = vector.load %arg7[%154, %c0_163, %c0_164] : memref<18x18x64xbf16, #tpu.memory_space<vmem>>, vector<8x16x64xbf16>
      %156 = vector.shape_cast %155 : vector<8x16x64xbf16> to vector<128x64xbf16>
      %c2_165 = arith.constant 2 : index
      %c0_166 = arith.constant 0 : index
      %c0_167 = arith.constant 0 : index
      %c0_168 = arith.constant 0 : index
      %157 = vector.load %arg4[%c2_165, %c0_166, %c0_167, %c0_168] : memref<3x3x64x32xbf16, #tpu.memory_space<vmem>>, vector<1x1x64x32xbf16>
      %158 = vector.shape_cast %157 : vector<1x1x64x32xbf16> to vector<64x32xbf16>
      %cst_169 = arith.constant dense<0.000000e+00> : vector<128x32xf32>
      %159 = tpu.matmul %156, %158, %cst_169 {dimension_numbers = #tpu.dot_dimension_numbers<[1], [0], [0], [1], [0, 0, 1, 1], [], []>} : vector<128x64xbf16>, vector<64x32xbf16>, vector<128x32xf32> -> vector<128x32xf32>
      %160 = arith.addf %152, %159 : vector<128x32xf32>
      %c2_i32_170 = arith.constant 2 : i32
      %161 = arith.addi %105, %c2_i32_170 : i32
      %162 = arith.index_cast %161 : i32 to index
      %c1_171 = arith.constant 1 : index
      %c0_172 = arith.constant 0 : index
      %163 = vector.load %arg7[%162, %c1_171, %c0_172] : memref<18x18x64xbf16, #tpu.memory_space<vmem>>, vector<8x16x64xbf16>
      %164 = vector.shape_cast %163 : vector<8x16x64xbf16> to vector<128x64xbf16>
      %c2_173 = arith.constant 2 : index
      %c1_174 = arith.constant 1 : index
      %c0_175 = arith.constant 0 : index
      %c0_176 = arith.constant 0 : index
      %165 = vector.load %arg4[%c2_173, %c1_174, %c0_175, %c0_176] : memref<3x3x64x32xbf16, #tpu.memory_space<vmem>>, vector<1x1x64x32xbf16>
      %166 = vector.shape_cast %165 : vector<1x1x64x32xbf16> to vector<64x32xbf16>
      %cst_177 = arith.constant dense<0.000000e+00> : vector<128x32xf32>
      %167 = tpu.matmul %164, %166, %cst_177 {dimension_numbers = #tpu.dot_dimension_numbers<[1], [0], [0], [1], [0, 0, 1, 1], [], []>} : vector<128x64xbf16>, vector<64x32xbf16>, vector<128x32xf32> -> vector<128x32xf32>
      %168 = arith.addf %160, %167 : vector<128x32xf32>
      %c2_i32_178 = arith.constant 2 : i32
      %169 = arith.addi %105, %c2_i32_178 : i32
      %170 = arith.index_cast %169 : i32 to index
      %c2_179 = arith.constant 2 : index
      %c0_180 = arith.constant 0 : index
      %171 = vector.load %arg7[%170, %c2_179, %c0_180] : memref<18x18x64xbf16, #tpu.memory_space<vmem>>, vector<8x16x64xbf16>
      %172 = vector.shape_cast %171 : vector<8x16x64xbf16> to vector<128x64xbf16>
      %c2_181 = arith.constant 2 : index
      %c2_182 = arith.constant 2 : index
      %c0_183 = arith.constant 0 : index
      %c0_184 = arith.constant 0 : index
      %173 = vector.load %arg4[%c2_181, %c2_182, %c0_183, %c0_184] : memref<3x3x64x32xbf16, #tpu.memory_space<vmem>>, vector<1x1x64x32xbf16>
      %174 = vector.shape_cast %173 : vector<1x1x64x32xbf16> to vector<64x32xbf16>
      %cst_185 = arith.constant dense<0.000000e+00> : vector<128x32xf32>
      %175 = tpu.matmul %172, %174, %cst_185 {dimension_numbers = #tpu.dot_dimension_numbers<[1], [0], [0], [1], [0, 0, 1, 1], [], []>} : vector<128x64xbf16>, vector<64x32xbf16>, vector<128x32xf32> -> vector<128x32xf32>
      %176 = arith.addf %168, %175 : vector<128x32xf32>
      %177 = vector.shape_cast %176 : vector<128x32xf32> to vector<8x16x32xf32>
      %c0_186 = arith.constant 0 : index
      %c0_187 = arith.constant 0 : index
      %c0_188 = arith.constant 0 : index
      %178 = vector.load %arg9[%c0_186, %c0_187, %c0_188] : memref<8x16x32xf32, #tpu.memory_space<vmem>>, vector<8x16x32xf32>
      tpu.vector_store %arg9[%c0_186, %c0_187, %c0_188], %177 {strides = array<i32>} : memref<8x16x32xf32, #tpu.memory_space<vmem>>, vector<8x16x32xf32>,
      %c0_189 = arith.constant 0 : index
      %c0_190 = arith.constant 0 : index
      %c0_191 = arith.constant 0 : index
      %179 = tpu.strided_load %arg9[%c0_189, %c0_190, %c0_191] {strides = array<i32: 1, 2, 1>} : memref<8x16x32xf32, #tpu.memory_space<vmem>>, vector<8x8x32xf32>
      %c0_192 = arith.constant 0 : index
      %c1_193 = arith.constant 1 : index
      %c0_194 = arith.constant 0 : index
      %180 = tpu.strided_load %arg9[%c0_192, %c1_193, %c0_194] {strides = array<i32: 1, 2, 1>} : memref<8x16x32xf32, #tpu.memory_space<vmem>>, vector<8x8x32xf32>
      %181 = arith.maximumf %179, %180 : vector<8x8x32xf32>
      %182 = vector.shape_cast %181 : vector<8x8x32xf32> to vector<4x2x8x32xf32>
      %183 = vector.extract_strided_slice %182 {offsets = [0, 0, 0, 0], sizes = [4, 1, 8, 32], strides = [1, 1, 1, 1]} : vector<4x2x8x32xf32> to vector<4x1x8x32xf32>
      %184 = vector.shape_cast %183 : vector<4x1x8x32xf32> to vector<4x8x32xf32>
      %185 = vector.extract_strided_slice %182 {offsets = [0, 1, 0, 0], sizes = [4, 1, 8, 32], strides = [1, 1, 1, 1]} : vector<4x2x8x32xf32> to vector<4x1x8x32xf32>
      %186 = vector.shape_cast %185 : vector<4x1x8x32xf32> to vector<4x8x32xf32>
      %187 = arith.maximumf %184, %186 : vector<4x8x32xf32>
      %c4_i32_195 = arith.constant 4 : i32
      %188 = arith.muli %arg11, %c4_i32_195 : i32
      %c1_i32_196 = arith.constant 1 : i32
      %189 = arith.addi %c1_i32_196, %188 : i32
      %190 = arith.index_cast %189 : i32 to index
      %c1_197 = arith.constant 1 : index
      %c0_198 = arith.constant 0 : index
      %191 = vector.load %arg8[%190, %c1_197, %c0_198] : memref<10x10x32xf32, #tpu.memory_space<vmem>>, vector<4x8x32xf32>
      tpu.vector_store %arg8[%190, %c1_197, %c0_198], %187 {strides = array<i32>} : memref<10x10x32xf32, #tpu.memory_space<vmem>>, vector<4x8x32xf32>,
    }
    %c2_i32_27 = arith.constant 2 : i32
    %c0_i32_28 = arith.constant 0 : i32
    %c8_i32 = arith.constant 8 : i32
    %14 = arith.muli %c0_i32_28, %c8_i32 : i32
    %15 = tpu.assume_multiple %14, 8 : i32
    %c0_i32_29 = arith.constant 0 : i32
    %16 = arith.addi %15, %c0_i32_29 : i32
    %17 = arith.index_cast %16 : i32 to index
    %c0_30 = arith.constant 0 : index
    %c0_31 = arith.constant 0 : index
    %18 = vector.load %arg8[%17, %c0_30, %c0_31] : memref<10x10x32xf32, #tpu.memory_space<vmem>>, vector<8x8x32xf32>
    %19 = vector.shape_cast %18 : vector<8x8x32xf32> to vector<64x32xf32>
    %c0_32 = arith.constant 0 : index
    %c0_33 = arith.constant 0 : index
    %c0_34 = arith.constant 0 : index
    %c0_35 = arith.constant 0 : index
    %20 = vector.load %arg5[%c0_32, %c0_33, %c0_34, %c0_35] : memref<3x3x32x32xbf16, #tpu.memory_space<vmem>>, vector<1x1x32x32xbf16>
    %21 = vector.shape_cast %20 : vector<1x1x32x32xbf16> to vector<32x32xbf16>
    %cst_36 = arith.constant dense<0.000000e+00> : vector<64x32xf32>
    %22 = tpu.matmul %19, %21, %cst_36 {dimension_numbers = #tpu.dot_dimension_numbers<[1], [0], [0], [1], [0, 0, 1, 1], [], []>} : vector<64x32xf32>, vector<32x32xbf16>, vector<64x32xf32> -> vector<64x32xf32>
    %c0_i32_37 = arith.constant 0 : i32
    %23 = arith.addi %15, %c0_i32_37 : i32
    %24 = arith.index_cast %23 : i32 to index
    %c1 = arith.constant 1 : index
    %c0_38 = arith.constant 0 : index
    %25 = vector.load %arg8[%24, %c1, %c0_38] : memref<10x10x32xf32, #tpu.memory_space<vmem>>, vector<8x8x32xf32>
    %26 = vector.shape_cast %25 : vector<8x8x32xf32> to vector<64x32xf32>
    %c0_39 = arith.constant 0 : index
    %c1_40 = arith.constant 1 : index
    %c0_41 = arith.constant 0 : index
    %c0_42 = arith.constant 0 : index
    %27 = vector.load %arg5[%c0_39, %c1_40, %c0_41, %c0_42] : memref<3x3x32x32xbf16, #tpu.memory_space<vmem>>, vector<1x1x32x32xbf16>
    %28 = vector.shape_cast %27 : vector<1x1x32x32xbf16> to vector<32x32xbf16>
    %cst_43 = arith.constant dense<0.000000e+00> : vector<64x32xf32>
    %29 = tpu.matmul %26, %28, %cst_43 {dimension_numbers = #tpu.dot_dimension_numbers<[1], [0], [0], [1], [0, 0, 1, 1], [], []>} : vector<64x32xf32>, vector<32x32xbf16>, vector<64x32xf32> -> vector<64x32xf32>
    %30 = arith.addf %22, %29 : vector<64x32xf32>
    %c0_i32_44 = arith.constant 0 : i32
    %31 = arith.addi %15, %c0_i32_44 : i32
    %32 = arith.index_cast %31 : i32 to index
    %c2 = arith.constant 2 : index
    %c0_45 = arith.constant 0 : index
    %33 = vector.load %arg8[%32, %c2, %c0_45] : memref<10x10x32xf32, #tpu.memory_space<vmem>>, vector<8x8x32xf32>
    %34 = vector.shape_cast %33 : vector<8x8x32xf32> to vector<64x32xf32>
    %c0_46 = arith.constant 0 : index
    %c2_47 = arith.constant 2 : index
    %c0_48 = arith.constant 0 : index
    %c0_49 = arith.constant 0 : index
    %35 = vector.load %arg5[%c0_46, %c2_47, %c0_48, %c0_49] : memref<3x3x32x32xbf16, #tpu.memory_space<vmem>>, vector<1x1x32x32xbf16>
    %36 = vector.shape_cast %35 : vector<1x1x32x32xbf16> to vector<32x32xbf16>
    %cst_50 = arith.constant dense<0.000000e+00> : vector<64x32xf32>
    %37 = tpu.matmul %34, %36, %cst_50 {dimension_numbers = #tpu.dot_dimension_numbers<[1], [0], [0], [1], [0, 0, 1, 1], [], []>} : vector<64x32xf32>, vector<32x32xbf16>, vector<64x32xf32> -> vector<64x32xf32>
    %38 = arith.addf %30, %37 : vector<64x32xf32>
    %c1_i32_51 = arith.constant 1 : i32
    %39 = arith.addi %15, %c1_i32_51 : i32
    %40 = arith.index_cast %39 : i32 to index
    %c0_52 = arith.constant 0 : index
    %c0_53 = arith.constant 0 : index
    %41 = vector.load %arg8[%40, %c0_52, %c0_53] : memref<10x10x32xf32, #tpu.memory_space<vmem>>, vector<8x8x32xf32>
    %42 = vector.shape_cast %41 : vector<8x8x32xf32> to vector<64x32xf32>
    %c1_54 = arith.constant 1 : index
    %c0_55 = arith.constant 0 : index
    %c0_56 = arith.constant 0 : index
    %c0_57 = arith.constant 0 : index
    %43 = vector.load %arg5[%c1_54, %c0_55, %c0_56, %c0_57] : memref<3x3x32x32xbf16, #tpu.memory_space<vmem>>, vector<1x1x32x32xbf16>
    %44 = vector.shape_cast %43 : vector<1x1x32x32xbf16> to vector<32x32xbf16>
    %cst_58 = arith.constant dense<0.000000e+00> : vector<64x32xf32>
    %45 = tpu.matmul %42, %44, %cst_58 {dimension_numbers = #tpu.dot_dimension_numbers<[1], [0], [0], [1], [0, 0, 1, 1], [], []>} : vector<64x32xf32>, vector<32x32xbf16>, vector<64x32xf32> -> vector<64x32xf32>
    %46 = arith.addf %38, %45 : vector<64x32xf32>
    %c1_i32_59 = arith.constant 1 : i32
    %47 = arith.addi %15, %c1_i32_59 : i32
    %48 = arith.index_cast %47 : i32 to index
    %c1_60 = arith.constant 1 : index
    %c0_61 = arith.constant 0 : index
    %49 = vector.load %arg8[%48, %c1_60, %c0_61] : memref<10x10x32xf32, #tpu.memory_space<vmem>>, vector<8x8x32xf32>
    %50 = vector.shape_cast %49 : vector<8x8x32xf32> to vector<64x32xf32>
    %c1_62 = arith.constant 1 : index
    %c1_63 = arith.constant 1 : index
    %c0_64 = arith.constant 0 : index
    %c0_65 = arith.constant 0 : index
    %51 = vector.load %arg5[%c1_62, %c1_63, %c0_64, %c0_65] : memref<3x3x32x32xbf16, #tpu.memory_space<vmem>>, vector<1x1x32x32xbf16>
    %52 = vector.shape_cast %51 : vector<1x1x32x32xbf16> to vector<32x32xbf16>
    %cst_66 = arith.constant dense<0.000000e+00> : vector<64x32xf32>
    %53 = tpu.matmul %50, %52, %cst_66 {dimension_numbers = #tpu.dot_dimension_numbers<[1], [0], [0], [1], [0, 0, 1, 1], [], []>} : vector<64x32xf32>, vector<32x32xbf16>, vector<64x32xf32> -> vector<64x32xf32>
    %54 = arith.addf %46, %53 : vector<64x32xf32>
    %c1_i32_67 = arith.constant 1 : i32
    %55 = arith.addi %15, %c1_i32_67 : i32
    %56 = arith.index_cast %55 : i32 to index
    %c2_68 = arith.constant 2 : index
    %c0_69 = arith.constant 0 : index
    %57 = vector.load %arg8[%56, %c2_68, %c0_69] : memref<10x10x32xf32, #tpu.memory_space<vmem>>, vector<8x8x32xf32>
    %58 = vector.shape_cast %57 : vector<8x8x32xf32> to vector<64x32xf32>
    %c1_70 = arith.constant 1 : index
    %c2_71 = arith.constant 2 : index
    %c0_72 = arith.constant 0 : index
    %c0_73 = arith.constant 0 : index
    %59 = vector.load %arg5[%c1_70, %c2_71, %c0_72, %c0_73] : memref<3x3x32x32xbf16, #tpu.memory_space<vmem>>, vector<1x1x32x32xbf16>
    %60 = vector.shape_cast %59 : vector<1x1x32x32xbf16> to vector<32x32xbf16>
    %cst_74 = arith.constant dense<0.000000e+00> : vector<64x32xf32>
    %61 = tpu.matmul %58, %60, %cst_74 {dimension_numbers = #tpu.dot_dimension_numbers<[1], [0], [0], [1], [0, 0, 1, 1], [], []>} : vector<64x32xf32>, vector<32x32xbf16>, vector<64x32xf32> -> vector<64x32xf32>
    %62 = arith.addf %54, %61 : vector<64x32xf32>
    %c2_i32_75 = arith.constant 2 : i32
    %63 = arith.addi %15, %c2_i32_75 : i32
    %64 = arith.index_cast %63 : i32 to index
    %c0_76 = arith.constant 0 : index
    %c0_77 = arith.constant 0 : index
    %65 = vector.load %arg8[%64, %c0_76, %c0_77] : memref<10x10x32xf32, #tpu.memory_space<vmem>>, vector<8x8x32xf32>
    %66 = vector.shape_cast %65 : vector<8x8x32xf32> to vector<64x32xf32>
    %c2_78 = arith.constant 2 : index
    %c0_79 = arith.constant 0 : index
    %c0_80 = arith.constant 0 : index
    %c0_81 = arith.constant 0 : index
    %67 = vector.load %arg5[%c2_78, %c0_79, %c0_80, %c0_81] : memref<3x3x32x32xbf16, #tpu.memory_space<vmem>>, vector<1x1x32x32xbf16>
    %68 = vector.shape_cast %67 : vector<1x1x32x32xbf16> to vector<32x32xbf16>
    %cst_82 = arith.constant dense<0.000000e+00> : vector<64x32xf32>
    %69 = tpu.matmul %66, %68, %cst_82 {dimension_numbers = #tpu.dot_dimension_numbers<[1], [0], [0], [1], [0, 0, 1, 1], [], []>} : vector<64x32xf32>, vector<32x32xbf16>, vector<64x32xf32> -> vector<64x32xf32>
    %70 = arith.addf %62, %69 : vector<64x32xf32>
    %c2_i32_83 = arith.constant 2 : i32
    %71 = arith.addi %15, %c2_i32_83 : i32
    %72 = arith.index_cast %71 : i32 to index
    %c1_84 = arith.constant 1 : index
    %c0_85 = arith.constant 0 : index
    %73 = vector.load %arg8[%72, %c1_84, %c0_85] : memref<10x10x32xf32, #tpu.memory_space<vmem>>, vector<8x8x32xf32>
    %74 = vector.shape_cast %73 : vector<8x8x32xf32> to vector<64x32xf32>
    %c2_86 = arith.constant 2 : index
    %c1_87 = arith.constant 1 : index
    %c0_88 = arith.constant 0 : index
    %c0_89 = arith.constant 0 : index
    %75 = vector.load %arg5[%c2_86, %c1_87, %c0_88, %c0_89] : memref<3x3x32x32xbf16, #tpu.memory_space<vmem>>, vector<1x1x32x32xbf16>
    %76 = vector.shape_cast %75 : vector<1x1x32x32xbf16> to vector<32x32xbf16>
    %cst_90 = arith.constant dense<0.000000e+00> : vector<64x32xf32>
    %77 = tpu.matmul %74, %76, %cst_90 {dimension_numbers = #tpu.dot_dimension_numbers<[1], [0], [0], [1], [0, 0, 1, 1], [], []>} : vector<64x32xf32>, vector<32x32xbf16>, vector<64x32xf32> -> vector<64x32xf32>
    %78 = arith.addf %70, %77 : vector<64x32xf32>
    %c2_i32_91 = arith.constant 2 : i32
    %79 = arith.addi %15, %c2_i32_91 : i32
    %80 = arith.index_cast %79 : i32 to index
    %c2_92 = arith.constant 2 : index
    %c0_93 = arith.constant 0 : index
    %81 = vector.load %arg8[%80, %c2_92, %c0_93] : memref<10x10x32xf32, #tpu.memory_space<vmem>>, vector<8x8x32xf32>
    %82 = vector.shape_cast %81 : vector<8x8x32xf32> to vector<64x32xf32>
    %c2_94 = arith.constant 2 : index
    %c2_95 = arith.constant 2 : index
    %c0_96 = arith.constant 0 : index
    %c0_97 = arith.constant 0 : index
    %83 = vector.load %arg5[%c2_94, %c2_95, %c0_96, %c0_97] : memref<3x3x32x32xbf16, #tpu.memory_space<vmem>>, vector<1x1x32x32xbf16>
    %84 = vector.shape_cast %83 : vector<1x1x32x32xbf16> to vector<32x32xbf16>
    %cst_98 = arith.constant dense<0.000000e+00> : vector<64x32xf32>
    %85 = tpu.matmul %82, %84, %cst_98 {dimension_numbers = #tpu.dot_dimension_numbers<[1], [0], [0], [1], [0, 0, 1, 1], [], []>} : vector<64x32xf32>, vector<32x32xbf16>, vector<64x32xf32> -> vector<64x32xf32>
    %86 = arith.addf %78, %85 : vector<64x32xf32>
    %87 = vector.shape_cast %86 : vector<64x32xf32> to vector<8x8x32xf32>
    %c0_99 = arith.constant 0 : index
    %c0_100 = arith.constant 0 : index
    %c0_101 = arith.constant 0 : index
    %88 = vector.load %arg10[%c0_99, %c0_100, %c0_101] : memref<8x8x32xf32, #tpu.memory_space<vmem>>, vector<8x8x32xf32>
    tpu.vector_store %arg10[%c0_99, %c0_100, %c0_101], %87 {strides = array<i32>} : memref<8x8x32xf32, #tpu.memory_space<vmem>>, vector<8x8x32xf32>,
    %c0_102 = arith.constant 0 : index
    %c0_103 = arith.constant 0 : index
    %c0_104 = arith.constant 0 : index
    %89 = tpu.strided_load %arg10[%c0_102, %c0_103, %c0_104] {strides = array<i32: 1, 2, 1>} : memref<8x8x32xf32, #tpu.memory_space<vmem>>, vector<8x4x32xf32>
    %c0_105 = arith.constant 0 : index
    %c1_106 = arith.constant 1 : index
    %c0_107 = arith.constant 0 : index
    %90 = tpu.strided_load %arg10[%c0_105, %c1_106, %c0_107] {strides = array<i32: 1, 2, 1>} : memref<8x8x32xf32, #tpu.memory_space<vmem>>, vector<8x4x32xf32>
    %91 = arith.maximumf %89, %90 : vector<8x4x32xf32>
    %92 = vector.shape_cast %91 : vector<8x4x32xf32> to vector<4x2x4x32xf32>
    %93 = vector.extract_strided_slice %92 {offsets = [0, 0, 0, 0], sizes = [4, 1, 4, 32], strides = [1, 1, 1, 1]} : vector<4x2x4x32xf32> to vector<4x1x4x32xf32>
    %94 = vector.shape_cast %93 : vector<4x1x4x32xf32> to vector<4x4x32xf32>
    %95 = vector.extract_strided_slice %92 {offsets = [0, 1, 0, 0], sizes = [4, 1, 4, 32], strides = [1, 1, 1, 1]} : vector<4x2x4x32xf32> to vector<4x1x4x32xf32>
    %96 = vector.shape_cast %95 : vector<4x1x4x32xf32> to vector<4x4x32xf32>
    %97 = arith.maximumf %94, %96 : vector<4x4x32xf32>
    %98 = arith.truncf %97 : vector<4x4x32xf32> to vector<4x4x32xbf16>
    %c4_i32_108 = arith.constant 4 : i32
    %99 = arith.muli %c0_i32_28, %c4_i32_108 : i32
    %c0_109 = arith.constant 0 : index
    %100 = arith.index_cast %99 : i32 to index
    %c0_110 = arith.constant 0 : index
    %c0_111 = arith.constant 0 : index
    %101 = vector.load %arg6[%c0_109, %100, %c0_110, %c0_111] : memref<1x4x4x32xbf16, #tpu.memory_space<vmem>>, vector<1x4x4x32xbf16>
    %102 = vector.shape_cast %101 : vector<1x4x4x32xbf16> to vector<4x4x32xbf16>
    %103 = vector.shape_cast %98 : vector<4x4x32xbf16> to vector<1x4x4x32xbf16>
    tpu.vector_store %arg6[%c0_109, %100, %c0_110, %c0_111], %103 {strides = array<i32>} : memref<1x4x4x32xbf16, #tpu.memory_space<vmem>>, vector<1x4x4x32xbf16>,
    %c1_i32_112 = arith.constant 1 : i32
    return
  }
  func.func @transform_0(%arg0: i32) -> (i32, i32, i32, i32) {
    %c0_i32 = arith.constant 0 : i32
    %c0_i32_0 = arith.constant 0 : i32
    %c0_i32_1 = arith.constant 0 : i32
    %c0_i32_2 = arith.constant 0 : i32
    return %arg0, %c0_i32, %c0_i32_0, %c0_i32_1 : i32, i32, i32, i32
  }
  func.func @transform_1(%arg0: i32) -> (i32, i32, i32, i32) {
    %c0_i32 = arith.constant 0 : i32
    %c0_i32_0 = arith.constant 0 : i32
    %c0_i32_1 = arith.constant 0 : i32
    %c0_i32_2 = arith.constant 0 : i32
    return %arg0, %c0_i32, %c0_i32_0, %c0_i32_1 : i32, i32, i32, i32
  }
  func.func @transform_2(%arg0: i32) -> (i32, i32) {
    %c0_i32 = arith.constant 0 : i32
    %c0_i32_0 = arith.constant 0 : i32
    %c0_i32_1 = arith.constant 0 : i32
    return %c0_i32, %c0_i32_0 : i32, i32
  }
  func.func @transform_3(%arg0: i32) -> (i32, i32, i32, i32) {
    %c0_i32 = arith.constant 0 : i32
    %c0_i32_0 = arith.constant 0 : i32
    %c0_i32_1 = arith.constant 0 : i32
    %c0_i32_2 = arith.constant 0 : i32
    %c0_i32_3 = arith.constant 0 : i32
    return %c0_i32, %c0_i32_0, %c0_i32_1, %c0_i32_2 : i32, i32, i32, i32
  }
  func.func @transform_4(%arg0: i32) -> (i32, i32, i32, i32) {
    %c0_i32 = arith.constant 0 : i32
    %c0_i32_0 = arith.constant 0 : i32
    %c0_i32_1 = arith.constant 0 : i32
    %c0_i32_2 = arith.constant 0 : i32
    %c0_i32_3 = arith.constant 0 : i32
    return %c0_i32, %c0_i32_0, %c0_i32_1, %c0_i32_2 : i32, i32, i32, i32
  }
  func.func @transform_5(%arg0: i32) -> (i32, i32, i32, i32) {
    %c0_i32 = arith.constant 0 : i32
    %c0_i32_0 = arith.constant 0 : i32
    %c0_i32_1 = arith.constant 0 : i32
    %c0_i32_2 = arith.constant 0 : i32
    return %arg0, %c0_i32, %c0_i32_0, %c0_i32_1 : i32, i32, i32, i32
  }
}

module attributes {stable_mosaic.version = 11 : i64} {
  func.func @_head_kernel(%arg0: memref<4x512xbf16, #tpu.memory_space<vmem>>, %arg1: memref<512x256xbf16, #tpu.memory_space<vmem>>, %arg2: memref<1x256xf32, #tpu.memory_space<vmem>>, %arg3: memref<256x9xf32, #tpu.memory_space<vmem>>, %arg4: memref<1x9xf32, #tpu.memory_space<vmem>>, %arg5: memref<256x256xf32, #tpu.memory_space<vmem>>, %arg6: memref<1x256xf32, #tpu.memory_space<vmem>>, %arg7: memref<1x256xf32, #tpu.memory_space<vmem>>, %arg8: memref<1x256xf32, #tpu.memory_space<vmem>>, %arg9: memref<256x1xf32, #tpu.memory_space<vmem>>, %arg10: memref<1x1xf32, #tpu.memory_space<vmem>>, %arg11: memref<4x9xf32, #tpu.memory_space<vmem>>, %arg12: memref<4x1xf32, #tpu.memory_space<vmem>>) attributes {dimension_semantics = [], scalar_prefetch = 0 : i64, scratch_operands = 0 : i64, tpu.core_type = #tpu.core_type<tc>} {
    %c0 = arith.constant 0 : index
    %c0_0 = arith.constant 0 : index
    %0 = vector.load %arg0[%c0, %c0_0] : memref<4x512xbf16, #tpu.memory_space<vmem>>, vector<4x512xbf16>
    %c0_1 = arith.constant 0 : index
    %c0_2 = arith.constant 0 : index
    %1 = vector.load %arg1[%c0_1, %c0_2] : memref<512x256xbf16, #tpu.memory_space<vmem>>, vector<512x256xbf16>
    %cst = arith.constant dense<0.000000e+00> : vector<4x256xf32>
    %2 = tpu.matmul %0, %1, %cst {dimension_numbers = #tpu.dot_dimension_numbers<[1], [0], [0], [1], [0, 0, 1, 1], [], []>} : vector<4x512xbf16>, vector<512x256xbf16>, vector<4x256xf32> -> vector<4x256xf32>
    %c0_3 = arith.constant 0 : index
    %c0_4 = arith.constant 0 : index
    %3 = vector.load %arg2[%c0_3, %c0_4] : memref<1x256xf32, #tpu.memory_space<vmem>>, vector<1x256xf32>
    %4 = vector.broadcast %3 : vector<1x256xf32> to vector<4x256xf32>
    %5 = arith.addf %2, %4 : vector<4x256xf32>
    %c0_5 = arith.constant 0 : index
    %c0_6 = arith.constant 0 : index
    %6 = vector.load %arg3[%c0_5, %c0_6] : memref<256x9xf32, #tpu.memory_space<vmem>>, vector<256x9xf32>
    %cst_7 = arith.constant dense<0.000000e+00> : vector<4x9xf32>
    %7 = tpu.matmul %5, %6, %cst_7 {dimension_numbers = #tpu.dot_dimension_numbers<[1], [0], [0], [1], [0, 0, 1, 1], [], []>} : vector<4x256xf32>, vector<256x9xf32>, vector<4x9xf32> -> vector<4x9xf32>
    %c0_8 = arith.constant 0 : index
    %c0_9 = arith.constant 0 : index
    %8 = vector.load %arg4[%c0_8, %c0_9] : memref<1x9xf32, #tpu.memory_space<vmem>>, vector<1x9xf32>
    %9 = vector.broadcast %8 : vector<1x9xf32> to vector<4x9xf32>
    %10 = arith.addf %7, %9 : vector<4x9xf32>
    %c0_10 = arith.constant 0 : index
    %c0_11 = arith.constant 0 : index
    %11 = vector.load %arg11[%c0_10, %c0_11] : memref<4x9xf32, #tpu.memory_space<vmem>>, vector<4x9xf32>
    tpu.vector_store %arg11[%c0_10, %c0_11], %10 {strides = array<i32>} : memref<4x9xf32, #tpu.memory_space<vmem>>, vector<4x9xf32>,
    %c0_12 = arith.constant 0 : index
    %c0_13 = arith.constant 0 : index
    %12 = vector.load %arg5[%c0_12, %c0_13] : memref<256x256xf32, #tpu.memory_space<vmem>>, vector<256x256xf32>
    %cst_14 = arith.constant dense<0.000000e+00> : vector<4x256xf32>
    %13 = tpu.matmul %5, %12, %cst_14 {dimension_numbers = #tpu.dot_dimension_numbers<[1], [0], [0], [1], [0, 0, 1, 1], [], []>} : vector<4x256xf32>, vector<256x256xf32>, vector<4x256xf32> -> vector<4x256xf32>
    %c0_15 = arith.constant 0 : index
    %c0_16 = arith.constant 0 : index
    %14 = vector.load %arg6[%c0_15, %c0_16] : memref<1x256xf32, #tpu.memory_space<vmem>>, vector<1x256xf32>
    %15 = vector.broadcast %14 : vector<1x256xf32> to vector<4x256xf32>
    %16 = arith.addf %13, %15 : vector<4x256xf32>
    %cst_17 = arith.constant 0.000000e+00 : f32
    %17 = vector.broadcast %cst_17 : f32 to vector<4x256xf32>
    %18 = arith.maximumf %16, %17 : vector<4x256xf32>
    %cst_18 = arith.constant dense<0.000000e+00> : vector<256xf32>
    %19 = vector.multi_reduction <add>, %18, %cst_18 [0] : vector<4x256xf32> to vector<256xf32>
    %20 = vector.shape_cast %19 : vector<256xf32> to vector<1x256xf32>
    %cst_19 = arith.constant 4.000000e+00 : f32
    %21 = vector.broadcast %cst_19 : f32 to vector<1x256xf32>
    %22 = arith.divf %20, %21 : vector<1x256xf32>
    %23 = vector.broadcast %22 : vector<1x256xf32> to vector<4x256xf32>
    %24 = arith.subf %18, %23 : vector<4x256xf32>
    %25 = arith.mulf %24, %24 : vector<4x256xf32>
    %cst_20 = arith.constant dense<0.000000e+00> : vector<256xf32>
    %26 = vector.multi_reduction <add>, %25, %cst_20 [0] : vector<4x256xf32> to vector<256xf32>
    %27 = vector.shape_cast %26 : vector<256xf32> to vector<1x256xf32>
    %cst_21 = arith.constant 4.000000e+00 : f32
    %28 = vector.broadcast %cst_21 : f32 to vector<1x256xf32>
    %29 = arith.divf %27, %28 : vector<1x256xf32>
    %30 = vector.broadcast %22 : vector<1x256xf32> to vector<4x256xf32>
    %31 = arith.subf %18, %30 : vector<4x256xf32>
    %cst_22 = arith.constant 9.99999974E-6 : f32
    %32 = vector.broadcast %cst_22 : f32 to vector<1x256xf32>
    %33 = arith.addf %29, %32 : vector<1x256xf32>
    %34 = math.rsqrt %33 : vector<1x256xf32>
    %35 = vector.broadcast %34 : vector<1x256xf32> to vector<4x256xf32>
    %36 = arith.mulf %31, %35 : vector<4x256xf32>
    %c0_23 = arith.constant 0 : index
    %c0_24 = arith.constant 0 : index
    %37 = vector.load %arg7[%c0_23, %c0_24] : memref<1x256xf32, #tpu.memory_space<vmem>>, vector<1x256xf32>
    %38 = vector.broadcast %37 : vector<1x256xf32> to vector<4x256xf32>
    %39 = arith.mulf %36, %38 : vector<4x256xf32>
    %c0_25 = arith.constant 0 : index
    %c0_26 = arith.constant 0 : index
    %40 = vector.load %arg8[%c0_25, %c0_26] : memref<1x256xf32, #tpu.memory_space<vmem>>, vector<1x256xf32>
    %41 = vector.broadcast %40 : vector<1x256xf32> to vector<4x256xf32>
    %42 = arith.addf %39, %41 : vector<4x256xf32>
    %c0_27 = arith.constant 0 : index
    %c0_28 = arith.constant 0 : index
    %43 = vector.load %arg9[%c0_27, %c0_28] : memref<256x1xf32, #tpu.memory_space<vmem>>, vector<256x1xf32>
    %cst_29 = arith.constant dense<0.000000e+00> : vector<4x1xf32>
    %44 = tpu.matmul %42, %43, %cst_29 {dimension_numbers = #tpu.dot_dimension_numbers<[1], [0], [0], [1], [0, 0, 1, 1], [], []>} : vector<4x256xf32>, vector<256x1xf32>, vector<4x1xf32> -> vector<4x1xf32>
    %c0_30 = arith.constant 0 : index
    %c0_31 = arith.constant 0 : index
    %45 = vector.load %arg10[%c0_30, %c0_31] : memref<1x1xf32, #tpu.memory_space<vmem>>, vector<1x1xf32>
    %46 = vector.broadcast %45 : vector<1x1xf32> to vector<4x1xf32>
    %47 = arith.addf %44, %46 : vector<4x1xf32>
    %cst_32 = arith.constant 0.000000e+00 : f32
    %48 = vector.broadcast %cst_32 : f32 to vector<4x1xf32>
    %49 = arith.subf %48, %47 : vector<4x1xf32>
    %50 = math.exp %49 : vector<4x1xf32>
    %cst_33 = arith.constant 1.000000e+00 : f32
    %51 = vector.broadcast %cst_33 : f32 to vector<4x1xf32>
    %52 = arith.addf %51, %50 : vector<4x1xf32>
    %cst_34 = arith.constant 1.000000e+00 : f32
    %53 = vector.broadcast %cst_34 : f32 to vector<4x1xf32>
    %54 = arith.divf %53, %52 : vector<4x1xf32>
    %c0_35 = arith.constant 0 : index
    %c0_36 = arith.constant 0 : index
    %55 = vector.load %arg12[%c0_35, %c0_36] : memref<4x1xf32, #tpu.memory_space<vmem>>, vector<4x1xf32>
    tpu.vector_store %arg12[%c0_35, %c0_36], %54 {strides = array<i32>} : memref<4x1xf32, #tpu.memory_space<vmem>>, vector<4x1xf32>,
    return
  }
}

</mosaic_0001>

<llo_original>
// kernel: model_forward.3
$region0: #{model_forward.3}
  #allocation0 [shape = 'u32[]', space=smem, size = 0x4, offset = 0x4, fixed_abs, tag = 'smem constant byte address 0x4 - core index']
  #allocation1 [shape = 'u32[144,128]{1,0:T(1,128)}', space=vmem, size = 0x12000, scoped, tag = 'internal scratch']
  #allocation2 [shape = 'f32[1,1]{1,0:T(1,128)S(1)}', space=vmem, size = 0x200, scoped, tag = 'scoped memory for model_forward.3']
  %s0 = inlined_call_operand.vmem [shape: bf16[4,512], index: 0, kind: input, shape index: {}]
  %s1 = inlined_call_operand.vmem [shape: bf16[512,256], index: 1, kind: input, shape index: {}]
  %s2 = inlined_call_operand.vmem [shape: f32[1,256], index: 2, kind: input, shape index: {}]
  %s3 = inlined_call_operand.vmem [shape: f32[256,9], index: 3, kind: input, shape index: {}]
  %s4 = inlined_call_operand.vmem [shape: f32[1,9], index: 4, kind: input, shape index: {}]
  %s5 = inlined_call_operand.vmem [shape: f32[256,256], index: 5, kind: input, shape index: {}]
  %s6 = inlined_call_operand.vmem [shape: f32[1,256], index: 6, kind: input, shape index: {}]
  %s7 = inlined_call_operand.vmem [shape: f32[1,256], index: 7, kind: input, shape index: {}]
  %s8 = inlined_call_operand.vmem [shape: f32[1,256], index: 8, kind: input, shape index: {}]
  %s9 = inlined_call_operand.vmem [shape: f32[256,1], index: 9, kind: input, shape index: {}]
  %s10 = inlined_call_operand.<no memory space> [shape: f32[1,1], index: 10, kind: input, shape index: {}]
  %s11 = inlined_call_operand.hbm [shape: f32[4,9], index: 11, kind: output, shape index: {0}]
  %s12 = inlined_call_operand.vmem [shape: f32[4,1], index: 12, kind: output, shape index: {1}]
  %13 = xla_tuple %s11, %s12
  %s14 = sld [smem:[#allocation0]]
  $region62: #{model_forward.3} parent=0
    _
  %s16 = ssub.s32 1, %s14
  %s17 = scalar_select 0, %s16, %s14
  %v18 = vstv %s10
  %19 = vst [vmem:[#allocation2] sm:$0x1] %v18
  $region1: #{model_forward.3} parent=0
    #allocation3 [shape = 'u8[2048]{0}', space=vmem, size = 0x800, scoped, tag = 'output window, operand 0, single buffered']
    #allocation4 [shape = 's32[1]{0}', space=sflag, size = 0x4, scoped, tag = 'scoped memory for model_forward.3']
    %20 = vsyncpa [#allocation4], 0
    // Predicated region
    $region2: #{model_forward.3} parent=1 // pred_check
      _
    $region3: #{model_forward.3} parent=1 // pred_check_branch
      %22 = sbr.rel (0) target = $region5
    $region4: #{model_forward.3} parent=1 // pred_region
      _
    $region5: #{model_forward.3} parent=1 // pred_fallthru
      _
    // Predicated region
    $region6: #{model_forward.3} parent=1 // pred_check
      _
    $region7: #{model_forward.3} parent=1 // pred_check_branch
      %24 = sbr.rel (0) target = $region9
    $region8: #{model_forward.3} parent=1 // pred_region
      _
    $region9: #{model_forward.3} parent=1 // pred_fallthru
      _
    // Predicated region
    $region10: #{model_forward.3} parent=1 // pred_check
      _
    $region11: #{model_forward.3} parent=1 // pred_check_branch
      %26 = sbr.rel (0) target = $region13
    $region12: #{model_forward.3} parent=1 // pred_region
      _
    $region13: #{model_forward.3} parent=1 // pred_fallthru
      _
    // Predicated region
    $region14: #{model_forward.3} parent=1 // pred_check
      _
    $region15: #{model_forward.3} parent=1 // pred_check_branch
      %28 = sbr.rel (0) target = $region17
    $region16: #{model_forward.3} parent=1 // pred_region
      _
    $region17: #{model_forward.3} parent=1 // pred_fallthru
      _
    // Predicated region
    $region18: #{model_forward.3} parent=1 // pred_check
      _
    $region19: #{model_forward.3} parent=1 // pred_check_branch
      %30 = sbr.rel (0) target = $region21
    $region20: #{model_forward.3} parent=1 // pred_region
      _
    $region21: #{model_forward.3} parent=1 // pred_fallthru
      _
    // Predicated region
    $region22: #{model_forward.3} parent=1 // pred_check
      _
    $region23: #{model_forward.3} parent=1 // pred_check_branch
      %32 = sbr.rel (0) target = $region25
    $region24: #{model_forward.3} parent=1 // pred_region
      _
    $region25: #{model_forward.3} parent=1 // pred_fallthru
      _
    // Predicated region
    $region26: #{model_forward.3} parent=1 // pred_check
      _
    $region27: #{model_forward.3} parent=1 // pred_check_branch
      %34 = sbr.rel (0) target = $region29
    $region28: #{model_forward.3} parent=1 // pred_region
      _
    $region29: #{model_forward.3} parent=1 // pred_fallthru
      _
    // Predicated region
    $region30: #{model_forward.3} parent=1 // pred_check
      _
    $region31: #{model_forward.3} parent=1 // pred_check_branch
      %36 = sbr.rel (0) target = $region33
    $region32: #{model_forward.3} parent=1 // pred_region
      _
    $region33: #{model_forward.3} parent=1 // pred_fallthru
      _
    // Predicated region
    $region34: #{model_forward.3} parent=1 // pred_check
      _
    $region35: #{model_forward.3} parent=1 // pred_check_branch
      %38 = sbr.rel (0) target = $region37
    $region36: #{model_forward.3} parent=1 // pred_region
      _
    $region37: #{model_forward.3} parent=1 // pred_fallthru
      _
    // Predicated region
    $region38: #{model_forward.3} parent=1 // pred_check
      _
    $region39: #{model_forward.3} parent=1 // pred_check_branch
      %40 = sbr.rel (0) target = $region41
    $region40: #{model_forward.3} parent=1 // pred_region
      _
    $region41: #{model_forward.3} parent=1 // pred_fallthru
      _
    // Predicated region
    $region42: #{model_forward.3} parent=1 // pred_check
      _
    $region43: #{model_forward.3} parent=1 // pred_check_branch
      %42 = sbr.rel (0) target = $region45
    $region44: #{model_forward.3} parent=1 // pred_region
      _
    $region45: #{model_forward.3} parent=1 // pred_fallthru
      _
    %v43 = vld [vmem:[%s0] sm:$0xff]
    %v44 = vld [vmem:[%s1] sm:$0xff]
    %v45 = vld [vmem:[%s1 + $0x8] sm:$0xff]
    %v46 = vld [vmem:[%s1 + $0x10] sm:$0xff]
    %v47 = vld [vmem:[%s1 + $0x18] sm:$0xff]
    %v48 = vld [vmem:[%s1 + $0x20] sm:$0xff]
    %v49 = vld [vmem:[%s1 + $0x28] sm:$0xff]
    %v50 = vld [vmem:[%s1 + $0x30] sm:$0xff]
    %v51 = vld [vmem:[%s1 + $0x38] sm:$0xff]
    %v52 = vld [vmem:[%s1 + $0x40] sm:$0xff]
    %v53 = vld [vmem:[%s1 + $0x48] sm:$0xff]
    %v54 = vld [vmem:[%s1 + $0x50] sm:$0xff]
    %v55 = vld [vmem:[%s1 + $0x58] sm:$0xff]
    %v56 = vld [vmem:[%s1 + $0x60] sm:$0xff]
    %v57 = vld [vmem:[%s1 + $0x68] sm:$0xff]
    %v58 = vld [vmem:[%s1 + $0x70] sm:$0xff]
    %v59 = vld [vmem:[%s1 + $0x78] sm:$0xff]
    %v60 = vld [vmem:[%s1 + $0x80] sm:$0xff]
    %v61 = vld [vmem:[%s1 + $0x88] sm:$0xff]
    %v62 = vld [vmem:[%s1 + $0x90] sm:$0xff]
    %v63 = vld [vmem:[%s1 + $0x98] sm:$0xff]
    %v64 = vld [vmem:[%s1 + $0xa0] sm:$0xff]
    %v65 = vld [vmem:[%s1 + $0xa8] sm:$0xff]
    %v66 = vld [vmem:[%s1 + $0xb0] sm:$0xff]
    %v67 = vld [vmem:[%s1 + $0xb8] sm:$0xff]
    %v68 = vld [vmem:[%s1 + $0xc0] sm:$0xff]
    %v69 = vld [vmem:[%s1 + $0xc8] sm:$0xff]
    %v70 = vld [vmem:[%s1 + $0xd0] sm:$0xff]
    %v71 = vld [vmem:[%s1 + $0xd8] sm:$0xff]
    %v72 = vld [vmem:[%s1 + $0xe0] sm:$0xff]
    %v73 = vld [vmem:[%s1 + $0xe8] sm:$0xff]
    %v74 = vld [vmem:[%s1 + $0xf0] sm:$0xff]
    %v75 = vld [vmem:[%s1 + $0xf8] sm:$0xff]
    %v76 = vld [vmem:[%s1 + $0x100] sm:$0xff]
    %v77 = vld [vmem:[%s1 + $0x108] sm:$0xff]
    %v78 = vld [vmem:[%s1 + $0x110] sm:$0xff]
    %v79 = vld [vmem:[%s1 + $0x118] sm:$0xff]
    %v80 = vld [vmem:[%s1 + $0x120] sm:$0xff]
    %v81 = vld [vmem:[%s1 + $0x128] sm:$0xff]
    %v82 = vld [vmem:[%s1 + $0x130] sm:$0xff]
    %v83 = vld [vmem:[%s1 + $0x138] sm:$0xff]
    %v84 = vld [vmem:[%s1 + $0x140] sm:$0xff]
    %v85 = vld [vmem:[%s1 + $0x148] sm:$0xff]
    %v86 = vld [vmem:[%s1 + $0x150] sm:$0xff]
    %v87 = vld [vmem:[%s1 + $0x158] sm:$0xff]
    %v88 = vld [vmem:[%s1 + $0x160] sm:$0xff]
    %v89 = vld [vmem:[%s1 + $0x168] sm:$0xff]
    %v90 = vld [vmem:[%s1 + $0x170] sm:$0xff]
    %v91 = vld [vmem:[%s1 + $0x178] sm:$0xff]
    %v92 = vld [vmem:[%s1 + $0x180] sm:$0xff]
    %v93 = vld [vmem:[%s1 + $0x188] sm:$0xff]
    %v94 = vld [vmem:[%s1 + $0x190] sm:$0xff]
    %v95 = vld [vmem:[%s1 + $0x198] sm:$0xff]
    %v96 = vld [vmem:[%s1 + $0x1a0] sm:$0xff]
    %v97 = vld [vmem:[%s1 + $0x1a8] sm:$0xff]
    %v98 = vld [vmem:[%s1 + $0x1b0] sm:$0xff]
    %v99 = vld [vmem:[%s1 + $0x1b8] sm:$0xff]
    %v100 = vld [vmem:[%s1 + $0x1c0] sm:$0xff]
    %v101 = vld [vmem:[%s1 + $0x1c8] sm:$0xff]
    %v102 = vld [vmem:[%s1 + $0x1d0] sm:$0xff]
    %v103 = vld [vmem:[%s1 + $0x1d8] sm:$0xff]
    %v104 = vld [vmem:[%s1 + $0x1e0] sm:$0xff]
    %v105 = vld [vmem:[%s1 + $0x1e8] sm:$0xff]
    %v106 = vld [vmem:[%s1 + $0x1f0] sm:$0xff]
    %v107 = vld [vmem:[%s1 + $0x1f8] sm:$0xff]
    %v108 = vld [vmem:[%s2] sm:$0x3]
    %v110 = vlaneseq
    %v111 = vshrl.u32 %v110, 7
    %v112 = vsub.s32 0, %v111
    %v113 = vrot.slane %v108, %v112
    %v114 = vlaneseq
    %v115 = vshrl.u32 %v114, 7
    %v116 = vsub.s32 1, %v115
    %v117 = vrot.slane %v108, %v116
    %v121 = vcombine.high %v43, %v43
    %v123 = vunpack.c.l.s4 1983009808
    %v124 = vunpack.c.0.s8 %v123
    %v125 = vlaneseq
    %v126 = vshrl.u32 %v125, 7
    %v127 = vsub.s32 %v124, %v126
    %v128 = vrot.slane %v43, %v127
    %v130 = vunpack.c.l.s4 1983009808
    %v131 = vunpack.c.0.s8 %v130
    %v132 = vlaneseq
    %v133 = vshrl.u32 %v132, 7
    %v134 = vsub.s32 %v131, %v133
    %v135 = vrot.slane %v121, %v134
    %v136 = vcombine.high %v128, %v128
    %v137 = vcombine.high %v135, %v135
    %v206 = vunpack.c.l.b16 %v44
    %v207 = vunpack.c.h.b16 %v44
    %v208 = vunpack.c.l.b16 %v45
    %v209 = vunpack.c.h.b16 %v45
    %v210 = vunpack.c.l.b16 %v46
    %v211 = vunpack.c.h.b16 %v46
    %v212 = vunpack.c.l.b16 %v47
    %v213 = vunpack.c.h.b16 %v47
    %v214 = vunpack.c.l.b16 %v48
    %v215 = vunpack.c.h.b16 %v48
    %v216 = vunpack.c.l.b16 %v49
    %v217 = vunpack.c.h.b16 %v49
    %v218 = vunpack.c.l.b16 %v50
    %v219 = vunpack.c.h.b16 %v50
    %v220 = vunpack.c.l.b16 %v51
    %v221 = vunpack.c.h.b16 %v51
    %v222 = vunpack.c.l.b16 %v52
    %v223 = vunpack.c.h.b16 %v52
    %v224 = vunpack.c.l.b16 %v53
    %v225 = vunpack.c.h.b16 %v53
    %v226 = vunpack.c.l.b16 %v54
    %v227 = vunpack.c.h.b16 %v54
    %v228 = vunpack.c.l.b16 %v55
    %v229 = vunpack.c.h.b16 %v55
    %v230 = vunpack.c.l.b16 %v56
    %v231 = vunpack.c.h.b16 %v56
    %v232 = vunpack.c.l.b16 %v57
    %v233 = vunpack.c.h.b16 %v57
    %v234 = vunpack.c.l.b16 %v58
    %v235 = vunpack.c.h.b16 %v58
    %v236 = vunpack.c.l.b16 %v59
    %v237 = vunpack.c.h.b16 %v59
    %v238 = vunpack.c.l.b16 %v60
    %v239 = vunpack.c.h.b16 %v60
    %v240 = vunpack.c.l.b16 %v61
    %v241 = vunpack.c.h.b16 %v61
    %v242 = vunpack.c.l.b16 %v62
    %v243 = vunpack.c.h.b16 %v62
    %v244 = vunpack.c.l.b16 %v63
    %v245 = vunpack.c.h.b16 %v63
    %v246 = vunpack.c.l.b16 %v64
    %v247 = vunpack.c.h.b16 %v64
    %v248 = vunpack.c.l.b16 %v65
    %v249 = vunpack.c.h.b16 %v65
    %v250 = vunpack.c.l.b16 %v66
    %v251 = vunpack.c.h.b16 %v66
    %v252 = vunpack.c.l.b16 %v67
    %v253 = vunpack.c.h.b16 %v67
    %v254 = vunpack.c.l.b16 %v68
    %v255 = vunpack.c.h.b16 %v68
    %v256 = vunpack.c.l.b16 %v69
    %v257 = vunpack.c.h.b16 %v69
    %v258 = vunpack.c.l.b16 %v70
    %v259 = vunpack.c.h.b16 %v70
    %v260 = vunpack.c.l.b16 %v71
    %v261 = vunpack.c.h.b16 %v71
    %v262 = vunpack.c.l.b16 %v72
    %v263 = vunpack.c.h.b16 %v72
    %v264 = vunpack.c.l.b16 %v73
    %v265 = vunpack.c.h.b16 %v73
    %v266 = vunpack.c.l.b16 %v74
    %v267 = vunpack.c.h.b16 %v74
    %v268 = vunpack.c.l.b16 %v75
    %v269 = vunpack.c.h.b16 %v75
    %v270 = vunpack.c.l.b16 %v76
    %v271 = vunpack.c.h.b16 %v76
    %v272 = vunpack.c.l.b16 %v77
    %v273 = vunpack.c.h.b16 %v77
    %v274 = vunpack.c.l.b16 %v78
    %v275 = vunpack.c.h.b16 %v78
    %v276 = vunpack.c.l.b16 %v79
    %v277 = vunpack.c.h.b16 %v79
    %v278 = vunpack.c.l.b16 %v80
    %v279 = vunpack.c.h.b16 %v80
    %v280 = vunpack.c.l.b16 %v81
    %v281 = vunpack.c.h.b16 %v81
    %v282 = vunpack.c.l.b16 %v82
    %v283 = vunpack.c.h.b16 %v82
    %v284 = vunpack.c.l.b16 %v83
    %v285 = vunpack.c.h.b16 %v83
    %v286 = vunpack.c.l.b16 %v84
    %v287 = vunpack.c.h.b16 %v84
    %v288 = vunpack.c.l.b16 %v85
    %v289 = vunpack.c.h.b16 %v85
    %v290 = vunpack.c.l.b16 %v86
    %v291 = vunpack.c.h.b16 %v86
    %v292 = vunpack.c.l.b16 %v87
    %v293 = vunpack.c.h.b16 %v87
    %v294 = vunpack.c.l.b16 %v88
    %v295 = vunpack.c.h.b16 %v88
    %v296 = vunpack.c.l.b16 %v89
    %v297 = vunpack.c.h.b16 %v89
    %v298 = vunpack.c.l.b16 %v90
    %v299 = vunpack.c.h.b16 %v90
    %v300 = vunpack.c.l.b16 %v91
    %v301 = vunpack.c.h.b16 %v91
    %v302 = vunpack.c.l.b16 %v92
    %v303 = vunpack.c.h.b16 %v92
    %v304 = vunpack.c.l.b16 %v93
    %v305 = vunpack.c.h.b16 %v93
    %v306 = vunpack.c.l.b16 %v94
    %v307 = vunpack.c.h.b16 %v94
    %v308 = vunpack.c.l.b16 %v95
    %v309 = vunpack.c.h.b16 %v95
    %v310 = vunpack.c.l.b16 %v96
    %v311 = vunpack.c.h.b16 %v96
    %v312 = vunpack.c.l.b16 %v97
    %v313 = vunpack.c.h.b16 %v97
    %v314 = vunpack.c.l.b16 %v98
    %v315 = vunpack.c.h.b16 %v98
    %v316 = vunpack.c.l.b16 %v99
    %v317 = vunpack.c.h.b16 %v99
    %v318 = vunpack.c.l.b16 %v100
    %v319 = vunpack.c.h.b16 %v100
    %v320 = vunpack.c.l.b16 %v101
    %v321 = vunpack.c.h.b16 %v101
    %v322 = vunpack.c.l.b16 %v102
    %v323 = vunpack.c.h.b16 %v102
    %v324 = vunpack.c.l.b16 %v103
    %v325 = vunpack.c.h.b16 %v103
    %v326 = vunpack.c.l.b16 %v104
    %v327 = vunpack.c.h.b16 %v104
    %v328 = vunpack.c.l.b16 %v105
    %v329 = vunpack.c.h.b16 %v105
    %v330 = vunpack.c.l.b16 %v106
    %v331 = vunpack.c.h.b16 %v106
    %v332 = vunpack.c.l.b16 %v107
    %v333 = vunpack.c.h.b16 %v107
    %v334 = vpack.c.b16 %v208, %v206
    %v335 = vpack.c.b16 %v209, %v207
    %v336 = vpack.c.b16 %v212, %v210
    %v337 = vpack.c.b16 %v213, %v211
    %v338 = vpack.c.b16 %v216, %v214
    %v339 = vpack.c.b16 %v217, %v215
    %v340 = vpack.c.b16 %v220, %v218
    %v341 = vpack.c.b16 %v221, %v219
    %v342 = vpack.c.b16 %v224, %v222
    %v343 = vpack.c.b16 %v225, %v223
    %v344 = vpack.c.b16 %v228, %v226
    %v345 = vpack.c.b16 %v229, %v227
    %v346 = vpack.c.b16 %v232, %v230
    %v347 = vpack.c.b16 %v233, %v231
    %v348 = vpack.c.b16 %v236, %v234
    %v349 = vpack.c.b16 %v237, %v235
    %v350 = vpack.c.b16 %v240, %v238
    %v351 = vpack.c.b16 %v241, %v239
    %v352 = vpack.c.b16 %v244, %v242
    %v353 = vpack.c.b16 %v245, %v243
    %v354 = vpack.c.b16 %v248, %v246
    %v355 = vpack.c.b16 %v249, %v247
    %v356 = vpack.c.b16 %v252, %v250
    %v357 = vpack.c.b16 %v253, %v251
    %v358 = vpack.c.b16 %v256, %v254
    %v359 = vpack.c.b16 %v257, %v255
    %v360 = vpack.c.b16 %v260, %v258
    %v361 = vpack.c.b16 %v261, %v259
    %v362 = vpack.c.b16 %v264, %v262
    %v363 = vpack.c.b16 %v265, %v263
    %v364 = vpack.c.b16 %v268, %v266
    %v365 = vpack.c.b16 %v269, %v267
    %v366 = vpack.c.b16 %v272, %v270
    %v367 = vpack.c.b16 %v273, %v271
    %v368 = vpack.c.b16 %v276, %v274
    %v369 = vpack.c.b16 %v277, %v275
    %v370 = vpack.c.b16 %v280, %v278
    %v371 = vpack.c.b16 %v281, %v279
    %v372 = vpack.c.b16 %v284, %v282
    %v373 = vpack.c.b16 %v285, %v283
    %v374 = vpack.c.b16 %v288, %v286
    %v375 = vpack.c.b16 %v289, %v287
    %v376 = vpack.c.b16 %v292, %v290
    %v377 = vpack.c.b16 %v293, %v291
    %v378 = vpack.c.b16 %v296, %v294
    %v379 = vpack.c.b16 %v297, %v295
    %v380 = vpack.c.b16 %v300, %v298
    %v381 = vpack.c.b16 %v301, %v299
    %v382 = vpack.c.b16 %v304, %v302
    %v383 = vpack.c.b16 %v305, %v303
    %v384 = vpack.c.b16 %v308, %v306
    %v385 = vpack.c.b16 %v309, %v307
    %v386 = vpack.c.b16 %v312, %v310
    %v387 = vpack.c.b16 %v313, %v311
    %v388 = vpack.c.b16 %v316, %v314
    %v389 = vpack.c.b16 %v317, %v315
    %v390 = vpack.c.b16 %v320, %v318
    %v391 = vpack.c.b16 %v321, %v319
    %v392 = vpack.c.b16 %v324, %v322
    %v393 = vpack.c.b16 %v325, %v323
    %v394 = vpack.c.b16 %v328, %v326
    %v395 = vpack.c.b16 %v329, %v327
    %v396 = vpack.c.b16 %v332, %v330
    %v397 = vpack.c.b16 %v333, %v331
    %462 = vmatprep.subr.bf16.mxu0 %v349
    %463 = vmatpush1.bf16.msra.mxu0 %v348
    %464 = vmatprep.subr.bf16.mxu0 %v347
    %465 = vmatpush1.bf16.msra.mxu0 %v346
    %466 = vmatprep.subr.bf16.mxu0 %v345
    %467 = vmatpush1.bf16.msra.mxu0 %v344
    %468 = vmatprep.subr.bf16.mxu0 %v343
    %469 = vmatpush1.bf16.msra.mxu0 %v342
    %470 = vmatprep.subr.bf16.mxu0 %v341
    %471 = vmatpush1.bf16.msra.mxu0 %v340
    %472 = vmatprep.subr.bf16.mxu0 %v339
    %473 = vmatpush1.bf16.msra.mxu0 %v338
    %474 = vmatprep.subr.bf16.mxu0 %v337
    %475 = vmatpush1.bf16.msra.mxu0 %v336
    %476 = vmatprep.subr.bf16.mxu0 %v335
    %477 = vmatpush1.bf16.msra.mxu0 %v334
    %478 = vmatprep.subr.bf16.mxu0 %v365
    %479 = vmatpush2.bf16.msra.mxu0 %v364
    %480 = vmatprep.subr.bf16.mxu0 %v363
    %481 = vmatpush2.bf16.msra.mxu0 %v362
    %482 = vmatprep.subr.bf16.mxu0 %v361
    %483 = vmatpush2.bf16.msra.mxu0 %v360
    %484 = vmatprep.subr.bf16.mxu0 %v359
    %485 = vmatpush2.bf16.msra.mxu0 %v358
    %486 = vmatprep.subr.bf16.mxu0 %v357
    %487 = vmatpush2.bf16.msra.mxu0 %v356
    %488 = vmatprep.subr.bf16.mxu0 %v355
    %489 = vmatpush2.bf16.msra.mxu0 %v354
    %490 = vmatprep.subr.bf16.mxu0 %v353
    %491 = vmatpush2.bf16.msra.mxu0 %v352
    %492 = vmatprep.subr.bf16.mxu0 %v351
    %493 = vmatpush2.bf16.msra.mxu0 %v350
    %494 = vmatprep.mubr.bf16.mxu0 %v136
    %495 = vmatmul.mubr.bf16.gmra.mxu0 %v128
    %v496 = vpop.f32.mrf.mxu0
    %v497 = vadd.f32 %v113, %v496
    %v498 = vpop.f32.mrf.mxu0
    %v499 = vadd.f32 %v117, %v498
    %v500 = vpop.f32.mrf.mxu0
    %v501 = vpop.f32.mrf.mxu0
    %502 = vdwg.mxu0
    %503 = vmatprep.subr.bf16.mxu0 %v381
    %504 = vmatpush1.bf16.msra.mxu0 %v380
    %505 = vmatprep.subr.bf16.mxu0 %v379
    %506 = vmatpush1.bf16.msra.mxu0 %v378
    %507 = vmatprep.subr.bf16.mxu0 %v377
    %508 = vmatpush1.bf16.msra.mxu0 %v376
    %509 = vmatprep.subr.bf16.mxu0 %v375
    %510 = vmatpush1.bf16.msra.mxu0 %v374
    %511 = vmatprep.subr.bf16.mxu0 %v373
    %512 = vmatpush1.bf16.msra.mxu0 %v372
    %513 = vmatprep.subr.bf16.mxu0 %v371
    %514 = vmatpush1.bf16.msra.mxu0 %v370
    %515 = vmatprep.subr.bf16.mxu0 %v369
    %516 = vmatpush1.bf16.msra.mxu0 %v368
    %517 = vmatprep.subr.bf16.mxu0 %v367
    %518 = vmatpush1.bf16.msra.mxu0 %v366
    %519 = vmatprep.subr.bf16.mxu0 %v397
    %520 = vmatpush2.bf16.msra.mxu0 %v396
    %521 = vmatprep.subr.bf16.mxu0 %v395
    %522 = vmatpush2.bf16.msra.mxu0 %v394
    %523 = vmatprep.subr.bf16.mxu0 %v393
    %524 = vmatpush2.bf16.msra.mxu0 %v392
    %525 = vmatprep.subr.bf16.mxu0 %v391
    %526 = vmatpush2.bf16.msra.mxu0 %v390
    %527 = vmatprep.subr.bf16.mxu0 %v389
    %528 = vmatpush2.bf16.msra.mxu0 %v388
    %529 = vmatprep.subr.bf16.mxu0 %v387
    %530 = vmatpush2.bf16.msra.mxu0 %v386
    %531 = vmatprep.subr.bf16.mxu0 %v385
    %532 = vmatpush2.bf16.msra.mxu0 %v384
    %533 = vmatprep.subr.bf16.mxu0 %v383
    %534 = vmatpush2.bf16.msra.mxu0 %v382
    %535 = vmatprep.mubr.bf16.mxu0 %v137
    %536 = vmatmul.mubr.bf16.gmra.mxu0 %v135
    %v537 = vpop.f32.mrf.mxu0
    %v538 = vadd.f32 %v497, %v537
    %v539 = vpop.f32.mrf.mxu0
    %v540 = vadd.f32 %v499, %v539
    %v541 = vpop.f32.mrf.mxu0
    %v542 = vpop.f32.mrf.mxu0
    %543 = vdwg.mxu0
    %v544 = vld [vmem:[%s3] sm:$0xff]
    %v545 = vld [vmem:[%s3 + $0x8] sm:$0xff]
    %v546 = vld [vmem:[%s3 + $0x10] sm:$0xff]
    %v547 = vld [vmem:[%s3 + $0x18] sm:$0xff]
    %v548 = vld [vmem:[%s3 + $0x20] sm:$0xff]
    %v549 = vld [vmem:[%s3 + $0x28] sm:$0xff]
    %v550 = vld [vmem:[%s3 + $0x30] sm:$0xff]
    %v551 = vld [vmem:[%s3 + $0x38] sm:$0xff]
    %v552 = vld [vmem:[%s3 + $0x40] sm:$0xff]
    %v553 = vld [vmem:[%s3 + $0x48] sm:$0xff]
    %v554 = vld [vmem:[%s3 + $0x50] sm:$0xff]
    %v555 = vld [vmem:[%s3 + $0x58] sm:$0xff]
    %v556 = vld [vmem:[%s3 + $0x60] sm:$0xff]
    %v557 = vld [vmem:[%s3 + $0x68] sm:$0xff]
    %v558 = vld [vmem:[%s3 + $0x70] sm:$0xff]
    %v559 = vld [vmem:[%s3 + $0x78] sm:$0xff]
    %v560 = vld [vmem:[%s3 + $0x80] sm:$0xff]
    %v561 = vld [vmem:[%s3 + $0x88] sm:$0xff]
    %v562 = vld [vmem:[%s3 + $0x90] sm:$0xff]
    %v563 = vld [vmem:[%s3 + $0x98] sm:$0xff]
    %v564 = vld [vmem:[%s3 + $0xa0] sm:$0xff]
    %v565 = vld [vmem:[%s3 + $0xa8] sm:$0xff]
    %v566 = vld [vmem:[%s3 + $0xb0] sm:$0xff]
    %v567 = vld [vmem:[%s3 + $0xb8] sm:$0xff]
    %v568 = vld [vmem:[%s3 + $0xc0] sm:$0xff]
    %v569 = vld [vmem:[%s3 + $0xc8] sm:$0xff]
    %v570 = vld [vmem:[%s3 + $0xd0] sm:$0xff]
    %v571 = vld [vmem:[%s3 + $0xd8] sm:$0xff]
    %v572 = vld [vmem:[%s3 + $0xe0] sm:$0xff]
    %v573 = vld [vmem:[%s3 + $0xe8] sm:$0xff]
    %v574 = vld [vmem:[%s3 + $0xf0] sm:$0xff]
    %v575 = vld [vmem:[%s3 + $0xf8] sm:$0xff]
    %v576 = vld [vmem:[%s4] sm:$0x1]
    %v578 = vlaneseq
    %v579 = vshrl.u32 %v578, 7
    %v580 = vsub.s32 0, %v579
    %v581 = vrot.slane %v576, %v580
    %583 = vmatprep.subr.mxu0 0.0
    %584 = vmatpush1.msra.mxu0 %v559
    %585 = vmatprep.subr.mxu0 0.0
    %586 = vmatpush1.msra.mxu0 %v558
    %587 = vmatprep.subr.mxu0 0.0
    %588 = vmatpush1.msra.mxu0 %v557
    %589 = vmatprep.subr.mxu0 0.0
    %590 = vmatpush1.msra.mxu0 %v556
    %591 = vmatprep.subr.mxu0 0.0
    %592 = vmatpush1.msra.mxu0 %v555
    %593 = vmatprep.subr.mxu0 0.0
    %594 = vmatpush1.msra.mxu0 %v554
    %595 = vmatprep.subr.mxu0 0.0
    %596 = vmatpush1.msra.mxu0 %v553
    %597 = vmatprep.subr.mxu0 0.0
    %598 = vmatpush1.msra.mxu0 %v552
    %599 = vmatprep.subr.mxu0 0.0
    %600 = vmatpush1.msra.mxu0 %v551
    %601 = vmatprep.subr.mxu0 0.0
    %602 = vmatpush1.msra.mxu0 %v550
    %603 = vmatprep.subr.mxu0 0.0
    %604 = vmatpush1.msra.mxu0 %v549
    %605 = vmatprep.subr.mxu0 0.0
    %606 = vmatpush1.msra.mxu0 %v548
    %607 = vmatprep.subr.mxu0 0.0
    %608 = vmatpush1.msra.mxu0 %v547
    %609 = vmatprep.subr.mxu0 0.0
    %610 = vmatpush1.msra.mxu0 %v546
    %611 = vmatprep.subr.mxu0 0.0
    %612 = vmatpush1.msra.mxu0 %v545
    %613 = vmatprep.subr.mxu0 0.0
    %614 = vmatpush1.msra.mxu0 %v544
    %615 = vmatprep.subr.mxu0 0.0
    %616 = vmatpush2.msra.mxu0 %v575
    %617 = vmatprep.subr.mxu0 0.0
    %618 = vmatpush2.msra.mxu0 %v574
    %619 = vmatprep.subr.mxu0 0.0
    %620 = vmatpush2.msra.mxu0 %v573
    %621 = vmatprep.subr.mxu0 0.0
    %622 = vmatpush2.msra.mxu0 %v572
    %623 = vmatprep.subr.mxu0 0.0
    %624 = vmatpush2.msra.mxu0 %v571
    %625 = vmatprep.subr.mxu0 0.0
    %626 = vmatpush2.msra.mxu0 %v570
    %627 = vmatprep.subr.mxu0 0.0
    %628 = vmatpush2.msra.mxu0 %v569
    %629 = vmatprep.subr.mxu0 0.0
    %630 = vmatpush2.msra.mxu0 %v568
    %631 = vmatprep.subr.mxu0 0.0
    %632 = vmatpush2.msra.mxu0 %v567
    %633 = vmatprep.subr.mxu0 0.0
    %634 = vmatpush2.msra.mxu0 %v566
    %635 = vmatprep.subr.mxu0 0.0
    %636 = vmatpush2.msra.mxu0 %v565
    %637 = vmatprep.subr.mxu0 0.0
    %638 = vmatpush2.msra.mxu0 %v564
    %639 = vmatprep.subr.mxu0 0.0
    %640 = vmatpush2.msra.mxu0 %v563
    %641 = vmatprep.subr.mxu0 0.0
    %642 = vmatpush2.msra.mxu0 %v562
    %643 = vmatprep.subr.mxu0 0.0
    %644 = vmatpush2.msra.mxu0 %v561
    %645 = vmatprep.subr.mxu0 0.0
    %646 = vmatpush2.msra.mxu0 %v560
    %647 = vmatprep.mubr.f32.mxu0 %v540
    %648 = vmatmul.mubr.f32.gmra.mxu0 %v538
    %v649 = vpop.f32.mrf.mxu0
    %v650 = vadd.f32 %v581, %v649
    %v651 = vpop.f32.mrf.mxu0
    %652 = vdwg.mxu0
    %vm653 = vcmask 68608
    %654 = vst.msk [vmem:[#allocation3] sm:$0xf] %vm653, %v650
    %v655 = vld [vmem:[%s5] sm:$0xff]
    %v656 = vld [vmem:[%s5 + $0x8] sm:$0xff]
    %v657 = vld [vmem:[%s5 + $0x10] sm:$0xff]
    %v658 = vld [vmem:[%s5 + $0x18] sm:$0xff]
    %v659 = vld [vmem:[%s5 + $0x20] sm:$0xff]
    %v660 = vld [vmem:[%s5 + $0x28] sm:$0xff]
    %v661 = vld [vmem:[%s5 + $0x30] sm:$0xff]
    %v662 = vld [vmem:[%s5 + $0x38] sm:$0xff]
    %v663 = vld [vmem:[%s5 + $0x40] sm:$0xff]
    %v664 = vld [vmem:[%s5 + $0x48] sm:$0xff]
    %v665 = vld [vmem:[%s5 + $0x50] sm:$0xff]
    %v666 = vld [vmem:[%s5 + $0x58] sm:$0xff]
    %v667 = vld [vmem:[%s5 + $0x60] sm:$0xff]
    %v668 = vld [vmem:[%s5 + $0x68] sm:$0xff]
    %v669 = vld [vmem:[%s5 + $0x70] sm:$0xff]
    %v670 = vld [vmem:[%s5 + $0x78] sm:$0xff]
    %v671 = vld [vmem:[%s5 + $0x80] sm:$0xff]
    %v672 = vld [vmem:[%s5 + $0x88] sm:$0xff]
    %v673 = vld [vmem:[%s5 + $0x90] sm:$0xff]
    %v674 = vld [vmem:[%s5 + $0x98] sm:$0xff]
    %v675 = vld [vmem:[%s5 + $0xa0] sm:$0xff]
    %v676 = vld [vmem:[%s5 + $0xa8] sm:$0xff]
    %v677 = vld [vmem:[%s5 + $0xb0] sm:$0xff]
    %v678 = vld [vmem:[%s5 + $0xb8] sm:$0xff]
    %v679 = vld [vmem:[%s5 + $0xc0] sm:$0xff]
    %v680 = vld [vmem:[%s5 + $0xc8] sm:$0xff]
    %v681 = vld [vmem:[%s5 + $0xd0] sm:$0xff]
    %v682 = vld [vmem:[%s5 + $0xd8] sm:$0xff]
    %v683 = vld [vmem:[%s5 + $0xe0] sm:$0xff]
    %v684 = vld [vmem:[%s5 + $0xe8] sm:$0xff]
    %v685 = vld [vmem:[%s5 + $0xf0] sm:$0xff]
    %v686 = vld [vmem:[%s5 + $0xf8] sm:$0xff]
    %v687 = vld [vmem:[%s5 + $0x100] sm:$0xff]
    %v688 = vld [vmem:[%s5 + $0x108] sm:$0xff]
    %v689 = vld [vmem:[%s5 + $0x110] sm:$0xff]
    %v690 = vld [vmem:[%s5 + $0x118] sm:$0xff]
    %v691 = vld [vmem:[%s5 + $0x120] sm:$0xff]
    %v692 = vld [vmem:[%s5 + $0x128] sm:$0xff]
    %v693 = vld [vmem:[%s5 + $0x130] sm:$0xff]
    %v694 = vld [vmem:[%s5 + $0x138] sm:$0xff]
    %v695 = vld [vmem:[%s5 + $0x140] sm:$0xff]
    %v696 = vld [vmem:[%s5 + $0x148] sm:$0xff]
    %v697 = vld [vmem:[%s5 + $0x150] sm:$0xff]
    %v698 = vld [vmem:[%s5 + $0x158] sm:$0xff]
    %v699 = vld [vmem:[%s5 + $0x160] sm:$0xff]
    %v700 = vld [vmem:[%s5 + $0x168] sm:$0xff]
    %v701 = vld [vmem:[%s5 + $0x170] sm:$0xff]
    %v702 = vld [vmem:[%s5 + $0x178] sm:$0xff]
    %v703 = vld [vmem:[%s5 + $0x180] sm:$0xff]
    %v704 = vld [vmem:[%s5 + $0x188] sm:$0xff]
    %v705 = vld [vmem:[%s5 + $0x190] sm:$0xff]
    %v706 = vld [vmem:[%s5 + $0x198] sm:$0xff]
    %v707 = vld [vmem:[%s5 + $0x1a0] sm:$0xff]
    %v708 = vld [vmem:[%s5 + $0x1a8] sm:$0xff]
    %v709 = vld [vmem:[%s5 + $0x1b0] sm:$0xff]
    %v710 = vld [vmem:[%s5 + $0x1b8] sm:$0xff]
    %v711 = vld [vmem:[%s5 + $0x1c0] sm:$0xff]
    %v712 = vld [vmem:[%s5 + $0x1c8] sm:$0xff]
    %v713 = vld [vmem:[%s5 + $0x1d0] sm:$0xff]
    %v714 = vld [vmem:[%s5 + $0x1d8] sm:$0xff]
    %v715 = vld [vmem:[%s5 + $0x1e0] sm:$0xff]
    %v716 = vld [vmem:[%s5 + $0x1e8] sm:$0xff]
    %v717 = vld [vmem:[%s5 + $0x1f0] sm:$0xff]
    %v718 = vld [vmem:[%s5 + $0x1f8] sm:$0xff]
    %v719 = vld [vmem:[%s6] sm:$0x3]
    %v721 = vlaneseq
    %v722 = vshrl.u32 %v721, 7
    %v723 = vsub.s32 0, %v722
    %v724 = vrot.slane %v719, %v723
    %v725 = vlaneseq
    %v726 = vshrl.u32 %v725, 7
    %v727 = vsub.s32 1, %v726
    %v728 = vrot.slane %v719, %v727
    %731 = vmatprep.subr.mxu0 %v686
    %732 = vmatpush1.msra.mxu0 %v685
    %733 = vmatprep.subr.mxu0 %v684
    %734 = vmatpush1.msra.mxu0 %v683
    %735 = vmatprep.subr.mxu0 %v682
    %736 = vmatpush1.msra.mxu0 %v681
    %737 = vmatprep.subr.mxu0 %v680
    %738 = vmatpush1.msra.mxu0 %v679
    %739 = vmatprep.subr.mxu0 %v678
    %740 = vmatpush1.msra.mxu0 %v677
    %741 = vmatprep.subr.mxu0 %v676
    %742 = vmatpush1.msra.mxu0 %v675
    %743 = vmatprep.subr.mxu0 %v674
    %744 = vmatpush1.msra.mxu0 %v673
    %745 = vmatprep.subr.mxu0 %v672
    %746 = vmatpush1.msra.mxu0 %v671
    %747 = vmatprep.subr.mxu0 %v670
    %748 = vmatpush1.msra.mxu0 %v669
    %749 = vmatprep.subr.mxu0 %v668
    %750 = vmatpush1.msra.mxu0 %v667
    %751 = vmatprep.subr.mxu0 %v666
    %752 = vmatpush1.msra.mxu0 %v665
    %753 = vmatprep.subr.mxu0 %v664
    %754 = vmatpush1.msra.mxu0 %v663
    %755 = vmatprep.subr.mxu0 %v662
    %756 = vmatpush1.msra.mxu0 %v661
    %757 = vmatprep.subr.mxu0 %v660
    %758 = vmatpush1.msra.mxu0 %v659
    %759 = vmatprep.subr.mxu0 %v658
    %760 = vmatpush1.msra.mxu0 %v657
    %761 = vmatprep.subr.mxu0 %v656
    %762 = vmatpush1.msra.mxu0 %v655
    %763 = vmatprep.subr.mxu0 %v718
    %764 = vmatpush2.msra.mxu0 %v717
    %765 = vmatprep.subr.mxu0 %v716
    %766 = vmatpush2.msra.mxu0 %v715
    %767 = vmatprep.subr.mxu0 %v714
    %768 = vmatpush2.msra.mxu0 %v713
    %769 = vmatprep.subr.mxu0 %v712
    %770 = vmatpush2.msra.mxu0 %v711
    %771 = vmatprep.subr.mxu0 %v710
    %772 = vmatpush2.msra.mxu0 %v709
    %773 = vmatprep.subr.mxu0 %v708
    %774 = vmatpush2.msra.mxu0 %v707
    %775 = vmatprep.subr.mxu0 %v706
    %776 = vmatpush2.msra.mxu0 %v705
    %777 = vmatprep.subr.mxu0 %v704
    %778 = vmatpush2.msra.mxu0 %v703
    %779 = vmatprep.subr.mxu0 %v702
    %780 = vmatpush2.msra.mxu0 %v701
    %781 = vmatprep.subr.mxu0 %v700
    %782 = vmatpush2.msra.mxu0 %v699
    %783 = vmatprep.subr.mxu0 %v698
    %784 = vmatpush2.msra.mxu0 %v697
    %785 = vmatprep.subr.mxu0 %v696
    %786 = vmatpush2.msra.mxu0 %v695
    %787 = vmatprep.subr.mxu0 %v694
    %788 = vmatpush2.msra.mxu0 %v693
    %789 = vmatprep.subr.mxu0 %v692
    %790 = vmatpush2.msra.mxu0 %v691
    %791 = vmatprep.subr.mxu0 %v690
    %792 = vmatpush2.msra.mxu0 %v689
    %793 = vmatprep.subr.mxu0 %v688
    %794 = vmatpush2.msra.mxu0 %v687
    %795 = vmatprep.mubr.f32.mxu0 %v540
    %796 = vmatmul.mubr.f32.gmra.mxu0 %v538
    %v797 = vpop.f32.mrf.mxu0
    %v798 = vadd.f32 %v724, %v797
    %v799 = vpop.f32.mrf.mxu0
    %v800 = vadd.f32 %v728, %v799
    %801 = vdwg.mxu0
    %v802 = vmax.f32 %v798, 0.0
    %v803 = vmax.f32 %v800, 0.0
    %vm804 = vcmask 1043456
    %v805 = vsel %vm804, %v802, 0.0
    %v806 = vrot.slane %v805, 4
    %v807 = vadd.f32 %v805, %v806
    %v808 = vrot.slane %v807, 2
    %v809 = vadd.f32 %v807, %v808
    %v810 = vrot.slane %v809, 1
    %v811 = vadd.f32 %v809, %v810
    %v812 = vsel %vm804, %v803, 0.0
    %v813 = vrot.slane %v812, 4
    %v814 = vadd.f32 %v812, %v813
    %v815 = vrot.slane %v814, 2
    %v816 = vadd.f32 %v814, %v815
    %v817 = vrot.slane %v816, 1
    %v818 = vadd.f32 %v816, %v817
    %v819 = vrcp.pop 4.0
    %v820 = vmul.f32 %v811, %v819
    %v821 = vmul.f32 %v818, %v819
    %v822 = vsub.f32 %v802, %v820
    %v823 = vsub.f32 %v803, %v821
    %v824 = vmul.f32 %v822, %v822
    %v825 = vmul.f32 %v823, %v823
    %v826 = vsel %vm804, %v824, 0.0
    %v827 = vrot.slane %v826, 4
    %v828 = vadd.f32 %v826, %v827
    %v829 = vrot.slane %v828, 2
    %v830 = vadd.f32 %v828, %v829
    %v831 = vrot.slane %v830, 1
    %v832 = vadd.f32 %v830, %v831
    %v833 = vsel %vm804, %v825, 0.0
    %v834 = vrot.slane %v833, 4
    %v835 = vadd.f32 %v833, %v834
    %v836 = vrot.slane %v835, 2
    %v837 = vadd.f32 %v835, %v836
    %v838 = vrot.slane %v837, 1
    %v839 = vadd.f32 %v837, %v838
    %v840 = vmul.f32 %v832, %v819
    %v841 = vmul.f32 %v839, %v819
    %v842 = vadd.f32 %v840, 1e-05
    %v843 = vadd.f32 %v841, 1e-05
    %v844 = vrsqrt.pop %v842
    %v845 = vrsqrt.pop %v843
    %v846 = vmul.f32 %v822, %v844
    %v847 = vmul.f32 %v823, %v845
    %v848 = vld [vmem:[%s7] sm:$0x3]
    %v850 = vlaneseq
    %v851 = vshrl.u32 %v850, 7
    %v852 = vsub.s32 0, %v851
    %v853 = vrot.slane %v848, %v852
    %v854 = vlaneseq
    %v855 = vshrl.u32 %v854, 7
    %v856 = vsub.s32 1, %v855
    %v857 = vrot.slane %v848, %v856
    %v860 = vmul.f32 %v846, %v853
    %v861 = vmul.f32 %v847, %v857
    %v862 = vld [vmem:[%s8] sm:$0x3]
    %v864 = vlaneseq
    %v865 = vshrl.u32 %v864, 7
    %v866 = vsub.s32 0, %v865
    %v867 = vrot.slane %v862, %v866
    %v868 = vlaneseq
    %v869 = vshrl.u32 %v868, 7
    %v870 = vsub.s32 1, %v869
    %v871 = vrot.slane %v862, %v870
    %v874 = vadd.f32 %v860, %v867
    %v875 = vadd.f32 %v861, %v871
    %v876 = vld [vmem:[%s9] sm:$0xff]
    %v877 = vld [vmem:[%s9 + $0x8] sm:$0xff]
    %v878 = vld [vmem:[%s9 + $0x10] sm:$0xff]
    %v879 = vld [vmem:[%s9 + $0x18] sm:$0xff]
    %v880 = vld [vmem:[%s9 + $0x20] sm:$0xff]
    %v881 = vld [vmem:[%s9 + $0x28] sm:$0xff]
    %v882 = vld [vmem:[%s9 + $0x30] sm:$0xff]
    %v883 = vld [vmem:[%s9 + $0x38] sm:$0xff]
    %v884 = vld [vmem:[%s9 + $0x40] sm:$0xff]
    %v885 = vld [vmem:[%s9 + $0x48] sm:$0xff]
    %v886 = vld [vmem:[%s9 + $0x50] sm:$0xff]
    %v887 = vld [vmem:[%s9 + $0x58] sm:$0xff]
    %v888 = vld [vmem:[%s9 + $0x60] sm:$0xff]
    %v889 = vld [vmem:[%s9 + $0x68] sm:$0xff]
    %v890 = vld [vmem:[%s9 + $0x70] sm:$0xff]
    %v891 = vld [vmem:[%s9 + $0x78] sm:$0xff]
    %v892 = vld [vmem:[%s9 + $0x80] sm:$0xff]
    %v893 = vld [vmem:[%s9 + $0x88] sm:$0xff]
    %v894 = vld [vmem:[%s9 + $0x90] sm:$0xff]
    %v895 = vld [vmem:[%s9 + $0x98] sm:$0xff]
    %v896 = vld [vmem:[%s9 + $0xa0] sm:$0xff]
    %v897 = vld [vmem:[%s9 + $0xa8] sm:$0xff]
    %v898 = vld [vmem:[%s9 + $0xb0] sm:$0xff]
    %v899 = vld [vmem:[%s9 + $0xb8] sm:$0xff]
    %v900 = vld [vmem:[%s9 + $0xc0] sm:$0xff]
    %v901 = vld [vmem:[%s9 + $0xc8] sm:$0xff]
    %v902 = vld [vmem:[%s9 + $0xd0] sm:$0xff]
    %v903 = vld [vmem:[%s9 + $0xd8] sm:$0xff]
    %v904 = vld [vmem:[%s9 + $0xe0] sm:$0xff]
    %v905 = vld [vmem:[%s9 + $0xe8] sm:$0xff]
    %v906 = vld [vmem:[%s9 + $0xf0] sm:$0xff]
    %v907 = vld [vmem:[%s9 + $0xf8] sm:$0xff]
    %v908 = vld [vmem:[#allocation2] sm:$0x1]
    %v910 = vlaneseq
    %v911 = vshrl.u32 %v910, 7
    %v912 = vsub.s32 0, %v911
    %v913 = vrot.slane %v908, %v912
    %915 = vmatprep.subr.mxu0 0.0
    %916 = vmatpush1.msra.mxu0 %v891
    %917 = vmatprep.subr.mxu0 0.0
    %918 = vmatpush1.msra.mxu0 %v890
    %919 = vmatprep.subr.mxu0 0.0
    %920 = vmatpush1.msra.mxu0 %v889
    %921 = vmatprep.subr.mxu0 0.0
    %922 = vmatpush1.msra.mxu0 %v888
    %923 = vmatprep.subr.mxu0 0.0
    %924 = vmatpush1.msra.mxu0 %v887
    %925 = vmatprep.subr.mxu0 0.0
    %926 = vmatpush1.msra.mxu0 %v886
    %927 = vmatprep.subr.mxu0 0.0
    %928 = vmatpush1.msra.mxu0 %v885
    %929 = vmatprep.subr.mxu0 0.0
    %930 = vmatpush1.msra.mxu0 %v884
    %931 = vmatprep.subr.mxu0 0.0
    %932 = vmatpush1.msra.mxu0 %v883
    %933 = vmatprep.subr.mxu0 0.0
    %934 = vmatpush1.msra.mxu0 %v882
    %935 = vmatprep.subr.mxu0 0.0
    %936 = vmatpush1.msra.mxu0 %v881
    %937 = vmatprep.subr.mxu0 0.0
    %938 = vmatpush1.msra.mxu0 %v880
    %939 = vmatprep.subr.mxu0 0.0
    %940 = vmatpush1.msra.mxu0 %v879
    %941 = vmatprep.subr.mxu0 0.0
    %942 = vmatpush1.msra.mxu0 %v878
    %943 = vmatprep.subr.mxu0 0.0
    %944 = vmatpush1.msra.mxu0 %v877
    %945 = vmatprep.subr.mxu0 0.0
    %946 = vmatpush1.msra.mxu0 %v876
    %947 = vmatprep.subr.mxu0 0.0
    %948 = vmatpush2.msra.mxu0 %v907
    %949 = vmatprep.subr.mxu0 0.0
    %950 = vmatpush2.msra.mxu0 %v906
    %951 = vmatprep.subr.mxu0 0.0
    %952 = vmatpush2.msra.mxu0 %v905
    %953 = vmatprep.subr.mxu0 0.0
    %954 = vmatpush2.msra.mxu0 %v904
    %955 = vmatprep.subr.mxu0 0.0
    %956 = vmatpush2.msra.mxu0 %v903
    %957 = vmatprep.subr.mxu0 0.0
    %958 = vmatpush2.msra.mxu0 %v902
    %959 = vmatprep.subr.mxu0 0.0
    %960 = vmatpush2.msra.mxu0 %v901
    %961 = vmatprep.subr.mxu0 0.0
    %962 = vmatpush2.msra.mxu0 %v900
    %963 = vmatprep.subr.mxu0 0.0
    %964 = vmatpush2.msra.mxu0 %v899
    %965 = vmatprep.subr.mxu0 0.0
    %966 = vmatpush2.msra.mxu0 %v898
    %967 = vmatprep.subr.mxu0 0.0
    %968 = vmatpush2.msra.mxu0 %v897
    %969 = vmatprep.subr.mxu0 0.0
    %970 = vmatpush2.msra.mxu0 %v896
    %971 = vmatprep.subr.mxu0 0.0
    %972 = vmatpush2.msra.mxu0 %v895
    %973 = vmatprep.subr.mxu0 0.0
    %974 = vmatpush2.msra.mxu0 %v894
    %975 = vmatprep.subr.mxu0 0.0
    %976 = vmatpush2.msra.mxu0 %v893
    %977 = vmatprep.subr.mxu0 0.0
    %978 = vmatpush2.msra.mxu0 %v892
    %979 = vmatprep.mubr.f32.mxu0 %v875
    %980 = vmatmul.mubr.f32.gmra.mxu0 %v874
    %v981 = vpop.f32.mrf.mxu0
    %v982 = vadd.f32 %v913, %v981
    %v983 = vpop.f32.mrf.mxu0
    %984 = vdwg.mxu0
    %v985 = vsub.f32 0.0, %v982
    %v986 = vmul.f32 %v985, 1.442695
    %v987 = vpow.pop %v986
    %v988 = vadd.f32 %v987, 1.0
    %v989 = vrcp.pop %v988
    %v990 = vmul.f32 1.0, %v989
    %vm991 = vcmask 3072
    %992 = vst.msk [vmem:[%s12] sm:$0xf] %vm991, %v990
    // Predicated region
    $region46: #{model_forward.3} parent=1 // pred_check
      _
    $region47: #{model_forward.3} parent=1 // pred_check_branch
      %994 = sbr.rel (0) target = $region49
    $region48: #{model_forward.3} parent=1 // pred_region
      %s996 = ssub.s32 64, 64
      %997 = vsyncadd [#allocation4], %s996
      %s999 = sshll.u32 [#allocation3], 4
      %s1000 = int_to_ptr.vmem [resolvable:$true] %s999
      %1002 = dma.vmem_to_hbm [thread:$0]  %s1000, 64, %s11, [#allocation4]
    $region49: #{model_forward.3} parent=1 // pred_fallthru
      _
    // Predicated region
    $region50: #{model_forward.3} parent=1 // pred_check
      _
    $region51: #{model_forward.3} parent=1 // pred_check_branch
      %1004 = sbr.rel (0) target = $region53
    $region52: #{model_forward.3} parent=1 // pred_region
      _
    $region53: #{model_forward.3} parent=1 // pred_fallthru
      _
    // Predicated region
    $region54: #{model_forward.3} parent=1 // pred_check
      _
    $region55: #{model_forward.3} parent=1 // pred_check_branch
      %1006 = sbr.rel (0) target = $region57
    $region56: #{model_forward.3} parent=1 // pred_region
      %1007 = dma.done [#allocation4], 64
    $region57: #{model_forward.3} parent=1 // pred_fallthru
      _
    // Predicated region
    $region58: #{model_forward.3} parent=1 // pred_check
      _
    $region59: #{model_forward.3} parent=1 // pred_check_branch
      %1009 = sbr.rel (0) target = $region61
    $region60: #{model_forward.3} parent=1 // pred_region
      _
    $region61: #{model_forward.3} parent=1 // pred_fallthru
      _
    %1010 = vsyncpa [#allocation4], 1

// kernel: model_forward.2
$region0: #{model_forward.2}
  #allocation0 [shape = 'u32[]', space=smem, size = 0x4, offset = 0x4, fixed_abs, tag = 'smem constant byte address 0x4 - core index']
  #allocation1 [shape = 'u32[144,128]{1,0:T(1,128)}', space=vmem, size = 0x12000, scoped, tag = 'internal scratch']
  #allocation2 [shape = 'bf16[18,18,64]{2,1,0:T(8,128)(2,1)}', space=vmem, size = 0x1b000, scoped, tag = 'scratch operand']
  #allocation3 [shape = 'f32[10,10,32]{2,1,0:T(8,128)}', space=vmem, size = 0x14000, scoped, tag = 'scratch operand']
  #allocation4 [shape = 'f32[8,16,32]{2,1,0:T(8,128)}', space=vmem, size = 0x10000, scoped, tag = 'scratch operand']
  #allocation5 [shape = 'f32[8,8,32]{2,1,0:T(8,128)}', space=vmem, size = 0x8000, scoped, tag = 'scratch operand']
  %s0 = inlined_call_operand.vmem [shape: bf16[4,32,16,25], index: 0, kind: input, shape index: {}]
  %s1 = inlined_call_operand.vmem [shape: bf16[4,32,16,25], index: 1, kind: input, shape index: {}]
  %s2 = inlined_call_operand.vmem [shape: bf16[25,64], index: 2, kind: input, shape index: {}]
  %s3 = inlined_call_operand.vmem [shape: bf16[3,3,64,32], index: 3, kind: input, shape index: {}]
  %s4 = inlined_call_operand.vmem [shape: bf16[3,3,32,32], index: 4, kind: input, shape index: {}]
  %s5 = inlined_call_operand.vmem [shape: bf16[4,4,4,32], index: 5, kind: output, shape index: {}]
  %s6 = sld [smem:[#allocation0]]
  $region67: #{model_forward.2} parent=0
    _
  %s8 = ssub.s32 1, %s6
  %s9 = scalar_select 0, %s8, %s6
  loop: start=0, step=1, limit=6
  $region2: #{model_forward.2} parent=0 // loop_pre_header
    _
  $region3: #{model_forward.2} parent=0 // loop_header
    %s11 = sphi 0, %s15
    %p12 = scmp.ge.s32.totalorder %s11, 6
    %s21 = sphi 0, %s23
    %s24 = sphi 0, %s21
    %s25 = sphi 0, %s24
    %s41 = sphi 0, %s25
    %s47 = sphi 0, %s49
    %s50 = sphi 0, %s47
    %s51 = sphi 0, %s50
    %s67 = sphi 0, %s51
    %s71 = sphi 0, %s71
    %s73 = sphi 0, %s71
    %s74 = sphi 0, %s73
    %s88 = sphi 0, %s74
    %s92 = sphi 0, %s92
    %s94 = sphi 0, %s92
    %s95 = sphi 0, %s94
    %s109 = sphi 0, %s95
    %s113 = sphi 0, %s113
    %s115 = sphi 0, %s113
    %s116 = sphi 0, %s115
    %s130 = sphi 0, %s116
    %s136 = sphi 0, %s138
    %s139 = sphi 0, %s136
    %s140 = sphi 0, %s139
    %s156 = sphi 0, %s140
  $region4: #{model_forward.2} parent=0 // loop_header_branch
    %14 = sbr.rel (%p12) target = $region8
  $region5: #{model_forward.2} parent=0 // loop_body
    %s16 = ssub.s32 %s11, 1
    %s17 = ssub.s32 %s11, 2
    %s18 = sadd.s32 %s11, 1
    %s19 = ssub.s32 %s11, %s18
    %p20 = scmp.eq.s32.totalorder %s19, 0
    %s22 = sadd.s32 %s21, 1
    %s23 = scalar_select %p20, %s21, %s22
    %p26 = pneg %p20
    %p27 = scmp.eq.s32.totalorder %s11, 3
    %p28 = por %p26, %p27
    %p29 = scmp.ne.s32.totalorder %s21, %s24
    %p30 = scmp.eq.s32.totalorder %s11, 0
    %p31 = por %p29, %p30
    %p32 = scmp.ne.s32.totalorder %s21, %s24
    %p33 = scmp.eq.s32.totalorder %s16, 3
    %p34 = por %p32, %p33
    %p35 = scmp.ne.s32.totalorder %s24, %s25
    %p36 = scmp.eq.s32.totalorder %s16, 0
    %p37 = por %p35, %p36
    %p38 = scmp.ne.s32.totalorder %s24, %s25
    %p39 = scmp.eq.s32.totalorder %s17, 3
    %p40 = por %p38, %p39
    %p42 = scmp.ne.s32.totalorder %s25, %s41
    %p43 = scmp.eq.s32.totalorder %s17, 0
    %p44 = por %p42, %p43
    %s45 = ssub.s32 %s11, %s18
    %p46 = scmp.eq.s32.totalorder %s45, 0
    %s48 = sadd.s32 %s47, 1
    %s49 = scalar_select %p46, %s47, %s48
    %p52 = pneg %p46
    %p53 = scmp.eq.s32.totalorder %s11, 3
    %p54 = por %p52, %p53
    %p55 = scmp.ne.s32.totalorder %s47, %s50
    %p56 = scmp.eq.s32.totalorder %s11, 0
    %p57 = por %p55, %p56
    %p58 = scmp.ne.s32.totalorder %s47, %s50
    %p59 = scmp.eq.s32.totalorder %s16, 3
    %p60 = por %p58, %p59
    %p61 = scmp.ne.s32.totalorder %s50, %s51
    %p62 = scmp.eq.s32.totalorder %s16, 0
    %p63 = por %p61, %p62
    %p64 = scmp.ne.s32.totalorder %s50, %s51
    %p65 = scmp.eq.s32.totalorder %s17, 3
    %p66 = por %p64, %p65
    %p68 = scmp.ne.s32.totalorder %s51, %s67
    %p69 = scmp.eq.s32.totalorder %s17, 0
    %p70 = por %p68, %p69
    %s72 = sadd.s32 %s71, 1
    %p75 = scmp.eq.s32.totalorder %s11, 3
    %p76 = scmp.ne.s32.totalorder %s71, %s73
    %p77 = scmp.eq.s32.totalorder %s11, 0
    %p78 = por %p76, %p77
    %p79 = scmp.ne.s32.totalorder %s71, %s73
    %p80 = scmp.eq.s32.totalorder %s16, 3
    %p81 = por %p79, %p80
    %p82 = scmp.ne.s32.totalorder %s73, %s74
    %p83 = scmp.eq.s32.totalorder %s16, 0
    %p84 = por %p82, %p83
    %p85 = scmp.ne.s32.totalorder %s73, %s74
    %p86 = scmp.eq.s32.totalorder %s17, 3
    %p87 = por %p85, %p86
    %p89 = scmp.ne.s32.totalorder %s74, %s88
    %p90 = scmp.eq.s32.totalorder %s17, 0
    %p91 = por %p89, %p90
    %s93 = sadd.s32 %s92, 1
    %p96 = scmp.eq.s32.totalorder %s11, 3
    %p97 = scmp.ne.s32.totalorder %s92, %s94
    %p98 = scmp.eq.s32.totalorder %s11, 0
    %p99 = por %p97, %p98
    %p100 = scmp.ne.s32.totalorder %s92, %s94
    %p101 = scmp.eq.s32.totalorder %s16, 3
    %p102 = por %p100, %p101
    %p103 = scmp.ne.s32.totalorder %s94, %s95
    %p104 = scmp.eq.s32.totalorder %s16, 0
    %p105 = por %p103, %p104
    %p106 = scmp.ne.s32.totalorder %s94, %s95
    %p107 = scmp.eq.s32.totalorder %s17, 3
    %p108 = por %p106, %p107
    %p110 = scmp.ne.s32.totalorder %s95, %s109
    %p111 = scmp.eq.s32.totalorder %s17, 0
    %p112 = por %p110, %p111
    %s114 = sadd.s32 %s113, 1
    %p117 = scmp.eq.s32.totalorder %s11, 3
    %p118 = scmp.ne.s32.totalorder %s113, %s115
    %p119 = scmp.eq.s32.totalorder %s11, 0
    %p120 = por %p118, %p119
    %p121 = scmp.ne.s32.totalorder %s113, %s115
    %p122 = scmp.eq.s32.totalorder %s16, 3
    %p123 = por %p121, %p122
    %p124 = scmp.ne.s32.totalorder %s115, %s116
    %p125 = scmp.eq.s32.totalorder %s16, 0
    %p126 = por %p124, %p125
    %p127 = scmp.ne.s32.totalorder %s115, %s116
    %p128 = scmp.eq.s32.totalorder %s17, 3
    %p129 = por %p127, %p128
    %p131 = scmp.ne.s32.totalorder %s116, %s130
    %p132 = scmp.eq.s32.totalorder %s17, 0
    %p133 = por %p131, %p132
    %s134 = ssub.s32 %s11, %s18
    %p135 = scmp.eq.s32.totalorder %s134, 0
    %s137 = sadd.s32 %s136, 1
    %s138 = scalar_select %p135, %s136, %s137
    %p141 = pneg %p135
    %p142 = scmp.eq.s32.totalorder %s11, 3
    %p143 = por %p141, %p142
    %p144 = scmp.ne.s32.totalorder %s136, %s139
    %p145 = scmp.eq.s32.totalorder %s11, 0
    %p146 = por %p144, %p145
    %p147 = scmp.ne.s32.totalorder %s136, %s139
    %p148 = scmp.eq.s32.totalorder %s16, 3
    %p149 = por %p147, %p148
    %p150 = scmp.ne.s32.totalorder %s139, %s140
    %p151 = scmp.eq.s32.totalorder %s16, 0
    %p152 = por %p150, %p151
    %p153 = scmp.ne.s32.totalorder %s139, %s140
    %p154 = scmp.eq.s32.totalorder %s17, 3
    %p155 = por %p153, %p154
    %p157 = scmp.ne.s32.totalorder %s140, %s156
    %p158 = scmp.eq.s32.totalorder %s17, 0
    %p159 = por %p157, %p158
    %p160 = scmp.le.s32.totalorder 1, %s11
    %p161 = scmp.lt.s32.totalorder %s11, 5
    %p162 = pnand %p160, %p161
    %p163 = pneg %p162
    // Predicated region
    $region9: #{model_forward.2} parent=5 // pred_check
      _
    $region10: #{model_forward.2} parent=5 // pred_check_branch
      %165 = sbr.rel (%p162) target = $region12
    $region11: #{model_forward.2} parent=5 // pred_region
      %s166 = ssub.s32 %s11, 1
      // Predicated region
      $region13: #{model_forward.2} parent=11 // pred_check
        %p167 = pneg %p84
      $region14: #{model_forward.2} parent=11 // pred_check_branch
        %169 = sbr.rel (%p167) target = $region16
      $region15: #{model_forward.2} parent=11 // pred_region
        _
      $region16: #{model_forward.2} parent=11 // pred_fallthru
        _
      // Predicated region
      $region17: #{model_forward.2} parent=11 // pred_check
        %p170 = pneg %p105
      $region18: #{model_forward.2} parent=11 // pred_check_branch
        %172 = sbr.rel (%p170) target = $region20
      $region19: #{model_forward.2} parent=11 // pred_region
        _
      $region20: #{model_forward.2} parent=11 // pred_fallthru
        _
      // Predicated region
      $region21: #{model_forward.2} parent=11 // pred_check
        %p173 = pneg %p126
      $region22: #{model_forward.2} parent=11 // pred_check_branch
        %175 = sbr.rel (%p173) target = $region24
      $region23: #{model_forward.2} parent=11 // pred_region
        _
      $region24: #{model_forward.2} parent=11 // pred_fallthru
        _
    $region12: #{model_forward.2} parent=5 // pred_fallthru
      _
    %p176 = scmp.lt.s32.totalorder %s11, 4
    // Predicated region
    $region25: #{model_forward.2} parent=5 // pred_check
      %p177 = pneg %p176
    $region26: #{model_forward.2} parent=5 // pred_check_branch
      %179 = sbr.rel (%p177) target = $region28
    $region27: #{model_forward.2} parent=5 // pred_region
      // Predicated region
      $region29: #{model_forward.2} parent=27 // pred_check
        %p180 = pneg %p31
      $region30: #{model_forward.2} parent=27 // pred_check_branch
        %182 = sbr.rel (%p180) target = $region32
      $region31: #{model_forward.2} parent=27 // pred_region
        %p183 = scmp.lt.s32.totalorder %s11, 3
        %s184 = scalar_select %p183, %s11, 3
        %s185 = smul.addr %s184, 64
        %s186 = smul.addr %s185, 4
        %s187 = scalar_lea.vmem %s0, %s186
      $region32: #{model_forward.2} parent=27 // pred_fallthru
        _
      // Predicated region
      $region33: #{model_forward.2} parent=27 // pred_check
        %p188 = pneg %p57
      $region34: #{model_forward.2} parent=27 // pred_check_branch
        %190 = sbr.rel (%p188) target = $region36
      $region35: #{model_forward.2} parent=27 // pred_region
        %p191 = scmp.lt.s32.totalorder %s11, 3
        %s192 = scalar_select %p191, %s11, 3
        %s193 = smul.addr %s192, 64
        %s194 = smul.addr %s193, 4
        %s195 = scalar_lea.vmem %s1, %s194
      $region36: #{model_forward.2} parent=27 // pred_fallthru
        _
    $region28: #{model_forward.2} parent=5 // pred_fallthru
      _
    %p196 = scmp.le.s32.totalorder 1, %s11
    %p197 = scmp.lt.s32.totalorder %s11, 5
    %p198 = pnand %p196, %p197
    %p199 = pneg %p198
    // Predicated region
    $region37: #{model_forward.2} parent=5 // pred_check
      _
    $region38: #{model_forward.2} parent=5 // pred_check_branch
      %201 = sbr.rel (%p198) target = $region40
    $region39: #{model_forward.2} parent=5 // pred_region
      %s202 = ssub.s32 %s11, 1
      %p203 = scmp.lt.s32.totalorder %s16, 3
      %s204 = scalar_select %p203, %s16, 3
      %s205 = smul.addr %s204, 64
      %s206 = smul.addr %s205, 4
      %s207 = scalar_lea.vmem %s0, %s206
      %p208 = pneg %p37
      %p209 = pneg %p34
      %p210 = scmp.lt.s32.totalorder %s16, 3
      %s211 = scalar_select %p210, %s16, 3
      %s212 = smul.addr %s211, 64
      %s213 = smul.addr %s212, 4
      %s214 = scalar_lea.vmem %s1, %s213
      %p215 = pneg %p63
      %p216 = pneg %p60
      %p217 = pneg %p84
      %p218 = pneg %p81
      %p219 = pneg %p105
      %p220 = pneg %p102
      %p221 = pneg %p126
      %p222 = pneg %p123
      %p223 = pneg %p152
      %p224 = pneg %p149
      %p225 = scmp.lt.s32.totalorder %s16, 3
      %s226 = scalar_select %p225, %s16, 3
      %s227 = smul.addr %s226, 4
      %s228 = smul.addr %s227, 2
      %s229 = scalar_lea.vmem %s5, %s228
      %p230 = scmp.lt.s32.totalorder %s16, 3
      %s231 = scalar_select %p230, %s16, 3
      %s232 = smul.addr %s231, 64
      %s233 = smul.addr %s232, 4
      %s234 = scalar_lea.vmem %s0, %s233
      %p235 = scmp.lt.s32.totalorder %s16, 3
      %s236 = scalar_select %p235, %s16, 3
      %s237 = smul.addr %s236, 64
      %s238 = smul.addr %s237, 4
      %s239 = scalar_lea.vmem %s1, %s238
      %p240 = scmp.lt.s32.totalorder %s16, 3
      %s241 = scalar_select %p240, %s16, 3
      %s242 = smul.addr %s241, 4
      %s243 = smul.addr %s242, 2
      %s244 = scalar_lea.vmem %s5, %s243
      %vm246 = vcmask 519168
      %247 = vst.msk [vmem:[#allocation2] sm:$0xf] %vm246, 0
      %248 = vst.msk [vmem:[#allocation2 + $0x4] sm:$0xf] %vm246, 0
      %vm249 = vcmask 516096
      %250 = vst.msk [vmem:[#allocation2 + $0x8] sm:$0x1] %vm249, 0
      %s251 = scalar_lea.vmem [#allocation2], 204
      %252 = vst.msk [vmem:[%s251] sm:$0xf] %vm246, 0
      %253 = vst.msk [vmem:[%s251 + $0x4] sm:$0xf] %vm246, 0
      %254 = vst.msk [vmem:[%s251 + $0x8] sm:$0x1] %vm249, 0
      %vm255 = vcmask 516096
      %vm256 = vsmask.f32 256
      %vm257 = vmand %vm255, %vm256
      %v258 = vld [vmem:[#allocation2] sm:$0x1]
      %v259 = vsel %vm257, 0, %v258
      %260 = vst [vmem:[#allocation2] sm:$0x1] %v259
      %v261 = vld [vmem:[#allocation2 + $0xc] sm:$0x1]
      %v262 = vsel %vm257, 0, %v261
      %263 = vst [vmem:[#allocation2 + $0xc] sm:$0x1] %v262
      %v264 = vld [vmem:[#allocation2 + $0x18] sm:$0x1]
      %v265 = vsel %vm257, 0, %v264
      %266 = vst [vmem:[#allocation2 + $0x18] sm:$0x1] %v265
      %v267 = vld [vmem:[#allocation2 + $0x24] sm:$0x1]
      %v268 = vsel %vm257, 0, %v267
      %269 = vst [vmem:[#allocation2 + $0x24] sm:$0x1] %v268
      %v270 = vld [vmem:[#allocation2 + $0x30] sm:$0x1]
      %v271 = vsel %vm257, 0, %v270
      %272 = vst [vmem:[#allocation2 + $0x30] sm:$0x1] %v271
      %v273 = vld [vmem:[#allocation2 + $0x3c] sm:$0x1]
      %v274 = vsel %vm257, 0, %v273
      %275 = vst [vmem:[#allocation2 + $0x3c] sm:$0x1] %v274
      %v276 = vld [vmem:[#allocation2 + $0x48] sm:$0x1]
      %v277 = vsel %vm257, 0, %v276
      %278 = vst [vmem:[#allocation2 + $0x48] sm:$0x1] %v277
      %v279 = vld [vmem:[#allocation2 + $0x54] sm:$0x1]
      %v280 = vsel %vm257, 0, %v279
      %281 = vst [vmem:[#allocation2 + $0x54] sm:$0x1] %v280
      %v282 = vld [vmem:[#allocation2 + $0x60] sm:$0x1]
      %v283 = vsel %vm257, 0, %v282
      %284 = vst [vmem:[#allocation2 + $0x60] sm:$0x1] %v283
      %v285 = vld [vmem:[#allocation2 + $0x6c] sm:$0x1]
      %v286 = vsel %vm257, 0, %v285
      %287 = vst [vmem:[#allocation2 + $0x6c] sm:$0x1] %v286
      %v288 = vld [vmem:[#allocation2 + $0x78] sm:$0x1]
      %v289 = vsel %vm257, 0, %v288
      %290 = vst [vmem:[#allocation2 + $0x78] sm:$0x1] %v289
      %v291 = vld [vmem:[#allocation2 + $0x84] sm:$0x1]
      %v292 = vsel %vm257, 0, %v291
      %293 = vst [vmem:[#allocation2 + $0x84] sm:$0x1] %v292
      %v294 = vld [vmem:[#allocation2 + $0x90] sm:$0x1]
      %v295 = vsel %vm257, 0, %v294
      %296 = vst [vmem:[#allocation2 + $0x90] sm:$0x1] %v295
      %v297 = vld [vmem:[#allocation2 + $0x9c] sm:$0x1]
      %v298 = vsel %vm257, 0, %v297
      %299 = vst [vmem:[#allocation2 + $0x9c] sm:$0x1] %v298
      %v300 = vld [vmem:[#allocation2 + $0xa8] sm:$0x1]
      %v301 = vsel %vm257, 0, %v300
      %302 = vst [vmem:[#allocation2 + $0xa8] sm:$0x1] %v301
      %v303 = vld [vmem:[#allocation2 + $0xb4] sm:$0x1]
      %v304 = vsel %vm257, 0, %v303
      %305 = vst [vmem:[#allocation2 + $0xb4] sm:$0x1] %v304
      %v306 = vld [vmem:[#allocation2 + $0xc0] sm:$0x1]
      %v307 = vsel %vm257, 0, %v306
      %308 = vst [vmem:[#allocation2 + $0xc0] sm:$0x1] %v307
      %v309 = vld [vmem:[#allocation2 + $0xcc] sm:$0x1]
      %v310 = vsel %vm257, 0, %v309
      %311 = vst [vmem:[#allocation2 + $0xcc] sm:$0x1] %v310
      %vm312 = vsmask.f32 7938
      %vm313 = vmand %vm255, %vm312
      %v314 = vld [vmem:[#allocation2 + $0x8] sm:$0x1]
      %v315 = vsel %vm313, 0, %v314
      %316 = vst [vmem:[#allocation2 + $0x8] sm:$0x1] %v315
      %v317 = vld [vmem:[#allocation2 + $0x14] sm:$0x1]
      %v318 = vsel %vm313, 0, %v317
      %319 = vst [vmem:[#allocation2 + $0x14] sm:$0x1] %v318
      %v320 = vld [vmem:[#allocation2 + $0x20] sm:$0x1]
      %v321 = vsel %vm313, 0, %v320
      %322 = vst [vmem:[#allocation2 + $0x20] sm:$0x1] %v321
      %v323 = vld [vmem:[#allocation2 + $0x2c] sm:$0x1]
      %v324 = vsel %vm313, 0, %v323
      %325 = vst [vmem:[#allocation2 + $0x2c] sm:$0x1] %v324
      %v326 = vld [vmem:[#allocation2 + $0x38] sm:$0x1]
      %v327 = vsel %vm313, 0, %v326
      %328 = vst [vmem:[#allocation2 + $0x38] sm:$0x1] %v327
      %v329 = vld [vmem:[#allocation2 + $0x44] sm:$0x1]
      %v330 = vsel %vm313, 0, %v329
      %331 = vst [vmem:[#allocation2 + $0x44] sm:$0x1] %v330
      %v332 = vld [vmem:[#allocation2 + $0x50] sm:$0x1]
      %v333 = vsel %vm313, 0, %v332
      %334 = vst [vmem:[#allocation2 + $0x50] sm:$0x1] %v333
      %v335 = vld [vmem:[#allocation2 + $0x5c] sm:$0x1]
      %v336 = vsel %vm313, 0, %v335
      %337 = vst [vmem:[#allocation2 + $0x5c] sm:$0x1] %v336
      %v338 = vld [vmem:[#allocation2 + $0x68] sm:$0x1]
      %v339 = vsel %vm313, 0, %v338
      %340 = vst [vmem:[#allocation2 + $0x68] sm:$0x1] %v339
      %v341 = vld [vmem:[#allocation2 + $0x74] sm:$0x1]
      %v342 = vsel %vm313, 0, %v341
      %343 = vst [vmem:[#allocation2 + $0x74] sm:$0x1] %v342
      %v344 = vld [vmem:[#allocation2 + $0x80] sm:$0x1]
      %v345 = vsel %vm313, 0, %v344
      %346 = vst [vmem:[#allocation2 + $0x80] sm:$0x1] %v345
      %v347 = vld [vmem:[#allocation2 + $0x8c] sm:$0x1]
      %v348 = vsel %vm313, 0, %v347
      %349 = vst [vmem:[#allocation2 + $0x8c] sm:$0x1] %v348
      %v350 = vld [vmem:[#allocation2 + $0x98] sm:$0x1]
      %v351 = vsel %vm313, 0, %v350
      %352 = vst [vmem:[#allocation2 + $0x98] sm:$0x1] %v351
      %v353 = vld [vmem:[#allocation2 + $0xa4] sm:$0x1]
      %v354 = vsel %vm313, 0, %v353
      %355 = vst [vmem:[#allocation2 + $0xa4] sm:$0x1] %v354
      %v356 = vld [vmem:[#allocation2 + $0xb0] sm:$0x1]
      %v357 = vsel %vm313, 0, %v356
      %358 = vst [vmem:[#allocation2 + $0xb0] sm:$0x1] %v357
      %v359 = vld [vmem:[#allocation2 + $0xbc] sm:$0x1]
      %v360 = vsel %vm313, 0, %v359
      %361 = vst [vmem:[#allocation2 + $0xbc] sm:$0x1] %v360
      %v362 = vld [vmem:[#allocation2 + $0xc8] sm:$0x1]
      %v363 = vsel %vm313, 0, %v362
      %364 = vst [vmem:[#allocation2 + $0xc8] sm:$0x1] %v363
      %v365 = vld [vmem:[#allocation2 + $0xd4] sm:$0x1]
      %v366 = vsel %vm313, 0, %v365
      %367 = vst [vmem:[#allocation2 + $0xd4] sm:$0x1] %v366
      %vm368 = vcmask 261120
      %369 = vst.msk [vmem:[#allocation3] sm:$0xff] %vm368, 0.0
      %vm370 = vcmask 254976
      %371 = vst.msk [vmem:[#allocation3 + $0x8] sm:$0x3] %vm370, 0.0
      %s372 = scalar_lea.vmem [#allocation3], 144
      %373 = vst.msk [vmem:[%s372] sm:$0xff] %vm368, 0.0
      %374 = vst.msk [vmem:[%s372 + $0x8] sm:$0x3] %vm370, 0.0
      %vm375 = vcmask 253952
      %376 = vst.msk [vmem:[#allocation3] sm:$0x1] %vm375, 0.0
      %377 = vst.msk [vmem:[#allocation3 + $0x10] sm:$0x1] %vm375, 0.0
      %378 = vst.msk [vmem:[#allocation3 + $0x20] sm:$0x1] %vm375, 0.0
      %379 = vst.msk [vmem:[#allocation3 + $0x30] sm:$0x1] %vm375, 0.0
      %380 = vst.msk [vmem:[#allocation3 + $0x40] sm:$0x1] %vm375, 0.0
      %381 = vst.msk [vmem:[#allocation3 + $0x50] sm:$0x1] %vm375, 0.0
      %382 = vst.msk [vmem:[#allocation3 + $0x60] sm:$0x1] %vm375, 0.0
      %383 = vst.msk [vmem:[#allocation3 + $0x70] sm:$0x1] %vm375, 0.0
      %384 = vst.msk [vmem:[#allocation3 + $0x80] sm:$0x1] %vm375, 0.0
      %385 = vst.msk [vmem:[#allocation3 + $0x90] sm:$0x1] %vm375, 0.0
      %386 = vst.msk [vmem:[#allocation3 + $0x9] sm:$0x1] %vm375, 0.0
      %387 = vst.msk [vmem:[#allocation3 + $0x19] sm:$0x1] %vm375, 0.0
      %388 = vst.msk [vmem:[#allocation3 + $0x29] sm:$0x1] %vm375, 0.0
      %389 = vst.msk [vmem:[#allocation3 + $0x39] sm:$0x1] %vm375, 0.0
      %390 = vst.msk [vmem:[#allocation3 + $0x49] sm:$0x1] %vm375, 0.0
      %391 = vst.msk [vmem:[#allocation3 + $0x59] sm:$0x1] %vm375, 0.0
      %392 = vst.msk [vmem:[#allocation3 + $0x69] sm:$0x1] %vm375, 0.0
      %393 = vst.msk [vmem:[#allocation3 + $0x79] sm:$0x1] %vm375, 0.0
      %394 = vst.msk [vmem:[#allocation3 + $0x89] sm:$0x1] %vm375, 0.0
      %395 = vst.msk [vmem:[#allocation3 + $0x99] sm:$0x1] %vm375, 0.0
      loop: start=0, step=1, limit=4
      $region41: #{model_forward.2} parent=39 // loop_pre_header
        _
      $region42: #{model_forward.2} parent=39 // loop_header
        %s397 = sphi 0, %s401
        %p398 = scmp.ge.s32.totalorder %s397, 4
      $region43: #{model_forward.2} parent=39 // loop_header_branch
        %400 = sbr.rel (%p398) target = $region47
      $region44: #{model_forward.2} parent=39 // loop_body
        %s402 = smul.u32 %s397, 8
        %s403 = smul.u32 %s402, 2
        %s404 = smul.addr %s403, 4
        %s405 = scalar_lea.vmem %s234, %s404
        %v406 = vld [vmem:[%s405] sm:$0xf]
        %v407 = vld [vmem:[%s405 + $0x4] sm:$0xf]
        %v408 = vld [vmem:[%s405 + $0x8] sm:$0xf]
        %v409 = vld [vmem:[%s405 + $0xc] sm:$0xf]
        %v410 = vld [vmem:[%s405 + $0x10] sm:$0xf]
        %v411 = vld [vmem:[%s405 + $0x14] sm:$0xf]
        %v412 = vld [vmem:[%s405 + $0x18] sm:$0xf]
        %v413 = vld [vmem:[%s405 + $0x1c] sm:$0xf]
        %v414 = vld [vmem:[%s405 + $0x20] sm:$0xf]
        %v415 = vld [vmem:[%s405 + $0x24] sm:$0xf]
        %v416 = vld [vmem:[%s405 + $0x28] sm:$0xf]
        %v417 = vld [vmem:[%s405 + $0x2c] sm:$0xf]
        %v418 = vld [vmem:[%s405 + $0x30] sm:$0xf]
        %v419 = vld [vmem:[%s405 + $0x34] sm:$0xf]
        %v420 = vld [vmem:[%s405 + $0x38] sm:$0xf]
        %v421 = vld [vmem:[%s405 + $0x3c] sm:$0xf]
        %v422 = vld [vmem:[%s2] sm:$0xf]
        %v423 = vld [vmem:[%s2 + $0x4] sm:$0xf]
        %v424 = vld [vmem:[%s2 + $0x8] sm:$0xf]
        %v425 = vld [vmem:[%s2 + $0xc] sm:$0x1]
        %v442 = vunpack.c.l.b16 %v406
        %v443 = vunpack.c.l.b16 %v407
        %v444 = vunpack.c.l.b16 %v408
        %v445 = vunpack.c.l.b16 %v409
        %v446 = vunpack.c.l.b16 %v410
        %v447 = vunpack.c.l.b16 %v411
        %v448 = vunpack.c.l.b16 %v412
        %v449 = vunpack.c.l.b16 %v413
        %v450 = vunpack.c.l.b16 %v414
        %v451 = vunpack.c.l.b16 %v415
        %v452 = vunpack.c.l.b16 %v416
        %v453 = vunpack.c.l.b16 %v417
        %v454 = vunpack.c.l.b16 %v418
        %v455 = vunpack.c.l.b16 %v419
        %v456 = vunpack.c.l.b16 %v420
        %v457 = vunpack.c.l.b16 %v421
        %v458 = vpack.c.b16 %v443, %v442
        %v459 = vpack.c.b16 %v445, %v444
        %v460 = vpack.c.b16 %v447, %v446
        %v461 = vpack.c.b16 %v449, %v448
        %v462 = vpack.c.b16 %v451, %v450
        %v463 = vpack.c.b16 %v453, %v452
        %v464 = vpack.c.b16 %v455, %v454
        %v465 = vpack.c.b16 %v457, %v456
        %v470 = vunpack.c.l.b16 %v422
        %v471 = vunpack.c.l.b16 %v423
        %v472 = vunpack.c.l.b16 %v424
        %v473 = vunpack.c.l.b16 %v425
        %v474 = vpack.c.b16 %v471, %v470
        %v475 = vpack.c.b16 %v473, %v472
        %vm477 = vcmask 203776
        %v479 = vsel %vm477, %v458, 0
        %v482 = vsel %vm477, %v459, 0
        %v485 = vsel %vm477, %v460, 0
        %v488 = vsel %vm477, %v461, 0
        %v491 = vsel %vm477, %v462, 0
        %v494 = vsel %vm477, %v463, 0
        %v497 = vsel %vm477, %v464, 0
        %v500 = vsel %vm477, %v465, 0
        %vm502 = vcmask 1043456
        %vm503 = vcmask 1044480
        %v504 = vsel %vm502, 4294967295, 65535
        %v505 = vsel %vm503, %v504, 0
        %v507 = vand.u32 %v475, %v505
        %509 = vmatprep.subr.bf16.mxu0 0
        %510 = vmatpush1.bf16.msra.mxu0 0
        %511 = vmatprep.subr.bf16.mxu0 0
        %512 = vmatpush1.bf16.msra.mxu0 0
        %513 = vmatprep.subr.bf16.mxu0 0
        %514 = vmatpush1.bf16.msra.mxu0 0
        %515 = vmatprep.subr.bf16.mxu0 0
        %516 = vmatpush1.bf16.msra.mxu0 0
        %517 = vmatprep.subr.bf16.mxu0 0
        %518 = vmatpush1.bf16.msra.mxu0 0
        %519 = vmatprep.subr.bf16.mxu0 0
        %520 = vmatpush1.bf16.msra.mxu0 0
        %521 = vmatprep.subr.bf16.mxu0 0
        %522 = vmatpush1.bf16.msra.mxu0 %v507
        %523 = vmatprep.subr.bf16.mxu0 0
        %524 = vmatpush1.bf16.msra.mxu0 %v474
        %525 = vmatprep.subr.bf16.mxu0 0
        %526 = vmatpush2.bf16.msra.mxu0 0
        %527 = vmatprep.subr.bf16.mxu0 0
        %528 = vmatpush2.bf16.msra.mxu0 0
        %529 = vmatprep.subr.bf16.mxu0 0
        %530 = vmatpush2.bf16.msra.mxu0 0
        %531 = vmatprep.subr.bf16.mxu0 0
        %532 = vmatpush2.bf16.msra.mxu0 0
        %533 = vmatprep.subr.bf16.mxu0 0
        %534 = vmatpush2.bf16.msra.mxu0 0
        %535 = vmatprep.subr.bf16.mxu0 0
        %536 = vmatpush2.bf16.msra.mxu0 0
        %537 = vmatprep.subr.bf16.mxu0 0
        %538 = vmatpush2.bf16.msra.mxu0 0
        %539 = vmatprep.subr.bf16.mxu0 0
        %540 = vmatpush2.bf16.msra.mxu0 0
        %541 = vmatprep.mubr.bf16.mxu0 0
        %542 = vmatmul.mubr.bf16.gmra.mxu0 %v479
        %v543 = vpop.f32.mrf.mxu0
        %v544 = vadd.f32 0.0, %v543
        %v545 = vpop.f32.mrf.mxu0
        %v546 = vpop.f32.mrf.mxu0
        %v547 = vadd.f32 0.0, %v546
        %v548 = vpop.f32.mrf.mxu0
        %549 = vmatprep.mubr.bf16.mxu0 0
        %550 = vmatmul.mubr.bf16.gmra.mxu0 %v482
        %v551 = vpop.f32.mrf.mxu0
        %v552 = vadd.f32 0.0, %v551
        %v553 = vpop.f32.mrf.mxu0
        %v554 = vpop.f32.mrf.mxu0
        %v555 = vadd.f32 0.0, %v554
        %v556 = vpop.f32.mrf.mxu0
        %557 = vmatprep.mubr.bf16.mxu0 0
        %558 = vmatmul.mubr.bf16.gmra.mxu0 %v485
        %v559 = vpop.f32.mrf.mxu0
        %v560 = vadd.f32 0.0, %v559
        %v561 = vpop.f32.mrf.mxu0
        %v562 = vpop.f32.mrf.mxu0
        %v563 = vadd.f32 0.0, %v562
        %v564 = vpop.f32.mrf.mxu0
        %565 = vmatprep.mubr.bf16.mxu0 0
        %566 = vmatmul.mubr.bf16.gmra.mxu0 %v488
        %v567 = vpop.f32.mrf.mxu0
        %v568 = vadd.f32 0.0, %v567
        %v569 = vpop.f32.mrf.mxu0
        %v570 = vpop.f32.mrf.mxu0
        %v571 = vadd.f32 0.0, %v570
        %v572 = vpop.f32.mrf.mxu0
        %573 = vmatprep.mubr.bf16.mxu0 0
        %574 = vmatmul.mubr.bf16.gmra.mxu0 %v491
        %v575 = vpop.f32.mrf.mxu0
        %v576 = vadd.f32 0.0, %v575
        %v577 = vpop.f32.mrf.mxu0
        %v578 = vpop.f32.mrf.mxu0
        %v579 = vadd.f32 0.0, %v578
        %v580 = vpop.f32.mrf.mxu0
        %581 = vmatprep.mubr.bf16.mxu0 0
        %582 = vmatmul.mubr.bf16.gmra.mxu0 %v494
        %v583 = vpop.f32.mrf.mxu0
        %v584 = vadd.f32 0.0, %v583
        %v585 = vpop.f32.mrf.mxu0
        %v586 = vpop.f32.mrf.mxu0
        %v587 = vadd.f32 0.0, %v586
        %v588 = vpop.f32.mrf.mxu0
        %589 = vmatprep.mubr.bf16.mxu0 0
        %590 = vmatmul.mubr.bf16.gmra.mxu0 %v497
        %v591 = vpop.f32.mrf.mxu0
        %v592 = vadd.f32 0.0, %v591
        %v593 = vpop.f32.mrf.mxu0
        %v594 = vpop.f32.mrf.mxu0
        %v595 = vadd.f32 0.0, %v594
        %v596 = vpop.f32.mrf.mxu0
        %597 = vmatprep.mubr.bf16.mxu0 0
        %598 = vmatmul.mubr.bf16.gmra.mxu0 %v500
        %v599 = vpop.f32.mrf.mxu0
        %v600 = vadd.f32 0.0, %v599
        %v601 = vpop.f32.mrf.mxu0
        %v602 = vpop.f32.mrf.mxu0
        %v603 = vadd.f32 0.0, %v602
        %v604 = vpop.f32.mrf.mxu0
        %605 = vdwg.mxu0
        %s606 = smul.addr %s403, 4
        %s607 = scalar_lea.vmem %s239, %s606
        %v608 = vld [vmem:[%s607] sm:$0xf]
        %v609 = vld [vmem:[%s607 + $0x4] sm:$0xf]
        %v610 = vld [vmem:[%s607 + $0x8] sm:$0xf]
        %v611 = vld [vmem:[%s607 + $0xc] sm:$0xf]
        %v612 = vld [vmem:[%s607 + $0x10] sm:$0xf]
        %v613 = vld [vmem:[%s607 + $0x14] sm:$0xf]
        %v614 = vld [vmem:[%s607 + $0x18] sm:$0xf]
        %v615 = vld [vmem:[%s607 + $0x1c] sm:$0xf]
        %v616 = vld [vmem:[%s607 + $0x20] sm:$0xf]
        %v617 = vld [vmem:[%s607 + $0x24] sm:$0xf]
        %v618 = vld [vmem:[%s607 + $0x28] sm:$0xf]
        %v619 = vld [vmem:[%s607 + $0x2c] sm:$0xf]
        %v620 = vld [vmem:[%s607 + $0x30] sm:$0xf]
        %v621 = vld [vmem:[%s607 + $0x34] sm:$0xf]
        %v622 = vld [vmem:[%s607 + $0x38] sm:$0xf]
        %v623 = vld [vmem:[%s607 + $0x3c] sm:$0xf]
        %v640 = vunpack.c.l.b16 %v608
        %v641 = vunpack.c.l.b16 %v609
        %v642 = vunpack.c.l.b16 %v610
        %v643 = vunpack.c.l.b16 %v611
        %v644 = vunpack.c.l.b16 %v612
        %v645 = vunpack.c.l.b16 %v613
        %v646 = vunpack.c.l.b16 %v614
        %v647 = vunpack.c.l.b16 %v615
        %v648 = vunpack.c.l.b16 %v616
        %v649 = vunpack.c.l.b16 %v617
        %v650 = vunpack.c.l.b16 %v618
        %v651 = vunpack.c.l.b16 %v619
        %v652 = vunpack.c.l.b16 %v620
        %v653 = vunpack.c.l.b16 %v621
        %v654 = vunpack.c.l.b16 %v622
        %v655 = vunpack.c.l.b16 %v623
        %v656 = vpack.c.b16 %v641, %v640
        %v657 = vpack.c.b16 %v643, %v642
        %v658 = vpack.c.b16 %v645, %v644
        %v659 = vpack.c.b16 %v647, %v646
        %v660 = vpack.c.b16 %v649, %v648
        %v661 = vpack.c.b16 %v651, %v650
        %v662 = vpack.c.b16 %v653, %v652
        %v663 = vpack.c.b16 %v655, %v654
        %v665 = vsel %vm477, %v656, 0
        %v668 = vsel %vm477, %v657, 0
        %v671 = vsel %vm477, %v658, 0
        %v674 = vsel %vm477, %v659, 0
        %v677 = vsel %vm477, %v660, 0
        %v680 = vsel %vm477, %v661, 0
        %v683 = vsel %vm477, %v662, 0
        %v686 = vsel %vm477, %v663, 0
        %688 = vmatprep.subr.bf16.mxu0 0
        %689 = vmatpush1.bf16.msra.mxu0 0
        %690 = vmatprep.subr.bf16.mxu0 0
        %691 = vmatpush1.bf16.msra.mxu0 0
        %692 = vmatprep.subr.bf16.mxu0 0
        %693 = vmatpush1.bf16.msra.mxu0 0
        %694 = vmatprep.subr.bf16.mxu0 0
        %695 = vmatpush1.bf16.msra.mxu0 0
        %696 = vmatprep.subr.bf16.mxu0 0
        %697 = vmatpush1.bf16.msra.mxu0 0
        %698 = vmatprep.subr.bf16.mxu0 0
        %699 = vmatpush1.bf16.msra.mxu0 0
        %700 = vmatprep.subr.bf16.mxu0 0
        %701 = vmatpush1.bf16.msra.mxu0 %v507
        %702 = vmatprep.subr.bf16.mxu0 0
        %703 = vmatpush1.bf16.msra.mxu0 %v474
        %704 = vmatprep.subr.bf16.mxu0 0
        %705 = vmatpush2.bf16.msra.mxu0 0
        %706 = vmatprep.subr.bf16.mxu0 0
        %707 = vmatpush2.bf16.msra.mxu0 0
        %708 = vmatprep.subr.bf16.mxu0 0
        %709 = vmatpush2.bf16.msra.mxu0 0
        %710 = vmatprep.subr.bf16.mxu0 0
        %711 = vmatpush2.bf16.msra.mxu0 0
        %712 = vmatprep.subr.bf16.mxu0 0
        %713 = vmatpush2.bf16.msra.mxu0 0
        %714 = vmatprep.subr.bf16.mxu0 0
        %715 = vmatpush2.bf16.msra.mxu0 0
        %716 = vmatprep.subr.bf16.mxu0 0
        %717 = vmatpush2.bf16.msra.mxu0 0
        %718 = vmatprep.subr.bf16.mxu0 0
        %719 = vmatpush2.bf16.msra.mxu0 0
        %720 = vmatprep.mubr.bf16.mxu0 0
        %721 = vmatmul.mubr.bf16.gmra.mxu0 %v665
        %v722 = vpop.f32.mrf.mxu0
        %v723 = vadd.f32 0.0, %v722
        %v724 = vpop.f32.mrf.mxu0
        %v725 = vpop.f32.mrf.mxu0
        %v726 = vadd.f32 0.0, %v725
        %v727 = vpop.f32.mrf.mxu0
        %728 = vmatprep.mubr.bf16.mxu0 0
        %729 = vmatmul.mubr.bf16.gmra.mxu0 %v668
        %v730 = vpop.f32.mrf.mxu0
        %v731 = vadd.f32 0.0, %v730
        %v732 = vpop.f32.mrf.mxu0
        %v733 = vpop.f32.mrf.mxu0
        %v734 = vadd.f32 0.0, %v733
        %v735 = vpop.f32.mrf.mxu0
        %736 = vmatprep.mubr.bf16.mxu0 0
        %737 = vmatmul.mubr.bf16.gmra.mxu0 %v671
        %v738 = vpop.f32.mrf.mxu0
        %v739 = vadd.f32 0.0, %v738
        %v740 = vpop.f32.mrf.mxu0
        %v741 = vpop.f32.mrf.mxu0
        %v742 = vadd.f32 0.0, %v741
        %v743 = vpop.f32.mrf.mxu0
        %744 = vmatprep.mubr.bf16.mxu0 0
        %745 = vmatmul.mubr.bf16.gmra.mxu0 %v674
        %v746 = vpop.f32.mrf.mxu0
        %v747 = vadd.f32 0.0, %v746
        %v748 = vpop.f32.mrf.mxu0
        %v749 = vpop.f32.mrf.mxu0
        %v750 = vadd.f32 0.0, %v749
        %v751 = vpop.f32.mrf.mxu0
        %752 = vmatprep.mubr.bf16.mxu0 0
        %753 = vmatmul.mubr.bf16.gmra.mxu0 %v677
        %v754 = vpop.f32.mrf.mxu0
        %v755 = vadd.f32 0.0, %v754
        %v756 = vpop.f32.mrf.mxu0
        %v757 = vpop.f32.mrf.mxu0
        %v758 = vadd.f32 0.0, %v757
        %v759 = vpop.f32.mrf.mxu0
        %760 = vmatprep.mubr.bf16.mxu0 0
        %761 = vmatmul.mubr.bf16.gmra.mxu0 %v680
        %v762 = vpop.f32.mrf.mxu0
        %v763 = vadd.f32 0.0, %v762
        %v764 = vpop.f32.mrf.mxu0
        %v765 = vpop.f32.mrf.mxu0
        %v766 = vadd.f32 0.0, %v765
        %v767 = vpop.f32.mrf.mxu0
        %768 = vmatprep.mubr.bf16.mxu0 0
        %769 = vmatmul.mubr.bf16.gmra.mxu0 %v683
        %v770 = vpop.f32.mrf.mxu0
        %v771 = vadd.f32 0.0, %v770
        %v772 = vpop.f32.mrf.mxu0
        %v773 = vpop.f32.mrf.mxu0
        %v774 = vadd.f32 0.0, %v773
        %v775 = vpop.f32.mrf.mxu0
        %776 = vmatprep.mubr.bf16.mxu0 0
        %777 = vmatmul.mubr.bf16.gmra.mxu0 %v686
        %v778 = vpop.f32.mrf.mxu0
        %v779 = vadd.f32 0.0, %v778
        %v780 = vpop.f32.mrf.mxu0
        %v781 = vpop.f32.mrf.mxu0
        %v782 = vadd.f32 0.0, %v781
        %v783 = vpop.f32.mrf.mxu0
        %784 = vdwg.mxu0
        %v785 = vmax.f32 %v544, %v723
        %v786 = vmax.f32 %v547, %v726
        %v787 = vmax.f32 %v552, %v731
        %v788 = vmax.f32 %v555, %v734
        %v789 = vmax.f32 %v560, %v739
        %v790 = vmax.f32 %v563, %v742
        %v791 = vmax.f32 %v568, %v747
        %v792 = vmax.f32 %v571, %v750
        %v793 = vmax.f32 %v576, %v755
        %v794 = vmax.f32 %v579, %v758
        %v795 = vmax.f32 %v584, %v763
        %v796 = vmax.f32 %v587, %v766
        %v797 = vmax.f32 %v592, %v771
        %v798 = vmax.f32 %v595, %v774
        %v799 = vmax.f32 %v600, %v779
        %v800 = vmax.f32 %v603, %v782
        %v801 = vmax.f32 %v785, %v787
        %v802 = vmax.f32 %v786, %v788
        %v803 = vmax.f32 %v789, %v791
        %v804 = vmax.f32 %v790, %v792
        %v805 = vmax.f32 %v793, %v795
        %v806 = vmax.f32 %v794, %v796
        %v807 = vmax.f32 %v797, %v799
        %v808 = vmax.f32 %v798, %v800
        %v809 = vpack.c.bf16 %v802, %v801
        %v810 = vpack.c.bf16 %v804, %v803
        %v811 = vpack.c.bf16 %v806, %v805
        %v812 = vpack.c.bf16 %v808, %v807
        %s813 = smul.u32 %s397, 4
        %s814 = sadd.s32 %s813, 1
        %v819 = vunpack.c.l.b16 %v809
        %v820 = vunpack.c.h.b16 %v809
        %v821 = vunpack.c.l.b16 %v810
        %v822 = vunpack.c.h.b16 %v810
        %v823 = vunpack.c.l.b16 %v811
        %v824 = vunpack.c.h.b16 %v811
        %v825 = vunpack.c.l.b16 %v812
        %v826 = vunpack.c.h.b16 %v812
        %v827 = vpack.c.b16 %v819, %v819
        %v828 = vpack.c.b16 %v820, %v820
        %v829 = vpack.c.b16 %v821, %v821
        %v830 = vpack.c.b16 %v822, %v822
        %v831 = vpack.c.b16 %v823, %v823
        %v832 = vpack.c.b16 %v824, %v824
        %v833 = vpack.c.b16 %v825, %v825
        %v834 = vpack.c.b16 %v826, %v826
        %vm835 = vsmask.f32 4368
        %vm836 = vmor %vm256, %vm835
        %v838 = vshrl.u32 %v827, 16
        %v840 = vrot.slane %v838, 7
        %v841 = vshll.u32 %v827, 16
        %v843 = vor.u32 %v840, %v841
        %v844 = vrot.slane %v840, 4
        %v846 = vshrl.u32 %v828, 16
        %v848 = vrot.slane %v846, 7
        %v849 = vshll.u32 %v828, 16
        %v851 = vor.u32 %v848, %v849
        %v852 = vsel %vm836, %v844, %v851
        %v853 = vrot.slane %v848, 4
        %v855 = vshrl.u32 %v829, 16
        %v857 = vrot.slane %v855, 7
        %v858 = vshll.u32 %v829, 16
        %v860 = vor.u32 %v857, %v858
        %v861 = vrot.slane %v857, 4
        %v863 = vshrl.u32 %v830, 16
        %v865 = vrot.slane %v863, 7
        %v866 = vshll.u32 %v830, 16
        %v868 = vor.u32 %v865, %v866
        %v869 = vsel %vm836, %v861, %v868
        %v870 = vrot.slane %v865, 4
        %v872 = vshrl.u32 %v831, 16
        %v874 = vrot.slane %v872, 7
        %v875 = vshll.u32 %v831, 16
        %v877 = vor.u32 %v874, %v875
        %v878 = vrot.slane %v874, 4
        %v880 = vshrl.u32 %v832, 16
        %v882 = vrot.slane %v880, 7
        %v883 = vshll.u32 %v832, 16
        %v885 = vor.u32 %v882, %v883
        %v886 = vsel %vm836, %v878, %v885
        %v887 = vrot.slane %v882, 4
        %v889 = vshrl.u32 %v833, 16
        %v891 = vrot.slane %v889, 7
        %v892 = vshll.u32 %v833, 16
        %v894 = vor.u32 %v891, %v892
        %v895 = vrot.slane %v891, 4
        %v897 = vshrl.u32 %v834, 16
        %v899 = vrot.slane %v897, 7
        %v900 = vshll.u32 %v834, 16
        %v902 = vor.u32 %v899, %v900
        %v903 = vsel %vm836, %v895, %v902
        %v904 = vrot.slane %v899, 4
        %s917 = smul.u32 %s814, 3
        %s918 = smul.addr %s917, 4
        %s919 = scalar_lea.vmem [#allocation2], %s918
        %vm920 = vcmask 519168
        %vm921 = vmand %vm920, %vm312
        %v922 = vld [vmem:[%s919] sm:$0xf]
        %v923 = vsel %vm921, %v843, %v922
        %924 = vst [vmem:[%s919] sm:$0xf] %v923
        %925 = vst.msk [vmem:[%s919 + $0x4] sm:$0xf] %vm246, %v852
        %v926 = vld [vmem:[%s919 + $0x8] sm:$0x1]
        %v927 = vsel %vm257, %v853, %v926
        %928 = vst [vmem:[%s919 + $0x8] sm:$0x1] %v927
        %v929 = vld [vmem:[%s919 + $0xc] sm:$0xf]
        %v930 = vsel %vm921, %v860, %v929
        %931 = vst [vmem:[%s919 + $0xc] sm:$0xf] %v930
        %932 = vst.msk [vmem:[%s919 + $0x10] sm:$0xf] %vm246, %v869
        %v933 = vld [vmem:[%s919 + $0x14] sm:$0x1]
        %v934 = vsel %vm257, %v870, %v933
        %935 = vst [vmem:[%s919 + $0x14] sm:$0x1] %v934
        %v936 = vld [vmem:[%s919 + $0x18] sm:$0xf]
        %v937 = vsel %vm921, %v877, %v936
        %938 = vst [vmem:[%s919 + $0x18] sm:$0xf] %v937
        %939 = vst.msk [vmem:[%s919 + $0x1c] sm:$0xf] %vm246, %v886
        %v940 = vld [vmem:[%s919 + $0x20] sm:$0x1]
        %v941 = vsel %vm257, %v887, %v940
        %942 = vst [vmem:[%s919 + $0x20] sm:$0x1] %v941
        %v943 = vld [vmem:[%s919 + $0x24] sm:$0xf]
        %v944 = vsel %vm921, %v894, %v943
        %945 = vst [vmem:[%s919 + $0x24] sm:$0xf] %v944
        %946 = vst.msk [vmem:[%s919 + $0x28] sm:$0xf] %vm246, %v903
        %v947 = vld [vmem:[%s919 + $0x2c] sm:$0x1]
        %v948 = vsel %vm257, %v904, %v947
        %949 = vst [vmem:[%s919 + $0x2c] sm:$0x1] %v948
      $region45: #{model_forward.2} parent=39 // loop_footer
        %s401 = sadd.s32 1, %s397
      $region46: #{model_forward.2} parent=39 // loop_footer_branch
        %396 = sbr.rel target = $region42
      $region47: #{model_forward.2} parent=39 // loop_exit
        _
      loop: start=0, step=1, limit=2
      $region48: #{model_forward.2} parent=39 // loop_pre_header
        _
      $region49: #{model_forward.2} parent=39 // loop_header
        %s951 = sphi 0, %s955
        %p952 = scmp.ge.s32.totalorder %s951, 2
      $region50: #{model_forward.2} parent=39 // loop_header_branch
        %954 = sbr.rel (%p952) target = $region54
      $region51: #{model_forward.2} parent=39 // loop_body
        %s956 = smul.u32 %s951, 8
        %s957 = smul.u32 %s956, 3
        %s958 = smul.addr %s957, 4
        %s959 = scalar_lea.vmem [#allocation2], %s958
        %v960 = vld [vmem:[%s959] sm:$0xf]
        %v961 = vld [vmem:[%s959 + $0x4] sm:$0xf]
        %v962 = vld [vmem:[%s959 + $0xc] sm:$0xf]
        %v963 = vld [vmem:[%s959 + $0x10] sm:$0xf]
        %v964 = vld [vmem:[%s959 + $0x18] sm:$0xf]
        %v965 = vld [vmem:[%s959 + $0x1c] sm:$0xf]
        %v966 = vld [vmem:[%s959 + $0x24] sm:$0xf]
        %v967 = vld [vmem:[%s959 + $0x28] sm:$0xf]
        %v968 = vld [vmem:[%s959 + $0x30] sm:$0xf]
        %v969 = vld [vmem:[%s959 + $0x34] sm:$0xf]
        %v970 = vld [vmem:[%s959 + $0x3c] sm:$0xf]
        %v971 = vld [vmem:[%s959 + $0x40] sm:$0xf]
        %v972 = vld [vmem:[%s959 + $0x48] sm:$0xf]
        %v973 = vld [vmem:[%s959 + $0x4c] sm:$0xf]
        %v974 = vld [vmem:[%s959 + $0x54] sm:$0xf]
        %v975 = vld [vmem:[%s959 + $0x58] sm:$0xf]
        %v976 = vld [vmem:[%s3] sm:$0xf]
        %v977 = vld [vmem:[%s3 + $0x4] sm:$0xf]
        %v978 = vld [vmem:[%s3 + $0x8] sm:$0xf]
        %v979 = vld [vmem:[%s3 + $0xc] sm:$0xf]
        %v980 = vld [vmem:[%s3 + $0x10] sm:$0xf]
        %v981 = vld [vmem:[%s3 + $0x14] sm:$0xf]
        %v982 = vld [vmem:[%s3 + $0x18] sm:$0xf]
        %v983 = vld [vmem:[%s3 + $0x1c] sm:$0xf]
        %v984 = vld [vmem:[%s959 + $0x8] sm:$0x1]
        %v985 = vld [vmem:[%s959 + $0x14] sm:$0x1]
        %v986 = vld [vmem:[%s959 + $0x20] sm:$0x1]
        %v987 = vld [vmem:[%s959 + $0x2c] sm:$0x1]
        %v988 = vld [vmem:[%s959 + $0x38] sm:$0x1]
        %v989 = vld [vmem:[%s959 + $0x44] sm:$0x1]
        %v990 = vld [vmem:[%s959 + $0x50] sm:$0x1]
        %v991 = vld [vmem:[%s959 + $0x5c] sm:$0x1]
        %vm992 = vsmask.f32 3328
        %vm993 = vsmask.f32 7440
        %vm994 = vmor %vm992, %vm993
        %v996 = vshrl.u32 %v960, 16
        %v998 = vrot.slane %v996, 4
        %v999 = vshll.u32 %v960, 16
        %v1001 = vrot.slane %v999, 5
        %v1002 = vor.u32 %v998, %v1001
        %v1003 = vrot.slane %v1002, 4
        %v1005 = vshll.u32 %v961, 16
        %v1007 = vrot.slane %v1005, 5
        %v1008 = vsel %vm994, %v1003, %v1007
        %v1009 = vshrl.u32 %v961, 16
        %v1011 = vrot.slane %v1009, 4
        %v1012 = vor.u32 %v1011, %v1007
        %v1013 = vrot.slane %v1012, 4
        %v1015 = vshll.u32 %v984, 16
        %v1017 = vrot.slane %v1015, 5
        %v1018 = vsel %vm994, %v1013, %v1017
        %v1020 = vshrl.u32 %v962, 16
        %v1022 = vrot.slane %v1020, 4
        %v1023 = vshll.u32 %v962, 16
        %v1025 = vrot.slane %v1023, 5
        %v1026 = vor.u32 %v1022, %v1025
        %v1027 = vrot.slane %v1026, 4
        %v1029 = vshll.u32 %v963, 16
        %v1031 = vrot.slane %v1029, 5
        %v1032 = vsel %vm994, %v1027, %v1031
        %v1033 = vshrl.u32 %v963, 16
        %v1035 = vrot.slane %v1033, 4
        %v1036 = vor.u32 %v1035, %v1031
        %v1037 = vrot.slane %v1036, 4
        %v1039 = vshll.u32 %v985, 16
        %v1041 = vrot.slane %v1039, 5
        %v1042 = vsel %vm994, %v1037, %v1041
        %v1044 = vshrl.u32 %v964, 16
        %v1046 = vrot.slane %v1044, 4
        %v1047 = vshll.u32 %v964, 16
        %v1049 = vrot.slane %v1047, 5
        %v1050 = vor.u32 %v1046, %v1049
        %v1051 = vrot.slane %v1050, 4
        %v1053 = vshll.u32 %v965, 16
        %v1055 = vrot.slane %v1053, 5
        %v1056 = vsel %vm994, %v1051, %v1055
        %v1057 = vshrl.u32 %v965, 16
        %v1059 = vrot.slane %v1057, 4
        %v1060 = vor.u32 %v1059, %v1055
        %v1061 = vrot.slane %v1060, 4
        %v1063 = vshll.u32 %v986, 16
        %v1065 = vrot.slane %v1063, 5
        %v1066 = vsel %vm994, %v1061, %v1065
        %v1068 = vshrl.u32 %v966, 16
        %v1070 = vrot.slane %v1068, 4
        %v1071 = vshll.u32 %v966, 16
        %v1073 = vrot.slane %v1071, 5
        %v1074 = vor.u32 %v1070, %v1073
        %v1075 = vrot.slane %v1074, 4
        %v1077 = vshll.u32 %v967, 16
        %v1079 = vrot.slane %v1077, 5
        %v1080 = vsel %vm994, %v1075, %v1079
        %v1081 = vshrl.u32 %v967, 16
        %v1083 = vrot.slane %v1081, 4
        %v1084 = vor.u32 %v1083, %v1079
        %v1085 = vrot.slane %v1084, 4
        %v1087 = vshll.u32 %v987, 16
        %v1089 = vrot.slane %v1087, 5
        %v1090 = vsel %vm994, %v1085, %v1089
        %v1092 = vshrl.u32 %v968, 16
        %v1094 = vrot.slane %v1092, 4
        %v1095 = vshll.u32 %v968, 16
        %v1097 = vrot.slane %v1095, 5
        %v1098 = vor.u32 %v1094, %v1097
        %v1099 = vrot.slane %v1098, 4
        %v1101 = vshll.u32 %v969, 16
        %v1103 = vrot.slane %v1101, 5
        %v1104 = vsel %vm994, %v1099, %v1103
        %v1105 = vshrl.u32 %v969, 16
        %v1107 = vrot.slane %v1105, 4
        %v1108 = vor.u32 %v1107, %v1103
        %v1109 = vrot.slane %v1108, 4
        %v1111 = vshll.u32 %v988, 16
        %v1113 = vrot.slane %v1111, 5
        %v1114 = vsel %vm994, %v1109, %v1113
        %v1116 = vshrl.u32 %v970, 16
        %v1118 = vrot.slane %v1116, 4
        %v1119 = vshll.u32 %v970, 16
        %v1121 = vrot.slane %v1119, 5
        %v1122 = vor.u32 %v1118, %v1121
        %v1123 = vrot.slane %v1122, 4
        %v1125 = vshll.u32 %v971, 16
        %v1127 = vrot.slane %v1125, 5
        %v1128 = vsel %vm994, %v1123, %v1127
        %v1129 = vshrl.u32 %v971, 16
        %v1131 = vrot.slane %v1129, 4
        %v1132 = vor.u32 %v1131, %v1127
        %v1133 = vrot.slane %v1132, 4
        %v1135 = vshll.u32 %v989, 16
        %v1137 = vrot.slane %v1135, 5
        %v1138 = vsel %vm994, %v1133, %v1137
        %v1140 = vshrl.u32 %v972, 16
        %v1142 = vrot.slane %v1140, 4
        %v1143 = vshll.u32 %v972, 16
        %v1145 = vrot.slane %v1143, 5
        %v1146 = vor.u32 %v1142, %v1145
        %v1147 = vrot.slane %v1146, 4
        %v1149 = vshll.u32 %v973, 16
        %v1151 = vrot.slane %v1149, 5
        %v1152 = vsel %vm994, %v1147, %v1151
        %v1153 = vshrl.u32 %v973, 16
        %v1155 = vrot.slane %v1153, 4
        %v1156 = vor.u32 %v1155, %v1151
        %v1157 = vrot.slane %v1156, 4
        %v1159 = vshll.u32 %v990, 16
        %v1161 = vrot.slane %v1159, 5
        %v1162 = vsel %vm994, %v1157, %v1161
        %v1164 = vshrl.u32 %v974, 16
        %v1166 = vrot.slane %v1164, 4
        %v1167 = vshll.u32 %v974, 16
        %v1169 = vrot.slane %v1167, 5
        %v1170 = vor.u32 %v1166, %v1169
        %v1171 = vrot.slane %v1170, 4
        %v1173 = vshll.u32 %v975, 16
        %v1175 = vrot.slane %v1173, 5
        %v1176 = vsel %vm994, %v1171, %v1175
        %v1177 = vshrl.u32 %v975, 16
        %v1179 = vrot.slane %v1177, 4
        %v1180 = vor.u32 %v1179, %v1175
        %v1181 = vrot.slane %v1180, 4
        %v1183 = vshll.u32 %v991, 16
        %v1185 = vrot.slane %v1183, 5
        %v1186 = vsel %vm994, %v1181, %v1185
        %s1187 = scalar_lea.vmem %s3, 32
        %v1188 = vld [vmem:[%s1187] sm:$0xf]
        %v1189 = vld [vmem:[%s1187 + $0x4] sm:$0xf]
        %v1190 = vld [vmem:[%s1187 + $0x8] sm:$0xf]
        %v1191 = vld [vmem:[%s1187 + $0xc] sm:$0xf]
        %v1192 = vld [vmem:[%s1187 + $0x10] sm:$0xf]
        %v1193 = vld [vmem:[%s1187 + $0x14] sm:$0xf]
        %v1194 = vld [vmem:[%s1187 + $0x18] sm:$0xf]
        %v1195 = vld [vmem:[%s1187 + $0x1c] sm:$0xf]
        %v1196 = vunpack.c.l.b16 %v1008
        %v1197 = vunpack.c.l.b16 %v1018
        %v1198 = vunpack.c.l.b16 %v1032
        %v1199 = vunpack.c.l.b16 %v1042
        %v1200 = vunpack.c.l.b16 %v1056
        %v1201 = vunpack.c.l.b16 %v1066
        %v1202 = vunpack.c.l.b16 %v1080
        %v1203 = vunpack.c.l.b16 %v1090
        %v1204 = vunpack.c.l.b16 %v1104
        %v1205 = vunpack.c.l.b16 %v1114
        %v1206 = vunpack.c.l.b16 %v1128
        %v1207 = vunpack.c.l.b16 %v1138
        %v1208 = vunpack.c.l.b16 %v1152
        %v1209 = vunpack.c.l.b16 %v1162
        %v1210 = vunpack.c.l.b16 %v1176
        %v1211 = vunpack.c.l.b16 %v1186
        %v1212 = vpack.c.b16 %v1197, %v1196
        %v1213 = vpack.c.b16 %v1199, %v1198
        %v1214 = vpack.c.b16 %v1201, %v1200
        %v1215 = vpack.c.b16 %v1203, %v1202
        %v1216 = vpack.c.b16 %v1205, %v1204
        %v1217 = vpack.c.b16 %v1207, %v1206
        %v1218 = vpack.c.b16 %v1209, %v1208
        %v1219 = vpack.c.b16 %v1211, %v1210
        %v1228 = vunpack.c.l.b16 %v1188
        %v1229 = vunpack.c.l.b16 %v1189
        %v1230 = vunpack.c.l.b16 %v1190
        %v1231 = vunpack.c.l.b16 %v1191
        %v1232 = vunpack.c.l.b16 %v1192
        %v1233 = vunpack.c.l.b16 %v1193
        %v1234 = vunpack.c.l.b16 %v1194
        %v1235 = vunpack.c.l.b16 %v1195
        %v1236 = vpack.c.b16 %v1229, %v1228
        %v1237 = vpack.c.b16 %v1231, %v1230
        %v1238 = vpack.c.b16 %v1233, %v1232
        %v1239 = vpack.c.b16 %v1235, %v1234
        %vm1244 = vcmask 523264
        %v1246 = vsel %vm1244, %v1212, 0
        %v1249 = vsel %vm1244, %v1213, 0
        %v1252 = vsel %vm1244, %v1214, 0
        %v1255 = vsel %vm1244, %v1215, 0
        %v1258 = vsel %vm1244, %v1216, 0
        %v1261 = vsel %vm1244, %v1217, 0
        %v1264 = vsel %vm1244, %v1218, 0
        %v1267 = vsel %vm1244, %v1219, 0
        %1269 = vmatprep.subr.bf16.mxu0 0
        %1270 = vmatpush1.bf16.msra.mxu0 0
        %1271 = vmatprep.subr.bf16.mxu0 0
        %1272 = vmatpush1.bf16.msra.mxu0 0
        %1273 = vmatprep.subr.bf16.mxu0 0
        %1274 = vmatpush1.bf16.msra.mxu0 0
        %1275 = vmatprep.subr.bf16.mxu0 0
        %1276 = vmatpush1.bf16.msra.mxu0 0
        %1277 = vmatprep.subr.bf16.mxu0 0
        %1278 = vmatpush1.bf16.msra.mxu0 %v1239
        %1279 = vmatprep.subr.bf16.mxu0 0
        %1280 = vmatpush1.bf16.msra.mxu0 %v1238
        %1281 = vmatprep.subr.bf16.mxu0 0
        %1282 = vmatpush1.bf16.msra.mxu0 %v1237
        %1283 = vmatprep.subr.bf16.mxu0 0
        %1284 = vmatpush1.bf16.msra.mxu0 %v1236
        %1285 = vmatprep.subr.bf16.mxu0 0
        %1286 = vmatpush2.bf16.msra.mxu0 0
        %1287 = vmatprep.subr.bf16.mxu0 0
        %1288 = vmatpush2.bf16.msra.mxu0 0
        %1289 = vmatprep.subr.bf16.mxu0 0
        %1290 = vmatpush2.bf16.msra.mxu0 0
        %1291 = vmatprep.subr.bf16.mxu0 0
        %1292 = vmatpush2.bf16.msra.mxu0 0
        %1293 = vmatprep.subr.bf16.mxu0 0
        %1294 = vmatpush2.bf16.msra.mxu0 0
        %1295 = vmatprep.subr.bf16.mxu0 0
        %1296 = vmatpush2.bf16.msra.mxu0 0
        %1297 = vmatprep.subr.bf16.mxu0 0
        %1298 = vmatpush2.bf16.msra.mxu0 0
        %1299 = vmatprep.subr.bf16.mxu0 0
        %1300 = vmatpush2.bf16.msra.mxu0 0
        %1301 = vmatprep.mubr.bf16.mxu0 0
        %1302 = vmatmul.mubr.bf16.gmra.mxu0 %v1246
        %v1303 = vpop.f32.mrf.mxu0
        %v1304 = vadd.f32 0.0, %v1303
        %v1305 = vpop.f32.mrf.mxu0
        %v1306 = vpop.f32.mrf.mxu0
        %v1307 = vadd.f32 0.0, %v1306
        %v1308 = vpop.f32.mrf.mxu0
        %1309 = vmatprep.mubr.bf16.mxu0 0
        %1310 = vmatmul.mubr.bf16.gmra.mxu0 %v1249
        %v1311 = vpop.f32.mrf.mxu0
        %v1312 = vadd.f32 0.0, %v1311
        %v1313 = vpop.f32.mrf.mxu0
        %v1314 = vpop.f32.mrf.mxu0
        %v1315 = vadd.f32 0.0, %v1314
        %v1316 = vpop.f32.mrf.mxu0
        %1317 = vmatprep.mubr.bf16.mxu0 0
        %1318 = vmatmul.mubr.bf16.gmra.mxu0 %v1252
        %v1319 = vpop.f32.mrf.mxu0
        %v1320 = vadd.f32 0.0, %v1319
        %v1321 = vpop.f32.mrf.mxu0
        %v1322 = vpop.f32.mrf.mxu0
        %v1323 = vadd.f32 0.0, %v1322
        %v1324 = vpop.f32.mrf.mxu0
        %1325 = vmatprep.mubr.bf16.mxu0 0
        %1326 = vmatmul.mubr.bf16.gmra.mxu0 %v1255
        %v1327 = vpop.f32.mrf.mxu0
        %v1328 = vadd.f32 0.0, %v1327
        %v1329 = vpop.f32.mrf.mxu0
        %v1330 = vpop.f32.mrf.mxu0
        %v1331 = vadd.f32 0.0, %v1330
        %v1332 = vpop.f32.mrf.mxu0
        %1333 = vmatprep.mubr.bf16.mxu0 0
        %1334 = vmatmul.mubr.bf16.gmra.mxu0 %v1258
        %v1335 = vpop.f32.mrf.mxu0
        %v1336 = vadd.f32 0.0, %v1335
        %v1337 = vpop.f32.mrf.mxu0
        %v1338 = vpop.f32.mrf.mxu0
        %v1339 = vadd.f32 0.0, %v1338
        %v1340 = vpop.f32.mrf.mxu0
        %1341 = vmatprep.mubr.bf16.mxu0 0
        %1342 = vmatmul.mubr.bf16.gmra.mxu0 %v1261
        %v1343 = vpop.f32.mrf.mxu0
        %v1344 = vadd.f32 0.0, %v1343
        %v1345 = vpop.f32.mrf.mxu0
        %v1346 = vpop.f32.mrf.mxu0
        %v1347 = vadd.f32 0.0, %v1346
        %v1348 = vpop.f32.mrf.mxu0
        %1349 = vmatprep.mubr.bf16.mxu0 0
        %1350 = vmatmul.mubr.bf16.gmra.mxu0 %v1264
        %v1351 = vpop.f32.mrf.mxu0
        %v1352 = vadd.f32 0.0, %v1351
        %v1353 = vpop.f32.mrf.mxu0
        %v1354 = vpop.f32.mrf.mxu0
        %v1355 = vadd.f32 0.0, %v1354
        %v1356 = vpop.f32.mrf.mxu0
        %1357 = vmatprep.mubr.bf16.mxu0 0
        %1358 = vmatmul.mubr.bf16.gmra.mxu0 %v1267
        %v1359 = vpop.f32.mrf.mxu0
        %v1360 = vadd.f32 0.0, %v1359
        %v1361 = vpop.f32.mrf.mxu0
        %v1362 = vpop.f32.mrf.mxu0
        %v1363 = vadd.f32 0.0, %v1362
        %v1364 = vpop.f32.mrf.mxu0
        %1365 = vdwg.mxu0
        %v1382 = vunpack.c.l.b16 %v960
        %v1383 = vunpack.c.l.b16 %v961
        %v1384 = vunpack.c.l.b16 %v962
        %v1385 = vunpack.c.l.b16 %v963
        %v1386 = vunpack.c.l.b16 %v964
        %v1387 = vunpack.c.l.b16 %v965
        %v1388 = vunpack.c.l.b16 %v966
        %v1389 = vunpack.c.l.b16 %v967
        %v1390 = vunpack.c.l.b16 %v968
        %v1391 = vunpack.c.l.b16 %v969
        %v1392 = vunpack.c.l.b16 %v970
        %v1393 = vunpack.c.l.b16 %v971
        %v1394 = vunpack.c.l.b16 %v972
        %v1395 = vunpack.c.l.b16 %v973
        %v1396 = vunpack.c.l.b16 %v974
        %v1397 = vunpack.c.l.b16 %v975
        %v1398 = vpack.c.b16 %v1383, %v1382
        %v1399 = vpack.c.b16 %v1385, %v1384
        %v1400 = vpack.c.b16 %v1387, %v1386
        %v1401 = vpack.c.b16 %v1389, %v1388
        %v1402 = vpack.c.b16 %v1391, %v1390
        %v1403 = vpack.c.b16 %v1393, %v1392
        %v1404 = vpack.c.b16 %v1395, %v1394
        %v1405 = vpack.c.b16 %v1397, %v1396
        %v1414 = vunpack.c.l.b16 %v976
        %v1415 = vunpack.c.l.b16 %v977
        %v1416 = vunpack.c.l.b16 %v978
        %v1417 = vunpack.c.l.b16 %v979
        %v1418 = vunpack.c.l.b16 %v980
        %v1419 = vunpack.c.l.b16 %v981
        %v1420 = vunpack.c.l.b16 %v982
        %v1421 = vunpack.c.l.b16 %v983
        %v1422 = vpack.c.b16 %v1415, %v1414
        %v1423 = vpack.c.b16 %v1417, %v1416
        %v1424 = vpack.c.b16 %v1419, %v1418
        %v1425 = vpack.c.b16 %v1421, %v1420
        %v1431 = vsel %vm1244, %v1398, 0
        %v1434 = vsel %vm1244, %v1399, 0
        %v1437 = vsel %vm1244, %v1400, 0
        %v1440 = vsel %vm1244, %v1401, 0
        %v1443 = vsel %vm1244, %v1402, 0
        %v1446 = vsel %vm1244, %v1403, 0
        %v1449 = vsel %vm1244, %v1404, 0
        %v1452 = vsel %vm1244, %v1405, 0
        %1454 = vmatprep.subr.bf16.mxu0 0
        %1455 = vmatpush1.bf16.msra.mxu0 0
        %1456 = vmatprep.subr.bf16.mxu0 0
        %1457 = vmatpush1.bf16.msra.mxu0 0
        %1458 = vmatprep.subr.bf16.mxu0 0
        %1459 = vmatpush1.bf16.msra.mxu0 0
        %1460 = vmatprep.subr.bf16.mxu0 0
        %1461 = vmatpush1.bf16.msra.mxu0 0
        %1462 = vmatprep.subr.bf16.mxu0 0
        %1463 = vmatpush1.bf16.msra.mxu0 %v1425
        %1464 = vmatprep.subr.bf16.mxu0 0
        %1465 = vmatpush1.bf16.msra.mxu0 %v1424
        %1466 = vmatprep.subr.bf16.mxu0 0
        %1467 = vmatpush1.bf16.msra.mxu0 %v1423
        %1468 = vmatprep.subr.bf16.mxu0 0
        %1469 = vmatpush1.bf16.msra.mxu0 %v1422
        %1470 = vmatprep.subr.bf16.mxu0 0
        %1471 = vmatpush2.bf16.msra.mxu0 0
        %1472 = vmatprep.subr.bf16.mxu0 0
        %1473 = vmatpush2.bf16.msra.mxu0 0
        %1474 = vmatprep.subr.bf16.mxu0 0
        %1475 = vmatpush2.bf16.msra.mxu0 0
        %1476 = vmatprep.subr.bf16.mxu0 0
        %1477 = vmatpush2.bf16.msra.mxu0 0
        %1478 = vmatprep.subr.bf16.mxu0 0
        %1479 = vmatpush2.bf16.msra.mxu0 0
        %1480 = vmatprep.subr.bf16.mxu0 0
        %1481 = vmatpush2.bf16.msra.mxu0 0
        %1482 = vmatprep.subr.bf16.mxu0 0
        %1483 = vmatpush2.bf16.msra.mxu0 0
        %1484 = vmatprep.subr.bf16.mxu0 0
        %1485 = vmatpush2.bf16.msra.mxu0 0
        %1486 = vmatprep.mubr.bf16.mxu0 0
        %1487 = vmatmul.mubr.bf16.gmra.mxu0 %v1431
        %v1488 = vpop.f32.mrf.mxu0
        %v1489 = vadd.f32 %v1304, %v1488
        %v1490 = vpop.f32.mrf.mxu0
        %v1491 = vpop.f32.mrf.mxu0
        %v1492 = vadd.f32 %v1307, %v1491
        %v1493 = vpop.f32.mrf.mxu0
        %1494 = vmatprep.mubr.bf16.mxu0 0
        %1495 = vmatmul.mubr.bf16.gmra.mxu0 %v1434
        %v1496 = vpop.f32.mrf.mxu0
        %v1497 = vadd.f32 %v1312, %v1496
        %v1498 = vpop.f32.mrf.mxu0
        %v1499 = vpop.f32.mrf.mxu0
        %v1500 = vadd.f32 %v1315, %v1499
        %v1501 = vpop.f32.mrf.mxu0
        %1502 = vmatprep.mubr.bf16.mxu0 0
        %1503 = vmatmul.mubr.bf16.gmra.mxu0 %v1437
        %v1504 = vpop.f32.mrf.mxu0
        %v1505 = vadd.f32 %v1320, %v1504
        %v1506 = vpop.f32.mrf.mxu0
        %v1507 = vpop.f32.mrf.mxu0
        %v1508 = vadd.f32 %v1323, %v1507
        %v1509 = vpop.f32.mrf.mxu0
        %1510 = vmatprep.mubr.bf16.mxu0 0
        %1511 = vmatmul.mubr.bf16.gmra.mxu0 %v1440
        %v1512 = vpop.f32.mrf.mxu0
        %v1513 = vadd.f32 %v1328, %v1512
        %v1514 = vpop.f32.mrf.mxu0
        %v1515 = vpop.f32.mrf.mxu0
        %v1516 = vadd.f32 %v1331, %v1515
        %v1517 = vpop.f32.mrf.mxu0
        %1518 = vmatprep.mubr.bf16.mxu0 0
        %1519 = vmatmul.mubr.bf16.gmra.mxu0 %v1443
        %v1520 = vpop.f32.mrf.mxu0
        %v1521 = vadd.f32 %v1336, %v1520
        %v1522 = vpop.f32.mrf.mxu0
        %v1523 = vpop.f32.mrf.mxu0
        %v1524 = vadd.f32 %v1339, %v1523
        %v1525 = vpop.f32.mrf.mxu0
        %1526 = vmatprep.mubr.bf16.mxu0 0
        %1527 = vmatmul.mubr.bf16.gmra.mxu0 %v1446
        %v1528 = vpop.f32.mrf.mxu0
        %v1529 = vadd.f32 %v1344, %v1528
        %v1530 = vpop.f32.mrf.mxu0
        %v1531 = vpop.f32.mrf.mxu0
        %v1532 = vadd.f32 %v1347, %v1531
        %v1533 = vpop.f32.mrf.mxu0
        %1534 = vmatprep.mubr.bf16.mxu0 0
        %1535 = vmatmul.mubr.bf16.gmra.mxu0 %v1449
        %v1536 = vpop.f32.mrf.mxu0
        %v1537 = vadd.f32 %v1352, %v1536
        %v1538 = vpop.f32.mrf.mxu0
        %v1539 = vpop.f32.mrf.mxu0
        %v1540 = vadd.f32 %v1355, %v1539
        %v1541 = vpop.f32.mrf.mxu0
        %1542 = vmatprep.mubr.bf16.mxu0 0
        %1543 = vmatmul.mubr.bf16.gmra.mxu0 %v1452
        %v1544 = vpop.f32.mrf.mxu0
        %v1545 = vadd.f32 %v1360, %v1544
        %v1546 = vpop.f32.mrf.mxu0
        %v1547 = vpop.f32.mrf.mxu0
        %v1548 = vadd.f32 %v1363, %v1547
        %v1549 = vpop.f32.mrf.mxu0
        %1550 = vdwg.mxu0
        %v1551 = vld [vmem:[%s959] sm:$0xe]
        %v1552 = vld [vmem:[%s959 + $0xc] sm:$0xe]
        %v1553 = vld [vmem:[%s959 + $0x18] sm:$0xe]
        %v1554 = vld [vmem:[%s959 + $0x24] sm:$0xe]
        %v1555 = vld [vmem:[%s959 + $0x30] sm:$0xe]
        %v1556 = vld [vmem:[%s959 + $0x3c] sm:$0xe]
        %v1557 = vld [vmem:[%s959 + $0x48] sm:$0xe]
        %v1558 = vld [vmem:[%s959 + $0x54] sm:$0xe]
        %vm1575 = vcmask 1042432
        %vm1576 = vcmask 1046532
        %vm1577 = vmor %vm1575, %vm1576
        %v1578 = vrot.slane %v1551, 5
        %v1579 = vrot.slane %v1578, 4
        %v1580 = vrot.slane %v961, 5
        %v1581 = vsel %vm1577, %v1579, %v1580
        %v1582 = vrot.slane %v1580, 4
        %v1583 = vrot.slane %v984, 5
        %v1584 = vsel %vm1577, %v1582, %v1583
        %v1585 = vrot.slane %v1552, 5
        %v1586 = vrot.slane %v1585, 4
        %v1587 = vrot.slane %v963, 5
        %v1588 = vsel %vm1577, %v1586, %v1587
        %v1589 = vrot.slane %v1587, 4
        %v1590 = vrot.slane %v985, 5
        %v1591 = vsel %vm1577, %v1589, %v1590
        %v1592 = vrot.slane %v1553, 5
        %v1593 = vrot.slane %v1592, 4
        %v1594 = vrot.slane %v965, 5
        %v1595 = vsel %vm1577, %v1593, %v1594
        %v1596 = vrot.slane %v1594, 4
        %v1597 = vrot.slane %v986, 5
        %v1598 = vsel %vm1577, %v1596, %v1597
        %v1599 = vrot.slane %v1554, 5
        %v1600 = vrot.slane %v1599, 4
        %v1601 = vrot.slane %v967, 5
        %v1602 = vsel %vm1577, %v1600, %v1601
        %v1603 = vrot.slane %v1601, 4
        %v1604 = vrot.slane %v987, 5
        %v1605 = vsel %vm1577, %v1603, %v1604
        %v1606 = vrot.slane %v1555, 5
        %v1607 = vrot.slane %v1606, 4
        %v1608 = vrot.slane %v969, 5
        %v1609 = vsel %vm1577, %v1607, %v1608
        %v1610 = vrot.slane %v1608, 4
        %v1611 = vrot.slane %v988, 5
        %v1612 = vsel %vm1577, %v1610, %v1611
        %v1613 = vrot.slane %v1556, 5
        %v1614 = vrot.slane %v1613, 4
        %v1615 = vrot.slane %v971, 5
        %v1616 = vsel %vm1577, %v1614, %v1615
        %v1617 = vrot.slane %v1615, 4
        %v1618 = vrot.slane %v989, 5
        %v1619 = vsel %vm1577, %v1617, %v1618
        %v1620 = vrot.slane %v1557, 5
        %v1621 = vrot.slane %v1620, 4
        %v1622 = vrot.slane %v973, 5
        %v1623 = vsel %vm1577, %v1621, %v1622
        %v1624 = vrot.slane %v1622, 4
        %v1625 = vrot.slane %v990, 5
        %v1626 = vsel %vm1577, %v1624, %v1625
        %v1627 = vrot.slane %v1558, 5
        %v1628 = vrot.slane %v1627, 4
        %v1629 = vrot.slane %v975, 5
        %v1630 = vsel %vm1577, %v1628, %v1629
        %v1631 = vrot.slane %v1629, 4
        %v1632 = vrot.slane %v991, 5
        %v1633 = vsel %vm1577, %v1631, %v1632
        %s1634 = scalar_lea.vmem %s3, 64
        %v1635 = vld [vmem:[%s1634] sm:$0xf]
        %v1636 = vld [vmem:[%s1634 + $0x4] sm:$0xf]
        %v1637 = vld [vmem:[%s1634 + $0x8] sm:$0xf]
        %v1638 = vld [vmem:[%s1634 + $0xc] sm:$0xf]
        %v1639 = vld [vmem:[%s1634 + $0x10] sm:$0xf]
        %v1640 = vld [vmem:[%s1634 + $0x14] sm:$0xf]
        %v1641 = vld [vmem:[%s1634 + $0x18] sm:$0xf]
        %v1642 = vld [vmem:[%s1634 + $0x1c] sm:$0xf]
        %v1643 = vunpack.c.l.b16 %v1581
        %v1644 = vunpack.c.l.b16 %v1584
        %v1645 = vunpack.c.l.b16 %v1588
        %v1646 = vunpack.c.l.b16 %v1591
        %v1647 = vunpack.c.l.b16 %v1595
        %v1648 = vunpack.c.l.b16 %v1598
        %v1649 = vunpack.c.l.b16 %v1602
        %v1650 = vunpack.c.l.b16 %v1605
        %v1651 = vunpack.c.l.b16 %v1609
        %v1652 = vunpack.c.l.b16 %v1612
        %v1653 = vunpack.c.l.b16 %v1616
        %v1654 = vunpack.c.l.b16 %v1619
        %v1655 = vunpack.c.l.b16 %v1623
        %v1656 = vunpack.c.l.b16 %v1626
        %v1657 = vunpack.c.l.b16 %v1630
        %v1658 = vunpack.c.l.b16 %v1633
        %v1659 = vpack.c.b16 %v1644, %v1643
        %v1660 = vpack.c.b16 %v1646, %v1645
        %v1661 = vpack.c.b16 %v1648, %v1647
        %v1662 = vpack.c.b16 %v1650, %v1649
        %v1663 = vpack.c.b16 %v1652, %v1651
        %v1664 = vpack.c.b16 %v1654, %v1653
        %v1665 = vpack.c.b16 %v1656, %v1655
        %v1666 = vpack.c.b16 %v1658, %v1657
        %v1675 = vunpack.c.l.b16 %v1635
        %v1676 = vunpack.c.l.b16 %v1636
        %v1677 = vunpack.c.l.b16 %v1637
        %v1678 = vunpack.c.l.b16 %v1638
        %v1679 = vunpack.c.l.b16 %v1639
        %v1680 = vunpack.c.l.b16 %v1640
        %v1681 = vunpack.c.l.b16 %v1641
        %v1682 = vunpack.c.l.b16 %v1642
        %v1683 = vpack.c.b16 %v1676, %v1675
        %v1684 = vpack.c.b16 %v1678, %v1677
        %v1685 = vpack.c.b16 %v1680, %v1679
        %v1686 = vpack.c.b16 %v1682, %v1681
        %v1692 = vsel %vm1244, %v1659, 0
        %v1695 = vsel %vm1244, %v1660, 0
        %v1698 = vsel %vm1244, %v1661, 0
        %v1701 = vsel %vm1244, %v1662, 0
        %v1704 = vsel %vm1244, %v1663, 0
        %v1707 = vsel %vm1244, %v1664, 0
        %v1710 = vsel %vm1244, %v1665, 0
        %v1713 = vsel %vm1244, %v1666, 0
        %1715 = vmatprep.subr.bf16.mxu0 0
        %1716 = vmatpush1.bf16.msra.mxu0 0
        %1717 = vmatprep.subr.bf16.mxu0 0
        %1718 = vmatpush1.bf16.msra.mxu0 0
        %1719 = vmatprep.subr.bf16.mxu0 0
        %1720 = vmatpush1.bf16.msra.mxu0 0
        %1721 = vmatprep.subr.bf16.mxu0 0
        %1722 = vmatpush1.bf16.msra.mxu0 0
        %1723 = vmatprep.subr.bf16.mxu0 0
        %1724 = vmatpush1.bf16.msra.mxu0 %v1686
        %1725 = vmatprep.subr.bf16.mxu0 0
        %1726 = vmatpush1.bf16.msra.mxu0 %v1685
        %1727 = vmatprep.subr.bf16.mxu0 0
        %1728 = vmatpush1.bf16.msra.mxu0 %v1684
        %1729 = vmatprep.subr.bf16.mxu0 0
        %1730 = vmatpush1.bf16.msra.mxu0 %v1683
        %1731 = vmatprep.subr.bf16.mxu0 0
        %1732 = vmatpush2.bf16.msra.mxu0 0
        %1733 = vmatprep.subr.bf16.mxu0 0
        %1734 = vmatpush2.bf16.msra.mxu0 0
        %1735 = vmatprep.subr.bf16.mxu0 0
        %1736 = vmatpush2.bf16.msra.mxu0 0
        %1737 = vmatprep.subr.bf16.mxu0 0
        %1738 = vmatpush2.bf16.msra.mxu0 0
        %1739 = vmatprep.subr.bf16.mxu0 0
        %1740 = vmatpush2.bf16.msra.mxu0 0
        %1741 = vmatprep.subr.bf16.mxu0 0
        %1742 = vmatpush2.bf16.msra.mxu0 0
        %1743 = vmatprep.subr.bf16.mxu0 0
        %1744 = vmatpush2.bf16.msra.mxu0 0
        %1745 = vmatprep.subr.bf16.mxu0 0
        %1746 = vmatpush2.bf16.msra.mxu0 0
        %1747 = vmatprep.mubr.bf16.mxu0 0
        %1748 = vmatmul.mubr.bf16.gmra.mxu0 %v1692
        %v1749 = vpop.f32.mrf.mxu0
        %v1750 = vadd.f32 0.0, %v1749
        %v1751 = vpop.f32.mrf.mxu0
        %v1752 = vpop.f32.mrf.mxu0
        %v1753 = vadd.f32 0.0, %v1752
        %v1754 = vpop.f32.mrf.mxu0
        %1755 = vmatprep.mubr.bf16.mxu0 0
        %1756 = vmatmul.mubr.bf16.gmra.mxu0 %v1695
        %v1757 = vpop.f32.mrf.mxu0
        %v1758 = vadd.f32 0.0, %v1757
        %v1759 = vpop.f32.mrf.mxu0
        %v1760 = vpop.f32.mrf.mxu0
        %v1761 = vadd.f32 0.0, %v1760
        %v1762 = vpop.f32.mrf.mxu0
        %1763 = vmatprep.mubr.bf16.mxu0 0
        %1764 = vmatmul.mubr.bf16.gmra.mxu0 %v1698
        %v1765 = vpop.f32.mrf.mxu0
        %v1766 = vadd.f32 0.0, %v1765
        %v1767 = vpop.f32.mrf.mxu0
        %v1768 = vpop.f32.mrf.mxu0
        %v1769 = vadd.f32 0.0, %v1768
        %v1770 = vpop.f32.mrf.mxu0
        %1771 = vmatprep.mubr.bf16.mxu0 0
        %1772 = vmatmul.mubr.bf16.gmra.mxu0 %v1701
        %v1773 = vpop.f32.mrf.mxu0
        %v1774 = vadd.f32 0.0, %v1773
        %v1775 = vpop.f32.mrf.mxu0
        %v1776 = vpop.f32.mrf.mxu0
        %v1777 = vadd.f32 0.0, %v1776
        %v1778 = vpop.f32.mrf.mxu0
        %1779 = vmatprep.mubr.bf16.mxu0 0
        %1780 = vmatmul.mubr.bf16.gmra.mxu0 %v1704
        %v1781 = vpop.f32.mrf.mxu0
        %v1782 = vadd.f32 0.0, %v1781
        %v1783 = vpop.f32.mrf.mxu0
        %v1784 = vpop.f32.mrf.mxu0
        %v1785 = vadd.f32 0.0, %v1784
        %v1786 = vpop.f32.mrf.mxu0
        %1787 = vmatprep.mubr.bf16.mxu0 0
        %1788 = vmatmul.mubr.bf16.gmra.mxu0 %v1707
        %v1789 = vpop.f32.mrf.mxu0
        %v1790 = vadd.f32 0.0, %v1789
        %v1791 = vpop.f32.mrf.mxu0
        %v1792 = vpop.f32.mrf.mxu0
        %v1793 = vadd.f32 0.0, %v1792
        %v1794 = vpop.f32.mrf.mxu0
        %1795 = vmatprep.mubr.bf16.mxu0 0
        %1796 = vmatmul.mubr.bf16.gmra.mxu0 %v1710
        %v1797 = vpop.f32.mrf.mxu0
        %v1798 = vadd.f32 0.0, %v1797
        %v1799 = vpop.f32.mrf.mxu0
        %v1800 = vpop.f32.mrf.mxu0
        %v1801 = vadd.f32 0.0, %v1800
        %v1802 = vpop.f32.mrf.mxu0
        %1803 = vmatprep.mubr.bf16.mxu0 0
        %1804 = vmatmul.mubr.bf16.gmra.mxu0 %v1713
        %v1805 = vpop.f32.mrf.mxu0
        %v1806 = vadd.f32 0.0, %v1805
        %v1807 = vpop.f32.mrf.mxu0
        %v1808 = vpop.f32.mrf.mxu0
        %v1809 = vadd.f32 0.0, %v1808
        %v1810 = vpop.f32.mrf.mxu0
        %1811 = vdwg.mxu0
        %v1812 = vadd.f32 %v1489, %v1750
        %v1813 = vadd.f32 %v1492, %v1753
        %v1814 = vadd.f32 %v1497, %v1758
        %v1815 = vadd.f32 %v1500, %v1761
        %v1816 = vadd.f32 %v1505, %v1766
        %v1817 = vadd.f32 %v1508, %v1769
        %v1818 = vadd.f32 %v1513, %v1774
        %v1819 = vadd.f32 %v1516, %v1777
        %v1820 = vadd.f32 %v1521, %v1782
        %v1821 = vadd.f32 %v1524, %v1785
        %v1822 = vadd.f32 %v1529, %v1790
        %v1823 = vadd.f32 %v1532, %v1793
        %v1824 = vadd.f32 %v1537, %v1798
        %v1825 = vadd.f32 %v1540, %v1801
        %v1826 = vadd.f32 %v1545, %v1806
        %v1827 = vadd.f32 %v1548, %v1809
        %s1828 = sadd.s32 %s956, 1
        %s1829 = smul.u32 %s1828, 3
        %s1830 = smul.addr %s1829, 4
        %s1831 = scalar_lea.vmem [#allocation2], %s1830
        %v1832 = vld [vmem:[%s1831] sm:$0xf]
        %v1833 = vld [vmem:[%s1831 + $0x4] sm:$0xf]
        %v1834 = vld [vmem:[%s1831 + $0xc] sm:$0xf]
        %v1835 = vld [vmem:[%s1831 + $0x10] sm:$0xf]
        %v1836 = vld [vmem:[%s1831 + $0x18] sm:$0xf]
        %v1837 = vld [vmem:[%s1831 + $0x1c] sm:$0xf]
        %v1838 = vld [vmem:[%s1831 + $0x24] sm:$0xf]
        %v1839 = vld [vmem:[%s1831 + $0x28] sm:$0xf]
        %v1840 = vld [vmem:[%s1831 + $0x30] sm:$0xf]
        %v1841 = vld [vmem:[%s1831 + $0x34] sm:$0xf]
        %v1842 = vld [vmem:[%s1831 + $0x3c] sm:$0xf]
        %v1843 = vld [vmem:[%s1831 + $0x40] sm:$0xf]
        %v1844 = vld [vmem:[%s1831 + $0x48] sm:$0xf]
        %v1845 = vld [vmem:[%s1831 + $0x4c] sm:$0xf]
        %v1846 = vld [vmem:[%s1831 + $0x54] sm:$0xf]
        %v1847 = vld [vmem:[%s1831 + $0x58] sm:$0xf]
        %s1848 = scalar_lea.vmem %s3, 96
        %v1849 = vld [vmem:[%s1848] sm:$0xf]
        %v1850 = vld [vmem:[%s1848 + $0x4] sm:$0xf]
        %v1851 = vld [vmem:[%s1848 + $0x8] sm:$0xf]
        %v1852 = vld [vmem:[%s1848 + $0xc] sm:$0xf]
        %v1853 = vld [vmem:[%s1848 + $0x10] sm:$0xf]
        %v1854 = vld [vmem:[%s1848 + $0x14] sm:$0xf]
        %v1855 = vld [vmem:[%s1848 + $0x18] sm:$0xf]
        %v1856 = vld [vmem:[%s1848 + $0x1c] sm:$0xf]
        %v1873 = vunpack.c.l.b16 %v1832
        %v1874 = vunpack.c.l.b16 %v1833
        %v1875 = vunpack.c.l.b16 %v1834
        %v1876 = vunpack.c.l.b16 %v1835
        %v1877 = vunpack.c.l.b16 %v1836
        %v1878 = vunpack.c.l.b16 %v1837
        %v1879 = vunpack.c.l.b16 %v1838
        %v1880 = vunpack.c.l.b16 %v1839
        %v1881 = vunpack.c.l.b16 %v1840
        %v1882 = vunpack.c.l.b16 %v1841
        %v1883 = vunpack.c.l.b16 %v1842
        %v1884 = vunpack.c.l.b16 %v1843
        %v1885 = vunpack.c.l.b16 %v1844
        %v1886 = vunpack.c.l.b16 %v1845
        %v1887 = vunpack.c.l.b16 %v1846
        %v1888 = vunpack.c.l.b16 %v1847
        %v1889 = vpack.c.b16 %v1874, %v1873
        %v1890 = vpack.c.b16 %v1876, %v1875
        %v1891 = vpack.c.b16 %v1878, %v1877
        %v1892 = vpack.c.b16 %v1880, %v1879
        %v1893 = vpack.c.b16 %v1882, %v1881
        %v1894 = vpack.c.b16 %v1884, %v1883
        %v1895 = vpack.c.b16 %v1886, %v1885
        %v1896 = vpack.c.b16 %v1888, %v1887
        %v1905 = vunpack.c.l.b16 %v1849
        %v1906 = vunpack.c.l.b16 %v1850
        %v1907 = vunpack.c.l.b16 %v1851
        %v1908 = vunpack.c.l.b16 %v1852
        %v1909 = vunpack.c.l.b16 %v1853
        %v1910 = vunpack.c.l.b16 %v1854
        %v1911 = vunpack.c.l.b16 %v1855
        %v1912 = vunpack.c.l.b16 %v1856
        %v1913 = vpack.c.b16 %v1906, %v1905
        %v1914 = vpack.c.b16 %v1908, %v1907
        %v1915 = vpack.c.b16 %v1910, %v1909
        %v1916 = vpack.c.b16 %v1912, %v1911
        %v1922 = vsel %vm1244, %v1889, 0
        %v1925 = vsel %vm1244, %v1890, 0
        %v1928 = vsel %vm1244, %v1891, 0
        %v1931 = vsel %vm1244, %v1892, 0
        %v1934 = vsel %vm1244, %v1893, 0
        %v1937 = vsel %vm1244, %v1894, 0
        %v1940 = vsel %vm1244, %v1895, 0
        %v1943 = vsel %vm1244, %v1896, 0
        %1945 = vmatprep.subr.bf16.mxu0 0
        %1946 = vmatpush1.bf16.msra.mxu0 0
        %1947 = vmatprep.subr.bf16.mxu0 0
        %1948 = vmatpush1.bf16.msra.mxu0 0
        %1949 = vmatprep.subr.bf16.mxu0 0
        %1950 = vmatpush1.bf16.msra.mxu0 0
        %1951 = vmatprep.subr.bf16.mxu0 0
        %1952 = vmatpush1.bf16.msra.mxu0 0
        %1953 = vmatprep.subr.bf16.mxu0 0
        %1954 = vmatpush1.bf16.msra.mxu0 %v1916
        %1955 = vmatprep.subr.bf16.mxu0 0
        %1956 = vmatpush1.bf16.msra.mxu0 %v1915
        %1957 = vmatprep.subr.bf16.mxu0 0
        %1958 = vmatpush1.bf16.msra.mxu0 %v1914
        %1959 = vmatprep.subr.bf16.mxu0 0
        %1960 = vmatpush1.bf16.msra.mxu0 %v1913
        %1961 = vmatprep.subr.bf16.mxu0 0
        %1962 = vmatpush2.bf16.msra.mxu0 0
        %1963 = vmatprep.subr.bf16.mxu0 0
        %1964 = vmatpush2.bf16.msra.mxu0 0
        %1965 = vmatprep.subr.bf16.mxu0 0
        %1966 = vmatpush2.bf16.msra.mxu0 0
        %1967 = vmatprep.subr.bf16.mxu0 0
        %1968 = vmatpush2.bf16.msra.mxu0 0
        %1969 = vmatprep.subr.bf16.mxu0 0
        %1970 = vmatpush2.bf16.msra.mxu0 0
        %1971 = vmatprep.subr.bf16.mxu0 0
        %1972 = vmatpush2.bf16.msra.mxu0 0
        %1973 = vmatprep.subr.bf16.mxu0 0
        %1974 = vmatpush2.bf16.msra.mxu0 0
        %1975 = vmatprep.subr.bf16.mxu0 0
        %1976 = vmatpush2.bf16.msra.mxu0 0
        %1977 = vmatprep.mubr.bf16.mxu0 0
        %1978 = vmatmul.mubr.bf16.gmra.mxu0 %v1922
        %v1979 = vpop.f32.mrf.mxu0
        %v1980 = vadd.f32 0.0, %v1979
        %v1981 = vpop.f32.mrf.mxu0
        %v1982 = vpop.f32.mrf.mxu0
        %v1983 = vadd.f32 0.0, %v1982
        %v1984 = vpop.f32.mrf.mxu0
        %1985 = vmatprep.mubr.bf16.mxu0 0
        %1986 = vmatmul.mubr.bf16.gmra.mxu0 %v1925
        %v1987 = vpop.f32.mrf.mxu0
        %v1988 = vadd.f32 0.0, %v1987
        %v1989 = vpop.f32.mrf.mxu0
        %v1990 = vpop.f32.mrf.mxu0
        %v1991 = vadd.f32 0.0, %v1990
        %v1992 = vpop.f32.mrf.mxu0
        %1993 = vmatprep.mubr.bf16.mxu0 0
        %1994 = vmatmul.mubr.bf16.gmra.mxu0 %v1928
        %v1995 = vpop.f32.mrf.mxu0
        %v1996 = vadd.f32 0.0, %v1995
        %v1997 = vpop.f32.mrf.mxu0
        %v1998 = vpop.f32.mrf.mxu0
        %v1999 = vadd.f32 0.0, %v1998
        %v2000 = vpop.f32.mrf.mxu0
        %2001 = vmatprep.mubr.bf16.mxu0 0
        %2002 = vmatmul.mubr.bf16.gmra.mxu0 %v1931
        %v2003 = vpop.f32.mrf.mxu0
        %v2004 = vadd.f32 0.0, %v2003
        %v2005 = vpop.f32.mrf.mxu0
        %v2006 = vpop.f32.mrf.mxu0
        %v2007 = vadd.f32 0.0, %v2006
        %v2008 = vpop.f32.mrf.mxu0
        %2009 = vmatprep.mubr.bf16.mxu0 0
        %2010 = vmatmul.mubr.bf16.gmra.mxu0 %v1934
        %v2011 = vpop.f32.mrf.mxu0
        %v2012 = vadd.f32 0.0, %v2011
        %v2013 = vpop.f32.mrf.mxu0
        %v2014 = vpop.f32.mrf.mxu0
        %v2015 = vadd.f32 0.0, %v2014
        %v2016 = vpop.f32.mrf.mxu0
        %2017 = vmatprep.mubr.bf16.mxu0 0
        %2018 = vmatmul.mubr.bf16.gmra.mxu0 %v1937
        %v2019 = vpop.f32.mrf.mxu0
        %v2020 = vadd.f32 0.0, %v2019
        %v2021 = vpop.f32.mrf.mxu0
        %v2022 = vpop.f32.mrf.mxu0
        %v2023 = vadd.f32 0.0, %v2022
        %v2024 = vpop.f32.mrf.mxu0
        %2025 = vmatprep.mubr.bf16.mxu0 0
        %2026 = vmatmul.mubr.bf16.gmra.mxu0 %v1940
        %v2027 = vpop.f32.mrf.mxu0
        %v2028 = vadd.f32 0.0, %v2027
        %v2029 = vpop.f32.mrf.mxu0
        %v2030 = vpop.f32.mrf.mxu0
        %v2031 = vadd.f32 0.0, %v2030
        %v2032 = vpop.f32.mrf.mxu0
        %2033 = vmatprep.mubr.bf16.mxu0 0
        %2034 = vmatmul.mubr.bf16.gmra.mxu0 %v1943
        %v2035 = vpop.f32.mrf.mxu0
        %v2036 = vadd.f32 0.0, %v2035
        %v2037 = vpop.f32.mrf.mxu0
        %v2038 = vpop.f32.mrf.mxu0
        %v2039 = vadd.f32 0.0, %v2038
        %v2040 = vpop.f32.mrf.mxu0
        %2041 = vdwg.mxu0
        %v2042 = vadd.f32 %v1812, %v1980
        %v2043 = vadd.f32 %v1813, %v1983
        %v2044 = vadd.f32 %v1814, %v1988
        %v2045 = vadd.f32 %v1815, %v1991
        %v2046 = vadd.f32 %v1816, %v1996
        %v2047 = vadd.f32 %v1817, %v1999
        %v2048 = vadd.f32 %v1818, %v2004
        %v2049 = vadd.f32 %v1819, %v2007
        %v2050 = vadd.f32 %v1820, %v2012
        %v2051 = vadd.f32 %v1821, %v2015
        %v2052 = vadd.f32 %v1822, %v2020
        %v2053 = vadd.f32 %v1823, %v2023
        %v2054 = vadd.f32 %v1824, %v2028
        %v2055 = vadd.f32 %v1825, %v2031
        %v2056 = vadd.f32 %v1826, %v2036
        %v2057 = vadd.f32 %v1827, %v2039
        %v2058 = vld [vmem:[%s1831] sm:$0xf]
        %v2059 = vld [vmem:[%s1831 + $0x4] sm:$0xf]
        %v2060 = vld [vmem:[%s1831 + $0x8] sm:$0x1]
        %v2061 = vld [vmem:[%s1831 + $0xc] sm:$0xf]
        %v2062 = vld [vmem:[%s1831 + $0x10] sm:$0xf]
        %v2063 = vld [vmem:[%s1831 + $0x14] sm:$0x1]
        %v2064 = vld [vmem:[%s1831 + $0x18] sm:$0xf]
        %v2065 = vld [vmem:[%s1831 + $0x1c] sm:$0xf]
        %v2066 = vld [vmem:[%s1831 + $0x20] sm:$0x1]
        %v2067 = vld [vmem:[%s1831 + $0x24] sm:$0xf]
        %v2068 = vld [vmem:[%s1831 + $0x28] sm:$0xf]
        %v2069 = vld [vmem:[%s1831 + $0x2c] sm:$0x1]
        %v2070 = vld [vmem:[%s1831 + $0x30] sm:$0xf]
        %v2071 = vld [vmem:[%s1831 + $0x34] sm:$0xf]
        %v2072 = vld [vmem:[%s1831 + $0x38] sm:$0x1]
        %v2073 = vld [vmem:[%s1831 + $0x3c] sm:$0xf]
        %v2074 = vld [vmem:[%s1831 + $0x40] sm:$0xf]
        %v2075 = vld [vmem:[%s1831 + $0x44] sm:$0x1]
        %v2076 = vld [vmem:[%s1831 + $0x48] sm:$0xf]
        %v2077 = vld [vmem:[%s1831 + $0x4c] sm:$0xf]
        %v2078 = vld [vmem:[%s1831 + $0x50] sm:$0x1]
        %v2079 = vld [vmem:[%s1831 + $0x54] sm:$0xf]
        %v2080 = vld [vmem:[%s1831 + $0x58] sm:$0xf]
        %v2081 = vld [vmem:[%s1831 + $0x5c] sm:$0x1]
        %v2083 = vshrl.u32 %v2058, 16
        %v2085 = vrot.slane %v2083, 4
        %v2086 = vshll.u32 %v2058, 16
        %v2088 = vrot.slane %v2086, 5
        %v2089 = vor.u32 %v2085, %v2088
        %v2090 = vrot.slane %v2089, 4
        %v2092 = vshll.u32 %v2059, 16
        %v2094 = vrot.slane %v2092, 5
        %v2095 = vsel %vm994, %v2090, %v2094
        %v2096 = vshrl.u32 %v2059, 16
        %v2098 = vrot.slane %v2096, 4
        %v2099 = vor.u32 %v2098, %v2094
        %v2100 = vrot.slane %v2099, 4
        %v2102 = vshll.u32 %v2060, 16
        %v2104 = vrot.slane %v2102, 5
        %v2105 = vsel %vm994, %v2100, %v2104
        %v2107 = vshrl.u32 %v2061, 16
        %v2109 = vrot.slane %v2107, 4
        %v2110 = vshll.u32 %v2061, 16
        %v2112 = vrot.slane %v2110, 5
        %v2113 = vor.u32 %v2109, %v2112
        %v2114 = vrot.slane %v2113, 4
        %v2116 = vshll.u32 %v2062, 16
        %v2118 = vrot.slane %v2116, 5
        %v2119 = vsel %vm994, %v2114, %v2118
        %v2120 = vshrl.u32 %v2062, 16
        %v2122 = vrot.slane %v2120, 4
        %v2123 = vor.u32 %v2122, %v2118
        %v2124 = vrot.slane %v2123, 4
        %v2126 = vshll.u32 %v2063, 16
        %v2128 = vrot.slane %v2126, 5
        %v2129 = vsel %vm994, %v2124, %v2128
        %v2131 = vshrl.u32 %v2064, 16
        %v2133 = vrot.slane %v2131, 4
        %v2134 = vshll.u32 %v2064, 16
        %v2136 = vrot.slane %v2134, 5
        %v2137 = vor.u32 %v2133, %v2136
        %v2138 = vrot.slane %v2137, 4
        %v2140 = vshll.u32 %v2065, 16
        %v2142 = vrot.slane %v2140, 5
        %v2143 = vsel %vm994, %v2138, %v2142
        %v2144 = vshrl.u32 %v2065, 16
        %v2146 = vrot.slane %v2144, 4
        %v2147 = vor.u32 %v2146, %v2142
        %v2148 = vrot.slane %v2147, 4
        %v2150 = vshll.u32 %v2066, 16
        %v2152 = vrot.slane %v2150, 5
        %v2153 = vsel %vm994, %v2148, %v2152
        %v2155 = vshrl.u32 %v2067, 16
        %v2157 = vrot.slane %v2155, 4
        %v2158 = vshll.u32 %v2067, 16
        %v2160 = vrot.slane %v2158, 5
        %v2161 = vor.u32 %v2157, %v2160
        %v2162 = vrot.slane %v2161, 4
        %v2164 = vshll.u32 %v2068, 16
        %v2166 = vrot.slane %v2164, 5
        %v2167 = vsel %vm994, %v2162, %v2166
        %v2168 = vshrl.u32 %v2068, 16
        %v2170 = vrot.slane %v2168, 4
        %v2171 = vor.u32 %v2170, %v2166
        %v2172 = vrot.slane %v2171, 4
        %v2174 = vshll.u32 %v2069, 16
        %v2176 = vrot.slane %v2174, 5
        %v2177 = vsel %vm994, %v2172, %v2176
        %v2179 = vshrl.u32 %v2070, 16
        %v2181 = vrot.slane %v2179, 4
        %v2182 = vshll.u32 %v2070, 16
        %v2184 = vrot.slane %v2182, 5
        %v2185 = vor.u32 %v2181, %v2184
        %v2186 = vrot.slane %v2185, 4
        %v2188 = vshll.u32 %v2071, 16
        %v2190 = vrot.slane %v2188, 5
        %v2191 = vsel %vm994, %v2186, %v2190
        %v2192 = vshrl.u32 %v2071, 16
        %v2194 = vrot.slane %v2192, 4
        %v2195 = vor.u32 %v2194, %v2190
        %v2196 = vrot.slane %v2195, 4
        %v2198 = vshll.u32 %v2072, 16
        %v2200 = vrot.slane %v2198, 5
        %v2201 = vsel %vm994, %v2196, %v2200
        %v2203 = vshrl.u32 %v2073, 16
        %v2205 = vrot.slane %v2203, 4
        %v2206 = vshll.u32 %v2073, 16
        %v2208 = vrot.slane %v2206, 5
        %v2209 = vor.u32 %v2205, %v2208
        %v2210 = vrot.slane %v2209, 4
        %v2212 = vshll.u32 %v2074, 16
        %v2214 = vrot.slane %v2212, 5
        %v2215 = vsel %vm994, %v2210, %v2214
        %v2216 = vshrl.u32 %v2074, 16
        %v2218 = vrot.slane %v2216, 4
        %v2219 = vor.u32 %v2218, %v2214
        %v2220 = vrot.slane %v2219, 4
        %v2222 = vshll.u32 %v2075, 16
        %v2224 = vrot.slane %v2222, 5
        %v2225 = vsel %vm994, %v2220, %v2224
        %v2227 = vshrl.u32 %v2076, 16
        %v2229 = vrot.slane %v2227, 4
        %v2230 = vshll.u32 %v2076, 16
        %v2232 = vrot.slane %v2230, 5
        %v2233 = vor.u32 %v2229, %v2232
        %v2234 = vrot.slane %v2233, 4
        %v2236 = vshll.u32 %v2077, 16
        %v2238 = vrot.slane %v2236, 5
        %v2239 = vsel %vm994, %v2234, %v2238
        %v2240 = vshrl.u32 %v2077, 16
        %v2242 = vrot.slane %v2240, 4
        %v2243 = vor.u32 %v2242, %v2238
        %v2244 = vrot.slane %v2243, 4
        %v2246 = vshll.u32 %v2078, 16
        %v2248 = vrot.slane %v2246, 5
        %v2249 = vsel %vm994, %v2244, %v2248
        %v2251 = vshrl.u32 %v2079, 16
        %v2253 = vrot.slane %v2251, 4
        %v2254 = vshll.u32 %v2079, 16
        %v2256 = vrot.slane %v2254, 5
        %v2257 = vor.u32 %v2253, %v2256
        %v2258 = vrot.slane %v2257, 4
        %v2260 = vshll.u32 %v2080, 16
        %v2262 = vrot.slane %v2260, 5
        %v2263 = vsel %vm994, %v2258, %v2262
        %v2264 = vshrl.u32 %v2080, 16
        %v2266 = vrot.slane %v2264, 4
        %v2267 = vor.u32 %v2266, %v2262
        %v2268 = vrot.slane %v2267, 4
        %v2270 = vshll.u32 %v2081, 16
        %v2272 = vrot.slane %v2270, 5
        %v2273 = vsel %vm994, %v2268, %v2272
        %s2274 = scalar_lea.vmem %s3, 128
        %v2275 = vld [vmem:[%s2274] sm:$0xf]
        %v2276 = vld [vmem:[%s2274 + $0x4] sm:$0xf]
        %v2277 = vld [vmem:[%s2274 + $0x8] sm:$0xf]
        %v2278 = vld [vmem:[%s2274 + $0xc] sm:$0xf]
        %v2279 = vld [vmem:[%s2274 + $0x10] sm:$0xf]
        %v2280 = vld [vmem:[%s2274 + $0x14] sm:$0xf]
        %v2281 = vld [vmem:[%s2274 + $0x18] sm:$0xf]
        %v2282 = vld [vmem:[%s2274 + $0x1c] sm:$0xf]
        %v2283 = vunpack.c.l.b16 %v2095
        %v2284 = vunpack.c.l.b16 %v2105
        %v2285 = vunpack.c.l.b16 %v2119
        %v2286 = vunpack.c.l.b16 %v2129
        %v2287 = vunpack.c.l.b16 %v2143
        %v2288 = vunpack.c.l.b16 %v2153
        %v2289 = vunpack.c.l.b16 %v2167
        %v2290 = vunpack.c.l.b16 %v2177
        %v2291 = vunpack.c.l.b16 %v2191
        %v2292 = vunpack.c.l.b16 %v2201
        %v2293 = vunpack.c.l.b16 %v2215
        %v2294 = vunpack.c.l.b16 %v2225
        %v2295 = vunpack.c.l.b16 %v2239
        %v2296 = vunpack.c.l.b16 %v2249
        %v2297 = vunpack.c.l.b16 %v2263
        %v2298 = vunpack.c.l.b16 %v2273
        %v2299 = vpack.c.b16 %v2284, %v2283
        %v2300 = vpack.c.b16 %v2286, %v2285
        %v2301 = vpack.c.b16 %v2288, %v2287
        %v2302 = vpack.c.b16 %v2290, %v2289
        %v2303 = vpack.c.b16 %v2292, %v2291
        %v2304 = vpack.c.b16 %v2294, %v2293
        %v2305 = vpack.c.b16 %v2296, %v2295
        %v2306 = vpack.c.b16 %v2298, %v2297
        %v2315 = vunpack.c.l.b16 %v2275
        %v2316 = vunpack.c.l.b16 %v2276
        %v2317 = vunpack.c.l.b16 %v2277
        %v2318 = vunpack.c.l.b16 %v2278
        %v2319 = vunpack.c.l.b16 %v2279
        %v2320 = vunpack.c.l.b16 %v2280
        %v2321 = vunpack.c.l.b16 %v2281
        %v2322 = vunpack.c.l.b16 %v2282
        %v2323 = vpack.c.b16 %v2316, %v2315
        %v2324 = vpack.c.b16 %v2318, %v2317
        %v2325 = vpack.c.b16 %v2320, %v2319
        %v2326 = vpack.c.b16 %v2322, %v2321
        %v2332 = vsel %vm1244, %v2299, 0
        %v2335 = vsel %vm1244, %v2300, 0
        %v2338 = vsel %vm1244, %v2301, 0
        %v2341 = vsel %vm1244, %v2302, 0
        %v2344 = vsel %vm1244, %v2303, 0
        %v2347 = vsel %vm1244, %v2304, 0
        %v2350 = vsel %vm1244, %v2305, 0
        %v2353 = vsel %vm1244, %v2306, 0
        %2355 = vmatprep.subr.bf16.mxu0 0
        %2356 = vmatpush1.bf16.msra.mxu0 0
        %2357 = vmatprep.subr.bf16.mxu0 0
        %2358 = vmatpush1.bf16.msra.mxu0 0
        %2359 = vmatprep.subr.bf16.mxu0 0
        %2360 = vmatpush1.bf16.msra.mxu0 0
        %2361 = vmatprep.subr.bf16.mxu0 0
        %2362 = vmatpush1.bf16.msra.mxu0 0
        %2363 = vmatprep.subr.bf16.mxu0 0
        %2364 = vmatpush1.bf16.msra.mxu0 %v2326
        %2365 = vmatprep.subr.bf16.mxu0 0
        %2366 = vmatpush1.bf16.msra.mxu0 %v2325
        %2367 = vmatprep.subr.bf16.mxu0 0
        %2368 = vmatpush1.bf16.msra.mxu0 %v2324
        %2369 = vmatprep.subr.bf16.mxu0 0
        %2370 = vmatpush1.bf16.msra.mxu0 %v2323
        %2371 = vmatprep.subr.bf16.mxu0 0
        %2372 = vmatpush2.bf16.msra.mxu0 0
        %2373 = vmatprep.subr.bf16.mxu0 0
        %2374 = vmatpush2.bf16.msra.mxu0 0
        %2375 = vmatprep.subr.bf16.mxu0 0
        %2376 = vmatpush2.bf16.msra.mxu0 0
        %2377 = vmatprep.subr.bf16.mxu0 0
        %2378 = vmatpush2.bf16.msra.mxu0 0
        %2379 = vmatprep.subr.bf16.mxu0 0
        %2380 = vmatpush2.bf16.msra.mxu0 0
        %2381 = vmatprep.subr.bf16.mxu0 0
        %2382 = vmatpush2.bf16.msra.mxu0 0
        %2383 = vmatprep.subr.bf16.mxu0 0
        %2384 = vmatpush2.bf16.msra.mxu0 0
        %2385 = vmatprep.subr.bf16.mxu0 0
        %2386 = vmatpush2.bf16.msra.mxu0 0
        %2387 = vmatprep.mubr.bf16.mxu0 0
        %2388 = vmatmul.mubr.bf16.gmra.mxu0 %v2332
        %v2389 = vpop.f32.mrf.mxu0
        %v2390 = vadd.f32 0.0, %v2389
        %v2391 = vpop.f32.mrf.mxu0
        %v2392 = vpop.f32.mrf.mxu0
        %v2393 = vadd.f32 0.0, %v2392
        %v2394 = vpop.f32.mrf.mxu0
        %2395 = vmatprep.mubr.bf16.mxu0 0
        %2396 = vmatmul.mubr.bf16.gmra.mxu0 %v2335
        %v2397 = vpop.f32.mrf.mxu0
        %v2398 = vadd.f32 0.0, %v2397
        %v2399 = vpop.f32.mrf.mxu0
        %v2400 = vpop.f32.mrf.mxu0
        %v2401 = vadd.f32 0.0, %v2400
        %v2402 = vpop.f32.mrf.mxu0
        %2403 = vmatprep.mubr.bf16.mxu0 0
        %2404 = vmatmul.mubr.bf16.gmra.mxu0 %v2338
        %v2405 = vpop.f32.mrf.mxu0
        %v2406 = vadd.f32 0.0, %v2405
        %v2407 = vpop.f32.mrf.mxu0
        %v2408 = vpop.f32.mrf.mxu0
        %v2409 = vadd.f32 0.0, %v2408
        %v2410 = vpop.f32.mrf.mxu0
        %2411 = vmatprep.mubr.bf16.mxu0 0
        %2412 = vmatmul.mubr.bf16.gmra.mxu0 %v2341
        %v2413 = vpop.f32.mrf.mxu0
        %v2414 = vadd.f32 0.0, %v2413
        %v2415 = vpop.f32.mrf.mxu0
        %v2416 = vpop.f32.mrf.mxu0
        %v2417 = vadd.f32 0.0, %v2416
        %v2418 = vpop.f32.mrf.mxu0
        %2419 = vmatprep.mubr.bf16.mxu0 0
        %2420 = vmatmul.mubr.bf16.gmra.mxu0 %v2344
        %v2421 = vpop.f32.mrf.mxu0
        %v2422 = vadd.f32 0.0, %v2421
        %v2423 = vpop.f32.mrf.mxu0
        %v2424 = vpop.f32.mrf.mxu0
        %v2425 = vadd.f32 0.0, %v2424
        %v2426 = vpop.f32.mrf.mxu0
        %2427 = vmatprep.mubr.bf16.mxu0 0
        %2428 = vmatmul.mubr.bf16.gmra.mxu0 %v2347
        %v2429 = vpop.f32.mrf.mxu0
        %v2430 = vadd.f32 0.0, %v2429
        %v2431 = vpop.f32.mrf.mxu0
        %v2432 = vpop.f32.mrf.mxu0
        %v2433 = vadd.f32 0.0, %v2432
        %v2434 = vpop.f32.mrf.mxu0
        %2435 = vmatprep.mubr.bf16.mxu0 0
        %2436 = vmatmul.mubr.bf16.gmra.mxu0 %v2350
        %v2437 = vpop.f32.mrf.mxu0
        %v2438 = vadd.f32 0.0, %v2437
        %v2439 = vpop.f32.mrf.mxu0
        %v2440 = vpop.f32.mrf.mxu0
        %v2441 = vadd.f32 0.0, %v2440
        %v2442 = vpop.f32.mrf.mxu0
        %2443 = vmatprep.mubr.bf16.mxu0 0
        %2444 = vmatmul.mubr.bf16.gmra.mxu0 %v2353
        %v2445 = vpop.f32.mrf.mxu0
        %v2446 = vadd.f32 0.0, %v2445
        %v2447 = vpop.f32.mrf.mxu0
        %v2448 = vpop.f32.mrf.mxu0
        %v2449 = vadd.f32 0.0, %v2448
        %v2450 = vpop.f32.mrf.mxu0
        %2451 = vdwg.mxu0
        %v2452 = vadd.f32 %v2042, %v2390
        %v2453 = vadd.f32 %v2043, %v2393
        %v2454 = vadd.f32 %v2044, %v2398
        %v2455 = vadd.f32 %v2045, %v2401
        %v2456 = vadd.f32 %v2046, %v2406
        %v2457 = vadd.f32 %v2047, %v2409
        %v2458 = vadd.f32 %v2048, %v2414
        %v2459 = vadd.f32 %v2049, %v2417
        %v2460 = vadd.f32 %v2050, %v2422
        %v2461 = vadd.f32 %v2051, %v2425
        %v2462 = vadd.f32 %v2052, %v2430
        %v2463 = vadd.f32 %v2053, %v2433
        %v2464 = vadd.f32 %v2054, %v2438
        %v2465 = vadd.f32 %v2055, %v2441
        %v2466 = vadd.f32 %v2056, %v2446
        %v2467 = vadd.f32 %v2057, %v2449
        %v2468 = vld [vmem:[%s1831] sm:$0xe]
        %v2469 = vld [vmem:[%s1831 + $0xc] sm:$0xe]
        %v2470 = vld [vmem:[%s1831 + $0x18] sm:$0xe]
        %v2471 = vld [vmem:[%s1831 + $0x24] sm:$0xe]
        %v2472 = vld [vmem:[%s1831 + $0x30] sm:$0xe]
        %v2473 = vld [vmem:[%s1831 + $0x3c] sm:$0xe]
        %v2474 = vld [vmem:[%s1831 + $0x48] sm:$0xe]
        %v2475 = vld [vmem:[%s1831 + $0x54] sm:$0xe]
        %v2500 = vrot.slane %v2468, 5
        %v2501 = vrot.slane %v2500, 4
        %v2502 = vrot.slane %v2059, 5
        %v2503 = vsel %vm1577, %v2501, %v2502
        %v2504 = vrot.slane %v2502, 4
        %v2505 = vrot.slane %v2060, 5
        %v2506 = vsel %vm1577, %v2504, %v2505
        %v2507 = vrot.slane %v2469, 5
        %v2508 = vrot.slane %v2507, 4
        %v2509 = vrot.slane %v2062, 5
        %v2510 = vsel %vm1577, %v2508, %v2509
        %v2511 = vrot.slane %v2509, 4
        %v2512 = vrot.slane %v2063, 5
        %v2513 = vsel %vm1577, %v2511, %v2512
        %v2514 = vrot.slane %v2470, 5
        %v2515 = vrot.slane %v2514, 4
        %v2516 = vrot.slane %v2065, 5
        %v2517 = vsel %vm1577, %v2515, %v2516
        %v2518 = vrot.slane %v2516, 4
        %v2519 = vrot.slane %v2066, 5
        %v2520 = vsel %vm1577, %v2518, %v2519
        %v2521 = vrot.slane %v2471, 5
        %v2522 = vrot.slane %v2521, 4
        %v2523 = vrot.slane %v2068, 5
        %v2524 = vsel %vm1577, %v2522, %v2523
        %v2525 = vrot.slane %v2523, 4
        %v2526 = vrot.slane %v2069, 5
        %v2527 = vsel %vm1577, %v2525, %v2526
        %v2528 = vrot.slane %v2472, 5
        %v2529 = vrot.slane %v2528, 4
        %v2530 = vrot.slane %v2071, 5
        %v2531 = vsel %vm1577, %v2529, %v2530
        %v2532 = vrot.slane %v2530, 4
        %v2533 = vrot.slane %v2072, 5
        %v2534 = vsel %vm1577, %v2532, %v2533
        %v2535 = vrot.slane %v2473, 5
        %v2536 = vrot.slane %v2535, 4
        %v2537 = vrot.slane %v2074, 5
        %v2538 = vsel %vm1577, %v2536, %v2537
        %v2539 = vrot.slane %v2537, 4
        %v2540 = vrot.slane %v2075, 5
        %v2541 = vsel %vm1577, %v2539, %v2540
        %v2542 = vrot.slane %v2474, 5
        %v2543 = vrot.slane %v2542, 4
        %v2544 = vrot.slane %v2077, 5
        %v2545 = vsel %vm1577, %v2543, %v2544
        %v2546 = vrot.slane %v2544, 4
        %v2547 = vrot.slane %v2078, 5
        %v2548 = vsel %vm1577, %v2546, %v2547
        %v2549 = vrot.slane %v2475, 5
        %v2550 = vrot.slane %v2549, 4
        %v2551 = vrot.slane %v2080, 5
        %v2552 = vsel %vm1577, %v2550, %v2551
        %v2553 = vrot.slane %v2551, 4
        %v2554 = vrot.slane %v2081, 5
        %v2555 = vsel %vm1577, %v2553, %v2554
        %s2556 = scalar_lea.vmem %s3, 160
        %v2557 = vld [vmem:[%s2556] sm:$0xf]
        %v2558 = vld [vmem:[%s2556 + $0x4] sm:$0xf]
        %v2559 = vld [vmem:[%s2556 + $0x8] sm:$0xf]
        %v2560 = vld [vmem:[%s2556 + $0xc] sm:$0xf]
        %v2561 = vld [vmem:[%s2556 + $0x10] sm:$0xf]
        %v2562 = vld [vmem:[%s2556 + $0x14] sm:$0xf]
        %v2563 = vld [vmem:[%s2556 + $0x18] sm:$0xf]
        %v2564 = vld [vmem:[%s2556 + $0x1c] sm:$0xf]
        %v2565 = vunpack.c.l.b16 %v2503
        %v2566 = vunpack.c.l.b16 %v2506
        %v2567 = vunpack.c.l.b16 %v2510
        %v2568 = vunpack.c.l.b16 %v2513
        %v2569 = vunpack.c.l.b16 %v2517
        %v2570 = vunpack.c.l.b16 %v2520
        %v2571 = vunpack.c.l.b16 %v2524
        %v2572 = vunpack.c.l.b16 %v2527
        %v2573 = vunpack.c.l.b16 %v2531
        %v2574 = vunpack.c.l.b16 %v2534
        %v2575 = vunpack.c.l.b16 %v2538
        %v2576 = vunpack.c.l.b16 %v2541
        %v2577 = vunpack.c.l.b16 %v2545
        %v2578 = vunpack.c.l.b16 %v2548
        %v2579 = vunpack.c.l.b16 %v2552
        %v2580 = vunpack.c.l.b16 %v2555
        %v2581 = vpack.c.b16 %v2566, %v2565
        %v2582 = vpack.c.b16 %v2568, %v2567
        %v2583 = vpack.c.b16 %v2570, %v2569
        %v2584 = vpack.c.b16 %v2572, %v2571
        %v2585 = vpack.c.b16 %v2574, %v2573
        %v2586 = vpack.c.b16 %v2576, %v2575
        %v2587 = vpack.c.b16 %v2578, %v2577
        %v2588 = vpack.c.b16 %v2580, %v2579
        %v2597 = vunpack.c.l.b16 %v2557
        %v2598 = vunpack.c.l.b16 %v2558
        %v2599 = vunpack.c.l.b16 %v2559
        %v2600 = vunpack.c.l.b16 %v2560
        %v2601 = vunpack.c.l.b16 %v2561
        %v2602 = vunpack.c.l.b16 %v2562
        %v2603 = vunpack.c.l.b16 %v2563
        %v2604 = vunpack.c.l.b16 %v2564
        %v2605 = vpack.c.b16 %v2598, %v2597
        %v2606 = vpack.c.b16 %v2600, %v2599
        %v2607 = vpack.c.b16 %v2602, %v2601
        %v2608 = vpack.c.b16 %v2604, %v2603
        %v2614 = vsel %vm1244, %v2581, 0
        %v2617 = vsel %vm1244, %v2582, 0
        %v2620 = vsel %vm1244, %v2583, 0
        %v2623 = vsel %vm1244, %v2584, 0
        %v2626 = vsel %vm1244, %v2585, 0
        %v2629 = vsel %vm1244, %v2586, 0
        %v2632 = vsel %vm1244, %v2587, 0
        %v2635 = vsel %vm1244, %v2588, 0
        %2637 = vmatprep.subr.bf16.mxu0 0
        %2638 = vmatpush1.bf16.msra.mxu0 0
        %2639 = vmatprep.subr.bf16.mxu0 0
        %2640 = vmatpush1.bf16.msra.mxu0 0
        %2641 = vmatprep.subr.bf16.mxu0 0
        %2642 = vmatpush1.bf16.msra.mxu0 0
        %2643 = vmatprep.subr.bf16.mxu0 0
        %2644 = vmatpush1.bf16.msra.mxu0 0
        %2645 = vmatprep.subr.bf16.mxu0 0
        %2646 = vmatpush1.bf16.msra.mxu0 %v2608
        %2647 = vmatprep.subr.bf16.mxu0 0
        %2648 = vmatpush1.bf16.msra.mxu0 %v2607
        %2649 = vmatprep.subr.bf16.mxu0 0
        %2650 = vmatpush1.bf16.msra.mxu0 %v2606
        %2651 = vmatprep.subr.bf16.mxu0 0
        %2652 = vmatpush1.bf16.msra.mxu0 %v2605
        %2653 = vmatprep.subr.bf16.mxu0 0
        %2654 = vmatpush2.bf16.msra.mxu0 0
        %2655 = vmatprep.subr.bf16.mxu0 0
        %2656 = vmatpush2.bf16.msra.mxu0 0
        %2657 = vmatprep.subr.bf16.mxu0 0
        %2658 = vmatpush2.bf16.msra.mxu0 0
        %2659 = vmatprep.subr.bf16.mxu0 0
        %2660 = vmatpush2.bf16.msra.mxu0 0
        %2661 = vmatprep.subr.bf16.mxu0 0
        %2662 = vmatpush2.bf16.msra.mxu0 0
        %2663 = vmatprep.subr.bf16.mxu0 0
        %2664 = vmatpush2.bf16.msra.mxu0 0
        %2665 = vmatprep.subr.bf16.mxu0 0
        %2666 = vmatpush2.bf16.msra.mxu0 0
        %2667 = vmatprep.subr.bf16.mxu0 0
        %2668 = vmatpush2.bf16.msra.mxu0 0
        %2669 = vmatprep.mubr.bf16.mxu0 0
        %2670 = vmatmul.mubr.bf16.gmra.mxu0 %v2614
        %v2671 = vpop.f32.mrf.mxu0
        %v2672 = vadd.f32 0.0, %v2671
        %v2673 = vpop.f32.mrf.mxu0
        %v2674 = vpop.f32.mrf.mxu0
        %v2675 = vadd.f32 0.0, %v2674
        %v2676 = vpop.f32.mrf.mxu0
        %2677 = vmatprep.mubr.bf16.mxu0 0
        %2678 = vmatmul.mubr.bf16.gmra.mxu0 %v2617
        %v2679 = vpop.f32.mrf.mxu0
        %v2680 = vadd.f32 0.0, %v2679
        %v2681 = vpop.f32.mrf.mxu0
        %v2682 = vpop.f32.mrf.mxu0
        %v2683 = vadd.f32 0.0, %v2682
        %v2684 = vpop.f32.mrf.mxu0
        %2685 = vmatprep.mubr.bf16.mxu0 0
        %2686 = vmatmul.mubr.bf16.gmra.mxu0 %v2620
        %v2687 = vpop.f32.mrf.mxu0
        %v2688 = vadd.f32 0.0, %v2687
        %v2689 = vpop.f32.mrf.mxu0
        %v2690 = vpop.f32.mrf.mxu0
        %v2691 = vadd.f32 0.0, %v2690
        %v2692 = vpop.f32.mrf.mxu0
        %2693 = vmatprep.mubr.bf16.mxu0 0
        %2694 = vmatmul.mubr.bf16.gmra.mxu0 %v2623
        %v2695 = vpop.f32.mrf.mxu0
        %v2696 = vadd.f32 0.0, %v2695
        %v2697 = vpop.f32.mrf.mxu0
        %v2698 = vpop.f32.mrf.mxu0
        %v2699 = vadd.f32 0.0, %v2698
        %v2700 = vpop.f32.mrf.mxu0
        %2701 = vmatprep.mubr.bf16.mxu0 0
        %2702 = vmatmul.mubr.bf16.gmra.mxu0 %v2626
        %v2703 = vpop.f32.mrf.mxu0
        %v2704 = vadd.f32 0.0, %v2703
        %v2705 = vpop.f32.mrf.mxu0
        %v2706 = vpop.f32.mrf.mxu0
        %v2707 = vadd.f32 0.0, %v2706
        %v2708 = vpop.f32.mrf.mxu0
        %2709 = vmatprep.mubr.bf16.mxu0 0
        %2710 = vmatmul.mubr.bf16.gmra.mxu0 %v2629
        %v2711 = vpop.f32.mrf.mxu0
        %v2712 = vadd.f32 0.0, %v2711
        %v2713 = vpop.f32.mrf.mxu0
        %v2714 = vpop.f32.mrf.mxu0
        %v2715 = vadd.f32 0.0, %v2714
        %v2716 = vpop.f32.mrf.mxu0
        %2717 = vmatprep.mubr.bf16.mxu0 0
        %2718 = vmatmul.mubr.bf16.gmra.mxu0 %v2632
        %v2719 = vpop.f32.mrf.mxu0
        %v2720 = vadd.f32 0.0, %v2719
        %v2721 = vpop.f32.mrf.mxu0
        %v2722 = vpop.f32.mrf.mxu0
        %v2723 = vadd.f32 0.0, %v2722
        %v2724 = vpop.f32.mrf.mxu0
        %2725 = vmatprep.mubr.bf16.mxu0 0
        %2726 = vmatmul.mubr.bf16.gmra.mxu0 %v2635
        %v2727 = vpop.f32.mrf.mxu0
        %v2728 = vadd.f32 0.0, %v2727
        %v2729 = vpop.f32.mrf.mxu0
        %v2730 = vpop.f32.mrf.mxu0
        %v2731 = vadd.f32 0.0, %v2730
        %v2732 = vpop.f32.mrf.mxu0
        %2733 = vdwg.mxu0
        %v2734 = vadd.f32 %v2452, %v2672
        %v2735 = vadd.f32 %v2453, %v2675
        %v2736 = vadd.f32 %v2454, %v2680
        %v2737 = vadd.f32 %v2455, %v2683
        %v2738 = vadd.f32 %v2456, %v2688
        %v2739 = vadd.f32 %v2457, %v2691
        %v2740 = vadd.f32 %v2458, %v2696
        %v2741 = vadd.f32 %v2459, %v2699
        %v2742 = vadd.f32 %v2460, %v2704
        %v2743 = vadd.f32 %v2461, %v2707
        %v2744 = vadd.f32 %v2462, %v2712
        %v2745 = vadd.f32 %v2463, %v2715
        %v2746 = vadd.f32 %v2464, %v2720
        %v2747 = vadd.f32 %v2465, %v2723
        %v2748 = vadd.f32 %v2466, %v2728
        %v2749 = vadd.f32 %v2467, %v2731
        %s2750 = sadd.s32 %s956, 2
        %s2751 = smul.u32 %s2750, 3
        %s2752 = smul.addr %s2751, 4
        %s2753 = scalar_lea.vmem [#allocation2], %s2752
        %v2754 = vld [vmem:[%s2753] sm:$0xf]
        %v2755 = vld [vmem:[%s2753 + $0x4] sm:$0xf]
        %v2756 = vld [vmem:[%s2753 + $0xc] sm:$0xf]
        %v2757 = vld [vmem:[%s2753 + $0x10] sm:$0xf]
        %v2758 = vld [vmem:[%s2753 + $0x18] sm:$0xf]
        %v2759 = vld [vmem:[%s2753 + $0x1c] sm:$0xf]
        %v2760 = vld [vmem:[%s2753 + $0x24] sm:$0xf]
        %v2761 = vld [vmem:[%s2753 + $0x28] sm:$0xf]
        %v2762 = vld [vmem:[%s2753 + $0x30] sm:$0xf]
        %v2763 = vld [vmem:[%s2753 + $0x34] sm:$0xf]
        %v2764 = vld [vmem:[%s2753 + $0x3c] sm:$0xf]
        %v2765 = vld [vmem:[%s2753 + $0x40] sm:$0xf]
        %v2766 = vld [vmem:[%s2753 + $0x48] sm:$0xf]
        %v2767 = vld [vmem:[%s2753 + $0x4c] sm:$0xf]
        %v2768 = vld [vmem:[%s2753 + $0x54] sm:$0xf]
        %v2769 = vld [vmem:[%s2753 + $0x58] sm:$0xf]
        %s2770 = scalar_lea.vmem %s3, 192
        %v2771 = vld [vmem:[%s2770] sm:$0xf]
        %v2772 = vld [vmem:[%s2770 + $0x4] sm:$0xf]
        %v2773 = vld [vmem:[%s2770 + $0x8] sm:$0xf]
        %v2774 = vld [vmem:[%s2770 + $0xc] sm:$0xf]
        %v2775 = vld [vmem:[%s2770 + $0x10] sm:$0xf]
        %v2776 = vld [vmem:[%s2770 + $0x14] sm:$0xf]
        %v2777 = vld [vmem:[%s2770 + $0x18] sm:$0xf]
        %v2778 = vld [vmem:[%s2770 + $0x1c] sm:$0xf]
        %v2795 = vunpack.c.l.b16 %v2754
        %v2796 = vunpack.c.l.b16 %v2755
        %v2797 = vunpack.c.l.b16 %v2756
        %v2798 = vunpack.c.l.b16 %v2757
        %v2799 = vunpack.c.l.b16 %v2758
        %v2800 = vunpack.c.l.b16 %v2759
        %v2801 = vunpack.c.l.b16 %v2760
        %v2802 = vunpack.c.l.b16 %v2761
        %v2803 = vunpack.c.l.b16 %v2762
        %v2804 = vunpack.c.l.b16 %v2763
        %v2805 = vunpack.c.l.b16 %v2764
        %v2806 = vunpack.c.l.b16 %v2765
        %v2807 = vunpack.c.l.b16 %v2766
        %v2808 = vunpack.c.l.b16 %v2767
        %v2809 = vunpack.c.l.b16 %v2768
        %v2810 = vunpack.c.l.b16 %v2769
        %v2811 = vpack.c.b16 %v2796, %v2795
        %v2812 = vpack.c.b16 %v2798, %v2797
        %v2813 = vpack.c.b16 %v2800, %v2799
        %v2814 = vpack.c.b16 %v2802, %v2801
        %v2815 = vpack.c.b16 %v2804, %v2803
        %v2816 = vpack.c.b16 %v2806, %v2805
        %v2817 = vpack.c.b16 %v2808, %v2807
        %v2818 = vpack.c.b16 %v2810, %v2809
        %v2827 = vunpack.c.l.b16 %v2771
        %v2828 = vunpack.c.l.b16 %v2772
        %v2829 = vunpack.c.l.b16 %v2773
        %v2830 = vunpack.c.l.b16 %v2774
        %v2831 = vunpack.c.l.b16 %v2775
        %v2832 = vunpack.c.l.b16 %v2776
        %v2833 = vunpack.c.l.b16 %v2777
        %v2834 = vunpack.c.l.b16 %v2778
        %v2835 = vpack.c.b16 %v2828, %v2827
        %v2836 = vpack.c.b16 %v2830, %v2829
        %v2837 = vpack.c.b16 %v2832, %v2831
        %v2838 = vpack.c.b16 %v2834, %v2833
        %v2844 = vsel %vm1244, %v2811, 0
        %v2847 = vsel %vm1244, %v2812, 0
        %v2850 = vsel %vm1244, %v2813, 0
        %v2853 = vsel %vm1244, %v2814, 0
        %v2856 = vsel %vm1244, %v2815, 0
        %v2859 = vsel %vm1244, %v2816, 0
        %v2862 = vsel %vm1244, %v2817, 0
        %v2865 = vsel %vm1244, %v2818, 0
        %2867 = vmatprep.subr.bf16.mxu0 0
        %2868 = vmatpush1.bf16.msra.mxu0 0
        %2869 = vmatprep.subr.bf16.mxu0 0
        %2870 = vmatpush1.bf16.msra.mxu0 0
        %2871 = vmatprep.subr.bf16.mxu0 0
        %2872 = vmatpush1.bf16.msra.mxu0 0
        %2873 = vmatprep.subr.bf16.mxu0 0
        %2874 = vmatpush1.bf16.msra.mxu0 0
        %2875 = vmatprep.subr.bf16.mxu0 0
        %2876 = vmatpush1.bf16.msra.mxu0 %v2838
        %2877 = vmatprep.subr.bf16.mxu0 0
        %2878 = vmatpush1.bf16.msra.mxu0 %v2837
        %2879 = vmatprep.subr.bf16.mxu0 0
        %2880 = vmatpush1.bf16.msra.mxu0 %v2836
        %2881 = vmatprep.subr.bf16.mxu0 0
        %2882 = vmatpush1.bf16.msra.mxu0 %v2835
        %2883 = vmatprep.subr.bf16.mxu0 0
        %2884 = vmatpush2.bf16.msra.mxu0 0
        %2885 = vmatprep.subr.bf16.mxu0 0
        %2886 = vmatpush2.bf16.msra.mxu0 0
        %2887 = vmatprep.subr.bf16.mxu0 0
        %2888 = vmatpush2.bf16.msra.mxu0 0
        %2889 = vmatprep.subr.bf16.mxu0 0
        %2890 = vmatpush2.bf16.msra.mxu0 0
        %2891 = vmatprep.subr.bf16.mxu0 0
        %2892 = vmatpush2.bf16.msra.mxu0 0
        %2893 = vmatprep.subr.bf16.mxu0 0
        %2894 = vmatpush2.bf16.msra.mxu0 0
        %2895 = vmatprep.subr.bf16.mxu0 0
        %2896 = vmatpush2.bf16.msra.mxu0 0
        %2897 = vmatprep.subr.bf16.mxu0 0
        %2898 = vmatpush2.bf16.msra.mxu0 0
        %2899 = vmatprep.mubr.bf16.mxu0 0
        %2900 = vmatmul.mubr.bf16.gmra.mxu0 %v2844
        %v2901 = vpop.f32.mrf.mxu0
        %v2902 = vadd.f32 0.0, %v2901
        %v2903 = vpop.f32.mrf.mxu0
        %v2904 = vpop.f32.mrf.mxu0
        %v2905 = vadd.f32 0.0, %v2904
        %v2906 = vpop.f32.mrf.mxu0
        %2907 = vmatprep.mubr.bf16.mxu0 0
        %2908 = vmatmul.mubr.bf16.gmra.mxu0 %v2847
        %v2909 = vpop.f32.mrf.mxu0
        %v2910 = vadd.f32 0.0, %v2909
        %v2911 = vpop.f32.mrf.mxu0
        %v2912 = vpop.f32.mrf.mxu0
        %v2913 = vadd.f32 0.0, %v2912
        %v2914 = vpop.f32.mrf.mxu0
        %2915 = vmatprep.mubr.bf16.mxu0 0
        %2916 = vmatmul.mubr.bf16.gmra.mxu0 %v2850
        %v2917 = vpop.f32.mrf.mxu0
        %v2918 = vadd.f32 0.0, %v2917
        %v2919 = vpop.f32.mrf.mxu0
        %v2920 = vpop.f32.mrf.mxu0
        %v2921 = vadd.f32 0.0, %v2920
        %v2922 = vpop.f32.mrf.mxu0
        %2923 = vmatprep.mubr.bf16.mxu0 0
        %2924 = vmatmul.mubr.bf16.gmra.mxu0 %v2853
        %v2925 = vpop.f32.mrf.mxu0
        %v2926 = vadd.f32 0.0, %v2925
        %v2927 = vpop.f32.mrf.mxu0
        %v2928 = vpop.f32.mrf.mxu0
        %v2929 = vadd.f32 0.0, %v2928
        %v2930 = vpop.f32.mrf.mxu0
        %2931 = vmatprep.mubr.bf16.mxu0 0
        %2932 = vmatmul.mubr.bf16.gmra.mxu0 %v2856
        %v2933 = vpop.f32.mrf.mxu0
        %v2934 = vadd.f32 0.0, %v2933
        %v2935 = vpop.f32.mrf.mxu0
        %v2936 = vpop.f32.mrf.mxu0
        %v2937 = vadd.f32 0.0, %v2936
        %v2938 = vpop.f32.mrf.mxu0
        %2939 = vmatprep.mubr.bf16.mxu0 0
        %2940 = vmatmul.mubr.bf16.gmra.mxu0 %v2859
        %v2941 = vpop.f32.mrf.mxu0
        %v2942 = vadd.f32 0.0, %v2941
        %v2943 = vpop.f32.mrf.mxu0
        %v2944 = vpop.f32.mrf.mxu0
        %v2945 = vadd.f32 0.0, %v2944
        %v2946 = vpop.f32.mrf.mxu0
        %2947 = vmatprep.mubr.bf16.mxu0 0
        %2948 = vmatmul.mubr.bf16.gmra.mxu0 %v2862
        %v2949 = vpop.f32.mrf.mxu0
        %v2950 = vadd.f32 0.0, %v2949
        %v2951 = vpop.f32.mrf.mxu0
        %v2952 = vpop.f32.mrf.mxu0
        %v2953 = vadd.f32 0.0, %v2952
        %v2954 = vpop.f32.mrf.mxu0
        %2955 = vmatprep.mubr.bf16.mxu0 0
        %2956 = vmatmul.mubr.bf16.gmra.mxu0 %v2865
        %v2957 = vpop.f32.mrf.mxu0
        %v2958 = vadd.f32 0.0, %v2957
        %v2959 = vpop.f32.mrf.mxu0
        %v2960 = vpop.f32.mrf.mxu0
        %v2961 = vadd.f32 0.0, %v2960
        %v2962 = vpop.f32.mrf.mxu0
        %2963 = vdwg.mxu0
        %v2964 = vadd.f32 %v2734, %v2902
        %v2965 = vadd.f32 %v2735, %v2905
        %v2966 = vadd.f32 %v2736, %v2910
        %v2967 = vadd.f32 %v2737, %v2913
        %v2968 = vadd.f32 %v2738, %v2918
        %v2969 = vadd.f32 %v2739, %v2921
        %v2970 = vadd.f32 %v2740, %v2926
        %v2971 = vadd.f32 %v2741, %v2929
        %v2972 = vadd.f32 %v2742, %v2934
        %v2973 = vadd.f32 %v2743, %v2937
        %v2974 = vadd.f32 %v2744, %v2942
        %v2975 = vadd.f32 %v2745, %v2945
        %v2976 = vadd.f32 %v2746, %v2950
        %v2977 = vadd.f32 %v2747, %v2953
        %v2978 = vadd.f32 %v2748, %v2958
        %v2979 = vadd.f32 %v2749, %v2961
        %v2980 = vld [vmem:[%s2753] sm:$0xf]
        %v2981 = vld [vmem:[%s2753 + $0x4] sm:$0xf]
        %v2982 = vld [vmem:[%s2753 + $0x8] sm:$0x1]
        %v2983 = vld [vmem:[%s2753 + $0xc] sm:$0xf]
        %v2984 = vld [vmem:[%s2753 + $0x10] sm:$0xf]
        %v2985 = vld [vmem:[%s2753 + $0x14] sm:$0x1]
        %v2986 = vld [vmem:[%s2753 + $0x18] sm:$0xf]
        %v2987 = vld [vmem:[%s2753 + $0x1c] sm:$0xf]
        %v2988 = vld [vmem:[%s2753 + $0x20] sm:$0x1]
        %v2989 = vld [vmem:[%s2753 + $0x24] sm:$0xf]
        %v2990 = vld [vmem:[%s2753 + $0x28] sm:$0xf]
        %v2991 = vld [vmem:[%s2753 + $0x2c] sm:$0x1]
        %v2992 = vld [vmem:[%s2753 + $0x30] sm:$0xf]
        %v2993 = vld [vmem:[%s2753 + $0x34] sm:$0xf]
        %v2994 = vld [vmem:[%s2753 + $0x38] sm:$0x1]
        %v2995 = vld [vmem:[%s2753 + $0x3c] sm:$0xf]
        %v2996 = vld [vmem:[%s2753 + $0x40] sm:$0xf]
        %v2997 = vld [vmem:[%s2753 + $0x44] sm:$0x1]
        %v2998 = vld [vmem:[%s2753 + $0x48] sm:$0xf]
        %v2999 = vld [vmem:[%s2753 + $0x4c] sm:$0xf]
        %v3000 = vld [vmem:[%s2753 + $0x50] sm:$0x1]
        %v3001 = vld [vmem:[%s2753 + $0x54] sm:$0xf]
        %v3002 = vld [vmem:[%s2753 + $0x58] sm:$0xf]
        %v3003 = vld [vmem:[%s2753 + $0x5c] sm:$0x1]
        %v3005 = vshrl.u32 %v2980, 16
        %v3007 = vrot.slane %v3005, 4
        %v3008 = vshll.u32 %v2980, 16
        %v3010 = vrot.slane %v3008, 5
        %v3011 = vor.u32 %v3007, %v3010
        %v3012 = vrot.slane %v3011, 4
        %v3014 = vshll.u32 %v2981, 16
        %v3016 = vrot.slane %v3014, 5
        %v3017 = vsel %vm994, %v3012, %v3016
        %v3018 = vshrl.u32 %v2981, 16
        %v3020 = vrot.slane %v3018, 4
        %v3021 = vor.u32 %v3020, %v3016
        %v3022 = vrot.slane %v3021, 4
        %v3024 = vshll.u32 %v2982, 16
        %v3026 = vrot.slane %v3024, 5
        %v3027 = vsel %vm994, %v3022, %v3026
        %v3029 = vshrl.u32 %v2983, 16
        %v3031 = vrot.slane %v3029, 4
        %v3032 = vshll.u32 %v2983, 16
        %v3034 = vrot.slane %v3032, 5
        %v3035 = vor.u32 %v3031, %v3034
        %v3036 = vrot.slane %v3035, 4
        %v3038 = vshll.u32 %v2984, 16
        %v3040 = vrot.slane %v3038, 5
        %v3041 = vsel %vm994, %v3036, %v3040
        %v3042 = vshrl.u32 %v2984, 16
        %v3044 = vrot.slane %v3042, 4
        %v3045 = vor.u32 %v3044, %v3040
        %v3046 = vrot.slane %v3045, 4
        %v3048 = vshll.u32 %v2985, 16
        %v3050 = vrot.slane %v3048, 5
        %v3051 = vsel %vm994, %v3046, %v3050
        %v3053 = vshrl.u32 %v2986, 16
        %v3055 = vrot.slane %v3053, 4
        %v3056 = vshll.u32 %v2986, 16
        %v3058 = vrot.slane %v3056, 5
        %v3059 = vor.u32 %v3055, %v3058
        %v3060 = vrot.slane %v3059, 4
        %v3062 = vshll.u32 %v2987, 16
        %v3064 = vrot.slane %v3062, 5
        %v3065 = vsel %vm994, %v3060, %v3064
        %v3066 = vshrl.u32 %v2987, 16
        %v3068 = vrot.slane %v3066, 4
        %v3069 = vor.u32 %v3068, %v3064
        %v3070 = vrot.slane %v3069, 4
        %v3072 = vshll.u32 %v2988, 16
        %v3074 = vrot.slane %v3072, 5
        %v3075 = vsel %vm994, %v3070, %v3074
        %v3077 = vshrl.u32 %v2989, 16
        %v3079 = vrot.slane %v3077, 4
        %v3080 = vshll.u32 %v2989, 16
        %v3082 = vrot.slane %v3080, 5
        %v3083 = vor.u32 %v3079, %v3082
        %v3084 = vrot.slane %v3083, 4
        %v3086 = vshll.u32 %v2990, 16
        %v3088 = vrot.slane %v3086, 5
        %v3089 = vsel %vm994, %v3084, %v3088
        %v3090 = vshrl.u32 %v2990, 16
        %v3092 = vrot.slane %v3090, 4
        %v3093 = vor.u32 %v3092, %v3088
        %v3094 = vrot.slane %v3093, 4
        %v3096 = vshll.u32 %v2991, 16
        %v3098 = vrot.slane %v3096, 5
        %v3099 = vsel %vm994, %v3094, %v3098
        %v3101 = vshrl.u32 %v2992, 16
        %v3103 = vrot.slane %v3101, 4
        %v3104 = vshll.u32 %v2992, 16
        %v3106 = vrot.slane %v3104, 5
        %v3107 = vor.u32 %v3103, %v3106
        %v3108 = vrot.slane %v3107, 4
        %v3110 = vshll.u32 %v2993, 16
        %v3112 = vrot.slane %v3110, 5
        %v3113 = vsel %vm994, %v3108, %v3112
        %v3114 = vshrl.u32 %v2993, 16
        %v3116 = vrot.slane %v3114, 4
        %v3117 = vor.u32 %v3116, %v3112
        %v3118 = vrot.slane %v3117, 4
        %v3120 = vshll.u32 %v2994, 16
        %v3122 = vrot.slane %v3120, 5
        %v3123 = vsel %vm994, %v3118, %v3122
        %v3125 = vshrl.u32 %v2995, 16
        %v3127 = vrot.slane %v3125, 4
        %v3128 = vshll.u32 %v2995, 16
        %v3130 = vrot.slane %v3128, 5
        %v3131 = vor.u32 %v3127, %v3130
        %v3132 = vrot.slane %v3131, 4
        %v3134 = vshll.u32 %v2996, 16
        %v3136 = vrot.slane %v3134, 5
        %v3137 = vsel %vm994, %v3132, %v3136
        %v3138 = vshrl.u32 %v2996, 16
        %v3140 = vrot.slane %v3138, 4
        %v3141 = vor.u32 %v3140, %v3136
        %v3142 = vrot.slane %v3141, 4
        %v3144 = vshll.u32 %v2997, 16
        %v3146 = vrot.slane %v3144, 5
        %v3147 = vsel %vm994, %v3142, %v3146
        %v3149 = vshrl.u32 %v2998, 16
        %v3151 = vrot.slane %v3149, 4
        %v3152 = vshll.u32 %v2998, 16
        %v3154 = vrot.slane %v3152, 5
        %v3155 = vor.u32 %v3151, %v3154
        %v3156 = vrot.slane %v3155, 4
        %v3158 = vshll.u32 %v2999, 16
        %v3160 = vrot.slane %v3158, 5
        %v3161 = vsel %vm994, %v3156, %v3160
        %v3162 = vshrl.u32 %v2999, 16
        %v3164 = vrot.slane %v3162, 4
        %v3165 = vor.u32 %v3164, %v3160
        %v3166 = vrot.slane %v3165, 4
        %v3168 = vshll.u32 %v3000, 16
        %v3170 = vrot.slane %v3168, 5
        %v3171 = vsel %vm994, %v3166, %v3170
        %v3173 = vshrl.u32 %v3001, 16
        %v3175 = vrot.slane %v3173, 4
        %v3176 = vshll.u32 %v3001, 16
        %v3178 = vrot.slane %v3176, 5
        %v3179 = vor.u32 %v3175, %v3178
        %v3180 = vrot.slane %v3179, 4
        %v3182 = vshll.u32 %v3002, 16
        %v3184 = vrot.slane %v3182, 5
        %v3185 = vsel %vm994, %v3180, %v3184
        %v3186 = vshrl.u32 %v3002, 16
        %v3188 = vrot.slane %v3186, 4
        %v3189 = vor.u32 %v3188, %v3184
        %v3190 = vrot.slane %v3189, 4
        %v3192 = vshll.u32 %v3003, 16
        %v3194 = vrot.slane %v3192, 5
        %v3195 = vsel %vm994, %v3190, %v3194
        %s3196 = scalar_lea.vmem %s3, 224
        %v3197 = vld [vmem:[%s3196] sm:$0xf]
        %v3198 = vld [vmem:[%s3196 + $0x4] sm:$0xf]
        %v3199 = vld [vmem:[%s3196 + $0x8] sm:$0xf]
        %v3200 = vld [vmem:[%s3196 + $0xc] sm:$0xf]
        %v3201 = vld [vmem:[%s3196 + $0x10] sm:$0xf]
        %v3202 = vld [vmem:[%s3196 + $0x14] sm:$0xf]
        %v3203 = vld [vmem:[%s3196 + $0x18] sm:$0xf]
        %v3204 = vld [vmem:[%s3196 + $0x1c] sm:$0xf]
        %v3205 = vunpack.c.l.b16 %v3017
        %v3206 = vunpack.c.l.b16 %v3027
        %v3207 = vunpack.c.l.b16 %v3041
        %v3208 = vunpack.c.l.b16 %v3051
        %v3209 = vunpack.c.l.b16 %v3065
        %v3210 = vunpack.c.l.b16 %v3075
        %v3211 = vunpack.c.l.b16 %v3089
        %v3212 = vunpack.c.l.b16 %v3099
        %v3213 = vunpack.c.l.b16 %v3113
        %v3214 = vunpack.c.l.b16 %v3123
        %v3215 = vunpack.c.l.b16 %v3137
        %v3216 = vunpack.c.l.b16 %v3147
        %v3217 = vunpack.c.l.b16 %v3161
        %v3218 = vunpack.c.l.b16 %v3171
        %v3219 = vunpack.c.l.b16 %v3185
        %v3220 = vunpack.c.l.b16 %v3195
        %v3221 = vpack.c.b16 %v3206, %v3205
        %v3222 = vpack.c.b16 %v3208, %v3207
        %v3223 = vpack.c.b16 %v3210, %v3209
        %v3224 = vpack.c.b16 %v3212, %v3211
        %v3225 = vpack.c.b16 %v3214, %v3213
        %v3226 = vpack.c.b16 %v3216, %v3215
        %v3227 = vpack.c.b16 %v3218, %v3217
        %v3228 = vpack.c.b16 %v3220, %v3219
        %v3237 = vunpack.c.l.b16 %v3197
        %v3238 = vunpack.c.l.b16 %v3198
        %v3239 = vunpack.c.l.b16 %v3199
        %v3240 = vunpack.c.l.b16 %v3200
        %v3241 = vunpack.c.l.b16 %v3201
        %v3242 = vunpack.c.l.b16 %v3202
        %v3243 = vunpack.c.l.b16 %v3203
        %v3244 = vunpack.c.l.b16 %v3204
        %v3245 = vpack.c.b16 %v3238, %v3237
        %v3246 = vpack.c.b16 %v3240, %v3239
        %v3247 = vpack.c.b16 %v3242, %v3241
        %v3248 = vpack.c.b16 %v3244, %v3243
        %v3254 = vsel %vm1244, %v3221, 0
        %v3257 = vsel %vm1244, %v3222, 0
        %v3260 = vsel %vm1244, %v3223, 0
        %v3263 = vsel %vm1244, %v3224, 0
        %v3266 = vsel %vm1244, %v3225, 0
        %v3269 = vsel %vm1244, %v3226, 0
        %v3272 = vsel %vm1244, %v3227, 0
        %v3275 = vsel %vm1244, %v3228, 0
        %3277 = vmatprep.subr.bf16.mxu0 0
        %3278 = vmatpush1.bf16.msra.mxu0 0
        %3279 = vmatprep.subr.bf16.mxu0 0
        %3280 = vmatpush1.bf16.msra.mxu0 0
        %3281 = vmatprep.subr.bf16.mxu0 0
        %3282 = vmatpush1.bf16.msra.mxu0 0
        %3283 = vmatprep.subr.bf16.mxu0 0
        %3284 = vmatpush1.bf16.msra.mxu0 0
        %3285 = vmatprep.subr.bf16.mxu0 0
        %3286 = vmatpush1.bf16.msra.mxu0 %v3248
        %3287 = vmatprep.subr.bf16.mxu0 0
        %3288 = vmatpush1.bf16.msra.mxu0 %v3247
        %3289 = vmatprep.subr.bf16.mxu0 0
        %3290 = vmatpush1.bf16.msra.mxu0 %v3246
        %3291 = vmatprep.subr.bf16.mxu0 0
        %3292 = vmatpush1.bf16.msra.mxu0 %v3245
        %3293 = vmatprep.subr.bf16.mxu0 0
        %3294 = vmatpush2.bf16.msra.mxu0 0
        %3295 = vmatprep.subr.bf16.mxu0 0
        %3296 = vmatpush2.bf16.msra.mxu0 0
        %3297 = vmatprep.subr.bf16.mxu0 0
        %3298 = vmatpush2.bf16.msra.mxu0 0
        %3299 = vmatprep.subr.bf16.mxu0 0
        %3300 = vmatpush2.bf16.msra.mxu0 0
        %3301 = vmatprep.subr.bf16.mxu0 0
        %3302 = vmatpush2.bf16.msra.mxu0 0
        %3303 = vmatprep.subr.bf16.mxu0 0
        %3304 = vmatpush2.bf16.msra.mxu0 0
        %3305 = vmatprep.subr.bf16.mxu0 0
        %3306 = vmatpush2.bf16.msra.mxu0 0
        %3307 = vmatprep.subr.bf16.mxu0 0
        %3308 = vmatpush2.bf16.msra.mxu0 0
        %3309 = vmatprep.mubr.bf16.mxu0 0
        %3310 = vmatmul.mubr.bf16.gmra.mxu0 %v3254
        %v3311 = vpop.f32.mrf.mxu0
        %v3312 = vadd.f32 0.0, %v3311
        %v3313 = vpop.f32.mrf.mxu0
        %v3314 = vpop.f32.mrf.mxu0
        %v3315 = vadd.f32 0.0, %v3314
        %v3316 = vpop.f32.mrf.mxu0
        %3317 = vmatprep.mubr.bf16.mxu0 0
        %3318 = vmatmul.mubr.bf16.gmra.mxu0 %v3257
        %v3319 = vpop.f32.mrf.mxu0
        %v3320 = vadd.f32 0.0, %v3319
        %v3321 = vpop.f32.mrf.mxu0
        %v3322 = vpop.f32.mrf.mxu0
        %v3323 = vadd.f32 0.0, %v3322
        %v3324 = vpop.f32.mrf.mxu0
        %3325 = vmatprep.mubr.bf16.mxu0 0
        %3326 = vmatmul.mubr.bf16.gmra.mxu0 %v3260
        %v3327 = vpop.f32.mrf.mxu0
        %v3328 = vadd.f32 0.0, %v3327
        %v3329 = vpop.f32.mrf.mxu0
        %v3330 = vpop.f32.mrf.mxu0
        %v3331 = vadd.f32 0.0, %v3330
        %v3332 = vpop.f32.mrf.mxu0
        %3333 = vmatprep.mubr.bf16.mxu0 0
        %3334 = vmatmul.mubr.bf16.gmra.mxu0 %v3263
        %v3335 = vpop.f32.mrf.mxu0
        %v3336 = vadd.f32 0.0, %v3335
        %v3337 = vpop.f32.mrf.mxu0
        %v3338 = vpop.f32.mrf.mxu0
        %v3339 = vadd.f32 0.0, %v3338
        %v3340 = vpop.f32.mrf.mxu0
        %3341 = vmatprep.mubr.bf16.mxu0 0
        %3342 = vmatmul.mubr.bf16.gmra.mxu0 %v3266
        %v3343 = vpop.f32.mrf.mxu0
        %v3344 = vadd.f32 0.0, %v3343
        %v3345 = vpop.f32.mrf.mxu0
        %v3346 = vpop.f32.mrf.mxu0
        %v3347 = vadd.f32 0.0, %v3346
        %v3348 = vpop.f32.mrf.mxu0
        %3349 = vmatprep.mubr.bf16.mxu0 0
        %3350 = vmatmul.mubr.bf16.gmra.mxu0 %v3269
        %v3351 = vpop.f32.mrf.mxu0
        %v3352 = vadd.f32 0.0, %v3351
        %v3353 = vpop.f32.mrf.mxu0
        %v3354 = vpop.f32.mrf.mxu0
        %v3355 = vadd.f32 0.0, %v3354
        %v3356 = vpop.f32.mrf.mxu0
        %3357 = vmatprep.mubr.bf16.mxu0 0
        %3358 = vmatmul.mubr.bf16.gmra.mxu0 %v3272
        %v3359 = vpop.f32.mrf.mxu0
        %v3360 = vadd.f32 0.0, %v3359
        %v3361 = vpop.f32.mrf.mxu0
        %v3362 = vpop.f32.mrf.mxu0
        %v3363 = vadd.f32 0.0, %v3362
        %v3364 = vpop.f32.mrf.mxu0
        %3365 = vmatprep.mubr.bf16.mxu0 0
        %3366 = vmatmul.mubr.bf16.gmra.mxu0 %v3275
        %v3367 = vpop.f32.mrf.mxu0
        %v3368 = vadd.f32 0.0, %v3367
        %v3369 = vpop.f32.mrf.mxu0
        %v3370 = vpop.f32.mrf.mxu0
        %v3371 = vadd.f32 0.0, %v3370
        %v3372 = vpop.f32.mrf.mxu0
        %3373 = vdwg.mxu0
        %v3374 = vadd.f32 %v2964, %v3312
        %v3375 = vadd.f32 %v2965, %v3315
        %v3376 = vadd.f32 %v2966, %v3320
        %v3377 = vadd.f32 %v2967, %v3323
        %v3378 = vadd.f32 %v2968, %v3328
        %v3379 = vadd.f32 %v2969, %v3331
        %v3380 = vadd.f32 %v2970, %v3336
        %v3381 = vadd.f32 %v2971, %v3339
        %v3382 = vadd.f32 %v2972, %v3344
        %v3383 = vadd.f32 %v2973, %v3347
        %v3384 = vadd.f32 %v2974, %v3352
        %v3385 = vadd.f32 %v2975, %v3355
        %v3386 = vadd.f32 %v2976, %v3360
        %v3387 = vadd.f32 %v2977, %v3363
        %v3388 = vadd.f32 %v2978, %v3368
        %v3389 = vadd.f32 %v2979, %v3371
        %v3390 = vld [vmem:[%s2753] sm:$0xe]
        %v3391 = vld [vmem:[%s2753 + $0xc] sm:$0xe]
        %v3392 = vld [vmem:[%s2753 + $0x18] sm:$0xe]
        %v3393 = vld [vmem:[%s2753 + $0x24] sm:$0xe]
        %v3394 = vld [vmem:[%s2753 + $0x30] sm:$0xe]
        %v3395 = vld [vmem:[%s2753 + $0x3c] sm:$0xe]
        %v3396 = vld [vmem:[%s2753 + $0x48] sm:$0xe]
        %v3397 = vld [vmem:[%s2753 + $0x54] sm:$0xe]
        %v3422 = vrot.slane %v3390, 5
        %v3423 = vrot.slane %v3422, 4
        %v3424 = vrot.slane %v2981, 5
        %v3425 = vsel %vm1577, %v3423, %v3424
        %v3426 = vrot.slane %v3424, 4
        %v3427 = vrot.slane %v2982, 5
        %v3428 = vsel %vm1577, %v3426, %v3427
        %v3429 = vrot.slane %v3391, 5
        %v3430 = vrot.slane %v3429, 4
        %v3431 = vrot.slane %v2984, 5
        %v3432 = vsel %vm1577, %v3430, %v3431
        %v3433 = vrot.slane %v3431, 4
        %v3434 = vrot.slane %v2985, 5
        %v3435 = vsel %vm1577, %v3433, %v3434
        %v3436 = vrot.slane %v3392, 5
        %v3437 = vrot.slane %v3436, 4
        %v3438 = vrot.slane %v2987, 5
        %v3439 = vsel %vm1577, %v3437, %v3438
        %v3440 = vrot.slane %v3438, 4
        %v3441 = vrot.slane %v2988, 5
        %v3442 = vsel %vm1577, %v3440, %v3441
        %v3443 = vrot.slane %v3393, 5
        %v3444 = vrot.slane %v3443, 4
        %v3445 = vrot.slane %v2990, 5
        %v3446 = vsel %vm1577, %v3444, %v3445
        %v3447 = vrot.slane %v3445, 4
        %v3448 = vrot.slane %v2991, 5
        %v3449 = vsel %vm1577, %v3447, %v3448
        %v3450 = vrot.slane %v3394, 5
        %v3451 = vrot.slane %v3450, 4
        %v3452 = vrot.slane %v2993, 5
        %v3453 = vsel %vm1577, %v3451, %v3452
        %v3454 = vrot.slane %v3452, 4
        %v3455 = vrot.slane %v2994, 5
        %v3456 = vsel %vm1577, %v3454, %v3455
        %v3457 = vrot.slane %v3395, 5
        %v3458 = vrot.slane %v3457, 4
        %v3459 = vrot.slane %v2996, 5
        %v3460 = vsel %vm1577, %v3458, %v3459
        %v3461 = vrot.slane %v3459, 4
        %v3462 = vrot.slane %v2997, 5
        %v3463 = vsel %vm1577, %v3461, %v3462
        %v3464 = vrot.slane %v3396, 5
        %v3465 = vrot.slane %v3464, 4
        %v3466 = vrot.slane %v2999, 5
        %v3467 = vsel %vm1577, %v3465, %v3466
        %v3468 = vrot.slane %v3466, 4
        %v3469 = vrot.slane %v3000, 5
        %v3470 = vsel %vm1577, %v3468, %v3469
        %v3471 = vrot.slane %v3397, 5
        %v3472 = vrot.slane %v3471, 4
        %v3473 = vrot.slane %v3002, 5
        %v3474 = vsel %vm1577, %v3472, %v3473
        %v3475 = vrot.slane %v3473, 4
        %v3476 = vrot.slane %v3003, 5
        %v3477 = vsel %vm1577, %v3475, %v3476
        %s3478 = scalar_lea.vmem %s3, 256
        %v3479 = vld [vmem:[%s3478] sm:$0xf]
        %v3480 = vld [vmem:[%s3478 + $0x4] sm:$0xf]
        %v3481 = vld [vmem:[%s3478 + $0x8] sm:$0xf]
        %v3482 = vld [vmem:[%s3478 + $0xc] sm:$0xf]
        %v3483 = vld [vmem:[%s3478 + $0x10] sm:$0xf]
        %v3484 = vld [vmem:[%s3478 + $0x14] sm:$0xf]
        %v3485 = vld [vmem:[%s3478 + $0x18] sm:$0xf]
        %v3486 = vld [vmem:[%s3478 + $0x1c] sm:$0xf]
        %v3487 = vunpack.c.l.b16 %v3425
        %v3488 = vunpack.c.l.b16 %v3428
        %v3489 = vunpack.c.l.b16 %v3432
        %v3490 = vunpack.c.l.b16 %v3435
        %v3491 = vunpack.c.l.b16 %v3439
        %v3492 = vunpack.c.l.b16 %v3442
        %v3493 = vunpack.c.l.b16 %v3446
        %v3494 = vunpack.c.l.b16 %v3449
        %v3495 = vunpack.c.l.b16 %v3453
        %v3496 = vunpack.c.l.b16 %v3456
        %v3497 = vunpack.c.l.b16 %v3460
        %v3498 = vunpack.c.l.b16 %v3463
        %v3499 = vunpack.c.l.b16 %v3467
        %v3500 = vunpack.c.l.b16 %v3470
        %v3501 = vunpack.c.l.b16 %v3474
        %v3502 = vunpack.c.l.b16 %v3477
        %v3503 = vpack.c.b16 %v3488, %v3487
        %v3504 = vpack.c.b16 %v3490, %v3489
        %v3505 = vpack.c.b16 %v3492, %v3491
        %v3506 = vpack.c.b16 %v3494, %v3493
        %v3507 = vpack.c.b16 %v3496, %v3495
        %v3508 = vpack.c.b16 %v3498, %v3497
        %v3509 = vpack.c.b16 %v3500, %v3499
        %v3510 = vpack.c.b16 %v3502, %v3501
        %v3519 = vunpack.c.l.b16 %v3479
        %v3520 = vunpack.c.l.b16 %v3480
        %v3521 = vunpack.c.l.b16 %v3481
        %v3522 = vunpack.c.l.b16 %v3482
        %v3523 = vunpack.c.l.b16 %v3483
        %v3524 = vunpack.c.l.b16 %v3484
        %v3525 = vunpack.c.l.b16 %v3485
        %v3526 = vunpack.c.l.b16 %v3486
        %v3527 = vpack.c.b16 %v3520, %v3519
        %v3528 = vpack.c.b16 %v3522, %v3521
        %v3529 = vpack.c.b16 %v3524, %v3523
        %v3530 = vpack.c.b16 %v3526, %v3525
        %v3536 = vsel %vm1244, %v3503, 0
        %v3539 = vsel %vm1244, %v3504, 0
        %v3542 = vsel %vm1244, %v3505, 0
        %v3545 = vsel %vm1244, %v3506, 0
        %v3548 = vsel %vm1244, %v3507, 0
        %v3551 = vsel %vm1244, %v3508, 0
        %v3554 = vsel %vm1244, %v3509, 0
        %v3557 = vsel %vm1244, %v3510, 0
        %3559 = vmatprep.subr.bf16.mxu0 0
        %3560 = vmatpush1.bf16.msra.mxu0 0
        %3561 = vmatprep.subr.bf16.mxu0 0
        %3562 = vmatpush1.bf16.msra.mxu0 0
        %3563 = vmatprep.subr.bf16.mxu0 0
        %3564 = vmatpush1.bf16.msra.mxu0 0
        %3565 = vmatprep.subr.bf16.mxu0 0
        %3566 = vmatpush1.bf16.msra.mxu0 0
        %3567 = vmatprep.subr.bf16.mxu0 0
        %3568 = vmatpush1.bf16.msra.mxu0 %v3530
        %3569 = vmatprep.subr.bf16.mxu0 0
        %3570 = vmatpush1.bf16.msra.mxu0 %v3529
        %3571 = vmatprep.subr.bf16.mxu0 0
        %3572 = vmatpush1.bf16.msra.mxu0 %v3528
        %3573 = vmatprep.subr.bf16.mxu0 0
        %3574 = vmatpush1.bf16.msra.mxu0 %v3527
        %3575 = vmatprep.subr.bf16.mxu0 0
        %3576 = vmatpush2.bf16.msra.mxu0 0
        %3577 = vmatprep.subr.bf16.mxu0 0
        %3578 = vmatpush2.bf16.msra.mxu0 0
        %3579 = vmatprep.subr.bf16.mxu0 0
        %3580 = vmatpush2.bf16.msra.mxu0 0
        %3581 = vmatprep.subr.bf16.mxu0 0
        %3582 = vmatpush2.bf16.msra.mxu0 0
        %3583 = vmatprep.subr.bf16.mxu0 0
        %3584 = vmatpush2.bf16.msra.mxu0 0
        %3585 = vmatprep.subr.bf16.mxu0 0
        %3586 = vmatpush2.bf16.msra.mxu0 0
        %3587 = vmatprep.subr.bf16.mxu0 0
        %3588 = vmatpush2.bf16.msra.mxu0 0
        %3589 = vmatprep.subr.bf16.mxu0 0
        %3590 = vmatpush2.bf16.msra.mxu0 0
        %3591 = vmatprep.mubr.bf16.mxu0 0
        %3592 = vmatmul.mubr.bf16.gmra.mxu0 %v3536
        %v3593 = vpop.f32.mrf.mxu0
        %v3594 = vadd.f32 0.0, %v3593
        %v3595 = vpop.f32.mrf.mxu0
        %v3596 = vpop.f32.mrf.mxu0
        %v3597 = vadd.f32 0.0, %v3596
        %v3598 = vpop.f32.mrf.mxu0
        %3599 = vmatprep.mubr.bf16.mxu0 0
        %3600 = vmatmul.mubr.bf16.gmra.mxu0 %v3539
        %v3601 = vpop.f32.mrf.mxu0
        %v3602 = vadd.f32 0.0, %v3601
        %v3603 = vpop.f32.mrf.mxu0
        %v3604 = vpop.f32.mrf.mxu0
        %v3605 = vadd.f32 0.0, %v3604
        %v3606 = vpop.f32.mrf.mxu0
        %3607 = vmatprep.mubr.bf16.mxu0 0
        %3608 = vmatmul.mubr.bf16.gmra.mxu0 %v3542
        %v3609 = vpop.f32.mrf.mxu0
        %v3610 = vadd.f32 0.0, %v3609
        %v3611 = vpop.f32.mrf.mxu0
        %v3612 = vpop.f32.mrf.mxu0
        %v3613 = vadd.f32 0.0, %v3612
        %v3614 = vpop.f32.mrf.mxu0
        %3615 = vmatprep.mubr.bf16.mxu0 0
        %3616 = vmatmul.mubr.bf16.gmra.mxu0 %v3545
        %v3617 = vpop.f32.mrf.mxu0
        %v3618 = vadd.f32 0.0, %v3617
        %v3619 = vpop.f32.mrf.mxu0
        %v3620 = vpop.f32.mrf.mxu0
        %v3621 = vadd.f32 0.0, %v3620
        %v3622 = vpop.f32.mrf.mxu0
        %3623 = vmatprep.mubr.bf16.mxu0 0
        %3624 = vmatmul.mubr.bf16.gmra.mxu0 %v3548
        %v3625 = vpop.f32.mrf.mxu0
        %v3626 = vadd.f32 0.0, %v3625
        %v3627 = vpop.f32.mrf.mxu0
        %v3628 = vpop.f32.mrf.mxu0
        %v3629 = vadd.f32 0.0, %v3628
        %v3630 = vpop.f32.mrf.mxu0
        %3631 = vmatprep.mubr.bf16.mxu0 0
        %3632 = vmatmul.mubr.bf16.gmra.mxu0 %v3551
        %v3633 = vpop.f32.mrf.mxu0
        %v3634 = vadd.f32 0.0, %v3633
        %v3635 = vpop.f32.mrf.mxu0
        %v3636 = vpop.f32.mrf.mxu0
        %v3637 = vadd.f32 0.0, %v3636
        %v3638 = vpop.f32.mrf.mxu0
        %3639 = vmatprep.mubr.bf16.mxu0 0
        %3640 = vmatmul.mubr.bf16.gmra.mxu0 %v3554
        %v3641 = vpop.f32.mrf.mxu0
        %v3642 = vadd.f32 0.0, %v3641
        %v3643 = vpop.f32.mrf.mxu0
        %v3644 = vpop.f32.mrf.mxu0
        %v3645 = vadd.f32 0.0, %v3644
        %v3646 = vpop.f32.mrf.mxu0
        %3647 = vmatprep.mubr.bf16.mxu0 0
        %3648 = vmatmul.mubr.bf16.gmra.mxu0 %v3557
        %v3649 = vpop.f32.mrf.mxu0
        %v3650 = vadd.f32 0.0, %v3649
        %v3651 = vpop.f32.mrf.mxu0
        %v3652 = vpop.f32.mrf.mxu0
        %v3653 = vadd.f32 0.0, %v3652
        %v3654 = vpop.f32.mrf.mxu0
        %3655 = vdwg.mxu0
        %v3656 = vadd.f32 %v3374, %v3594
        %v3657 = vadd.f32 %v3375, %v3597
        %v3658 = vadd.f32 %v3376, %v3602
        %v3659 = vadd.f32 %v3377, %v3605
        %v3660 = vadd.f32 %v3378, %v3610
        %v3661 = vadd.f32 %v3379, %v3613
        %v3662 = vadd.f32 %v3380, %v3618
        %v3663 = vadd.f32 %v3381, %v3621
        %v3664 = vadd.f32 %v3382, %v3626
        %v3665 = vadd.f32 %v3383, %v3629
        %v3666 = vadd.f32 %v3384, %v3634
        %v3667 = vadd.f32 %v3385, %v3637
        %v3668 = vadd.f32 %v3386, %v3642
        %v3669 = vadd.f32 %v3387, %v3645
        %v3670 = vadd.f32 %v3388, %v3650
        %v3671 = vadd.f32 %v3389, %v3653
        %3672 = vst.msk [vmem:[#allocation4] sm:$0xff] %vm368, %v3656
        %3673 = vst.msk [vmem:[#allocation4 + $0x8] sm:$0xff] %vm368, %v3657
        %3674 = vst.msk [vmem:[#allocation4 + $0x10] sm:$0xff] %vm368, %v3658
        %3675 = vst.msk [vmem:[#allocation4 + $0x18] sm:$0xff] %vm368, %v3659
        %3676 = vst.msk [vmem:[#allocation4 + $0x20] sm:$0xff] %vm368, %v3660
        %3677 = vst.msk [vmem:[#allocation4 + $0x28] sm:$0xff] %vm368, %v3661
        %3678 = vst.msk [vmem:[#allocation4 + $0x30] sm:$0xff] %vm368, %v3662
        %3679 = vst.msk [vmem:[#allocation4 + $0x38] sm:$0xff] %vm368, %v3663
        %3680 = vst.msk [vmem:[#allocation4 + $0x40] sm:$0xff] %vm368, %v3664
        %3681 = vst.msk [vmem:[#allocation4 + $0x48] sm:$0xff] %vm368, %v3665
        %3682 = vst.msk [vmem:[#allocation4 + $0x50] sm:$0xff] %vm368, %v3666
        %3683 = vst.msk [vmem:[#allocation4 + $0x58] sm:$0xff] %vm368, %v3667
        %3684 = vst.msk [vmem:[#allocation4 + $0x60] sm:$0xff] %vm368, %v3668
        %3685 = vst.msk [vmem:[#allocation4 + $0x68] sm:$0xff] %vm368, %v3669
        %3686 = vst.msk [vmem:[#allocation4 + $0x70] sm:$0xff] %vm368, %v3670
        %3687 = vst.msk [vmem:[#allocation4 + $0x78] sm:$0xff] %vm368, %v3671
        %v3688 = vld [vmem:[#allocation4] ss:$2 sm:$0xff]
        %s3689 = scalar_lea.vmem [#allocation4], 16
        %v3690 = vld [vmem:[%s3689] ss:$2 sm:$0xff]
        %s3691 = scalar_lea.vmem [#allocation4], 32
        %v3692 = vld [vmem:[%s3691] ss:$2 sm:$0xff]
        %s3693 = scalar_lea.vmem [#allocation4], 48
        %v3694 = vld [vmem:[%s3693] ss:$2 sm:$0xff]
        %s3695 = scalar_lea.vmem [#allocation4], 64
        %v3696 = vld [vmem:[%s3695] ss:$2 sm:$0xff]
        %s3697 = scalar_lea.vmem [#allocation4], 80
        %v3698 = vld [vmem:[%s3697] ss:$2 sm:$0xff]
        %s3699 = scalar_lea.vmem [#allocation4], 96
        %v3700 = vld [vmem:[%s3699] ss:$2 sm:$0xff]
        %s3701 = scalar_lea.vmem [#allocation4], 112
        %v3702 = vld [vmem:[%s3701] ss:$2 sm:$0xff]
        %s3703 = scalar_lea.vmem [#allocation4], 1
        %v3704 = vld [vmem:[%s3703] ss:$2 sm:$0xff]
        %s3705 = scalar_lea.vmem [#allocation4], 17
        %v3706 = vld [vmem:[%s3705] ss:$2 sm:$0xff]
        %s3707 = scalar_lea.vmem [#allocation4], 33
        %v3708 = vld [vmem:[%s3707] ss:$2 sm:$0xff]
        %s3709 = scalar_lea.vmem [#allocation4], 49
        %v3710 = vld [vmem:[%s3709] ss:$2 sm:$0xff]
        %s3711 = scalar_lea.vmem [#allocation4], 65
        %v3712 = vld [vmem:[%s3711] ss:$2 sm:$0xff]
        %s3713 = scalar_lea.vmem [#allocation4], 81
        %v3714 = vld [vmem:[%s3713] ss:$2 sm:$0xff]
        %s3715 = scalar_lea.vmem [#allocation4], 97
        %v3716 = vld [vmem:[%s3715] ss:$2 sm:$0xff]
        %s3717 = scalar_lea.vmem [#allocation4], 113
        %v3718 = vld [vmem:[%s3717] ss:$2 sm:$0xff]
        %v3719 = vmax.f32 %v3688, %v3704
        %v3720 = vmax.f32 %v3690, %v3706
        %v3721 = vmax.f32 %v3692, %v3708
        %v3722 = vmax.f32 %v3694, %v3710
        %v3723 = vmax.f32 %v3696, %v3712
        %v3724 = vmax.f32 %v3698, %v3714
        %v3725 = vmax.f32 %v3700, %v3716
        %v3726 = vmax.f32 %v3702, %v3718
        %v3727 = vmax.f32 %v3719, %v3720
        %v3728 = vmax.f32 %v3721, %v3722
        %v3729 = vmax.f32 %v3723, %v3724
        %v3730 = vmax.f32 %v3725, %v3726
        %s3731 = smul.u32 %s951, 4
        %s3732 = sadd.s32 %s3731, 1
        %s3733 = smul.u32 %s3732, 16
        %s3734 = scalar_lea.vmem [#allocation3], %s3733
        %3735 = vst.msk [vmem:[%s3734 + $0x1] sm:$0xff] %vm368, %v3727
        %3736 = vst.msk [vmem:[%s3734 + $0x11] sm:$0xff] %vm368, %v3728
        %3737 = vst.msk [vmem:[%s3734 + $0x21] sm:$0xff] %vm368, %v3729
        %3738 = vst.msk [vmem:[%s3734 + $0x31] sm:$0xff] %vm368, %v3730
      $region52: #{model_forward.2} parent=39 // loop_footer
        %s955 = sadd.s32 1, %s951
      $region53: #{model_forward.2} parent=39 // loop_footer_branch
        %950 = sbr.rel target = $region49
      $region54: #{model_forward.2} parent=39 // loop_exit
        _
      %s3739 = smul.u32 0, 16
      %s3740 = scalar_lea.vmem [#allocation3], %s3739
      %v3741 = vld [vmem:[%s3740] sm:$0xff]
      %v3742 = vld [vmem:[%s3740 + $0x10] sm:$0xff]
      %v3743 = vld [vmem:[%s3740 + $0x20] sm:$0xff]
      %v3744 = vld [vmem:[%s3740 + $0x30] sm:$0xff]
      %v3745 = vld [vmem:[%s3740 + $0x40] sm:$0xff]
      %v3746 = vld [vmem:[%s3740 + $0x50] sm:$0xff]
      %v3747 = vld [vmem:[%s3740 + $0x60] sm:$0xff]
      %v3748 = vld [vmem:[%s3740 + $0x70] sm:$0xff]
      %v3749 = vld [vmem:[%s4] sm:$0xf]
      %v3750 = vld [vmem:[%s4 + $0x4] sm:$0xf]
      %v3751 = vld [vmem:[%s4 + $0x8] sm:$0xf]
      %v3752 = vld [vmem:[%s4 + $0xc] sm:$0xf]
      %v3753 = vld [vmem:[%s3740 + $0x1] sm:$0xff]
      %v3754 = vld [vmem:[%s3740 + $0x11] sm:$0xff]
      %v3755 = vld [vmem:[%s3740 + $0x21] sm:$0xff]
      %v3756 = vld [vmem:[%s3740 + $0x31] sm:$0xff]
      %v3757 = vld [vmem:[%s3740 + $0x41] sm:$0xff]
      %v3758 = vld [vmem:[%s3740 + $0x51] sm:$0xff]
      %v3759 = vld [vmem:[%s3740 + $0x61] sm:$0xff]
      %v3760 = vld [vmem:[%s3740 + $0x71] sm:$0xff]
      %s3761 = scalar_lea.vmem %s4, 16
      %v3762 = vld [vmem:[%s3761] sm:$0xf]
      %v3763 = vld [vmem:[%s3761 + $0x4] sm:$0xf]
      %v3764 = vld [vmem:[%s3761 + $0x8] sm:$0xf]
      %v3765 = vld [vmem:[%s3761 + $0xc] sm:$0xf]
      %v3770 = vunpack.c.l.b16 %v3762
      %v3771 = vunpack.c.l.b16 %v3763
      %v3772 = vunpack.c.l.b16 %v3764
      %v3773 = vunpack.c.l.b16 %v3765
      %v3774 = vpack.c.b16 %v3771, %v3770
      %v3775 = vpack.c.b16 %v3773, %v3772
      %v3779 = vsel %vm368, %v3753, 0
      %v3782 = vsel %vm368, %v3754, 0
      %v3785 = vsel %vm368, %v3755, 0
      %v3788 = vsel %vm368, %v3756, 0
      %v3791 = vsel %vm368, %v3757, 0
      %v3794 = vsel %vm368, %v3758, 0
      %v3797 = vsel %vm368, %v3759, 0
      %v3800 = vsel %vm368, %v3760, 0
      %3802 = vmatprep.subr.bf16.mxu0 0
      %3803 = vmatpush1.bf16.msra.mxu0 0
      %3804 = vmatprep.subr.bf16.mxu0 0
      %3805 = vmatpush1.bf16.msra.mxu0 0
      %3806 = vmatprep.subr.bf16.mxu0 0
      %3807 = vmatpush1.bf16.msra.mxu0 0
      %3808 = vmatprep.subr.bf16.mxu0 0
      %3809 = vmatpush1.bf16.msra.mxu0 0
      %3810 = vmatprep.subr.bf16.mxu0 0
      %3811 = vmatpush1.bf16.msra.mxu0 0
      %3812 = vmatprep.subr.bf16.mxu0 0
      %3813 = vmatpush1.bf16.msra.mxu0 0
      %3814 = vmatprep.subr.bf16.mxu0 0
      %3815 = vmatpush1.bf16.msra.mxu0 %v3775
      %3816 = vmatprep.subr.bf16.mxu0 0
      %3817 = vmatpush1.bf16.msra.mxu0 %v3774
      %3818 = vmatprep.subr.bf16.mxu0 0
      %3819 = vmatpush2.bf16.msra.mxu0 0
      %3820 = vmatprep.subr.bf16.mxu0 0
      %3821 = vmatpush2.bf16.msra.mxu0 0
      %3822 = vmatprep.subr.bf16.mxu0 0
      %3823 = vmatpush2.bf16.msra.mxu0 0
      %3824 = vmatprep.subr.bf16.mxu0 0
      %3825 = vmatpush2.bf16.msra.mxu0 0
      %3826 = vmatprep.subr.bf16.mxu0 0
      %3827 = vmatpush2.bf16.msra.mxu0 0
      %3828 = vmatprep.subr.bf16.mxu0 0
      %3829 = vmatpush2.bf16.msra.mxu0 0
      %3830 = vmatprep.subr.bf16.mxu0 0
      %3831 = vmatpush2.bf16.msra.mxu0 0
      %3832 = vmatprep.subr.bf16.mxu0 0
      %3833 = vmatpush2.bf16.msra.mxu0 0
      %3834 = vmatprep.mubr.f32.mxu0 0.0
      %3835 = vmatmul.mubr.f32.gmra.mxu0 %v3779
      %v3836 = vpop.f32.mrf.mxu0
      %v3837 = vadd.f32 0.0, %v3836
      %v3838 = vpop.f32.mrf.mxu0
      %3839 = vmatprep.mubr.f32.mxu0 0.0
      %3840 = vmatmul.mubr.f32.gmra.mxu0 %v3782
      %v3841 = vpop.f32.mrf.mxu0
      %v3842 = vadd.f32 0.0, %v3841
      %v3843 = vpop.f32.mrf.mxu0
      %3844 = vmatprep.mubr.f32.mxu0 0.0
      %3845 = vmatmul.mubr.f32.gmra.mxu0 %v3785
      %v3846 = vpop.f32.mrf.mxu0
      %v3847 = vadd.f32 0.0, %v3846
      %v3848 = vpop.f32.mrf.mxu0
      %3849 = vmatprep.mubr.f32.mxu0 0.0
      %3850 = vmatmul.mubr.f32.gmra.mxu0 %v3788
      %v3851 = vpop.f32.mrf.mxu0
      %v3852 = vadd.f32 0.0, %v3851
      %v3853 = vpop.f32.mrf.mxu0
      %3854 = vmatprep.mubr.f32.mxu0 0.0
      %3855 = vmatmul.mubr.f32.gmra.mxu0 %v3791
      %v3856 = vpop.f32.mrf.mxu0
      %v3857 = vadd.f32 0.0, %v3856
      %v3858 = vpop.f32.mrf.mxu0
      %3859 = vmatprep.mubr.f32.mxu0 0.0
      %3860 = vmatmul.mubr.f32.gmra.mxu0 %v3794
      %v3861 = vpop.f32.mrf.mxu0
      %v3862 = vadd.f32 0.0, %v3861
      %v3863 = vpop.f32.mrf.mxu0
      %3864 = vmatprep.mubr.f32.mxu0 0.0
      %3865 = vmatmul.mubr.f32.gmra.mxu0 %v3797
      %v3866 = vpop.f32.mrf.mxu0
      %v3867 = vadd.f32 0.0, %v3866
      %v3868 = vpop.f32.mrf.mxu0
      %3869 = vmatprep.mubr.f32.mxu0 0.0
      %3870 = vmatmul.mubr.f32.gmra.mxu0 %v3800
      %v3871 = vpop.f32.mrf.mxu0
      %v3872 = vadd.f32 0.0, %v3871
      %v3873 = vpop.f32.mrf.mxu0
      %3874 = vdwg.mxu0
      %v3879 = vunpack.c.l.b16 %v3749
      %v3880 = vunpack.c.l.b16 %v3750
      %v3881 = vunpack.c.l.b16 %v3751
      %v3882 = vunpack.c.l.b16 %v3752
      %v3883 = vpack.c.b16 %v3880, %v3879
      %v3884 = vpack.c.b16 %v3882, %v3881
      %v3888 = vsel %vm368, %v3741, 0
      %v3891 = vsel %vm368, %v3742, 0
      %v3894 = vsel %vm368, %v3743, 0
      %v3897 = vsel %vm368, %v3744, 0
      %v3900 = vsel %vm368, %v3745, 0
      %v3903 = vsel %vm368, %v3746, 0
      %v3906 = vsel %vm368, %v3747, 0
      %v3909 = vsel %vm368, %v3748, 0
      %3911 = vmatprep.subr.bf16.mxu0 0
      %3912 = vmatpush1.bf16.msra.mxu0 0
      %3913 = vmatprep.subr.bf16.mxu0 0
      %3914 = vmatpush1.bf16.msra.mxu0 0
      %3915 = vmatprep.subr.bf16.mxu0 0
      %3916 = vmatpush1.bf16.msra.mxu0 0
      %3917 = vmatprep.subr.bf16.mxu0 0
      %3918 = vmatpush1.bf16.msra.mxu0 0
      %3919 = vmatprep.subr.bf16.mxu0 0
      %3920 = vmatpush1.bf16.msra.mxu0 0
      %3921 = vmatprep.subr.bf16.mxu0 0
      %3922 = vmatpush1.bf16.msra.mxu0 0
      %3923 = vmatprep.subr.bf16.mxu0 0
      %3924 = vmatpush1.bf16.msra.mxu0 %v3884
      %3925 = vmatprep.subr.bf16.mxu0 0
      %3926 = vmatpush1.bf16.msra.mxu0 %v3883
      %3927 = vmatprep.subr.bf16.mxu0 0
      %3928 = vmatpush2.bf16.msra.mxu0 0
      %3929 = vmatprep.subr.bf16.mxu0 0
      %3930 = vmatpush2.bf16.msra.mxu0 0
      %3931 = vmatprep.subr.bf16.mxu0 0
      %3932 = vmatpush2.bf16.msra.mxu0 0
      %3933 = vmatprep.subr.bf16.mxu0 0
      %3934 = vmatpush2.bf16.msra.mxu0 0
      %3935 = vmatprep.subr.bf16.mxu0 0
      %3936 = vmatpush2.bf16.msra.mxu0 0
      %3937 = vmatprep.subr.bf16.mxu0 0
      %3938 = vmatpush2.bf16.msra.mxu0 0
      %3939 = vmatprep.subr.bf16.mxu0 0
      %3940 = vmatpush2.bf16.msra.mxu0 0
      %3941 = vmatprep.subr.bf16.mxu0 0
      %3942 = vmatpush2.bf16.msra.mxu0 0
      %3943 = vmatprep.mubr.f32.mxu0 0.0
      %3944 = vmatmul.mubr.f32.gmra.mxu0 %v3888
      %v3945 = vpop.f32.mrf.mxu0
      %v3946 = vadd.f32 %v3837, %v3945
      %v3947 = vpop.f32.mrf.mxu0
      %3948 = vmatprep.mubr.f32.mxu0 0.0
      %3949 = vmatmul.mubr.f32.gmra.mxu0 %v3891
      %v3950 = vpop.f32.mrf.mxu0
      %v3951 = vadd.f32 %v3842, %v3950
      %v3952 = vpop.f32.mrf.mxu0
      %3953 = vmatprep.mubr.f32.mxu0 0.0
      %3954 = vmatmul.mubr.f32.gmra.mxu0 %v3894
      %v3955 = vpop.f32.mrf.mxu0
      %v3956 = vadd.f32 %v3847, %v3955
      %v3957 = vpop.f32.mrf.mxu0
      %3958 = vmatprep.mubr.f32.mxu0 0.0
      %3959 = vmatmul.mubr.f32.gmra.mxu0 %v3897
      %v3960 = vpop.f32.mrf.mxu0
      %v3961 = vadd.f32 %v3852, %v3960
      %v3962 = vpop.f32.mrf.mxu0
      %3963 = vmatprep.mubr.f32.mxu0 0.0
      %3964 = vmatmul.mubr.f32.gmra.mxu0 %v3900
      %v3965 = vpop.f32.mrf.mxu0
      %v3966 = vadd.f32 %v3857, %v3965
      %v3967 = vpop.f32.mrf.mxu0
      %3968 = vmatprep.mubr.f32.mxu0 0.0
      %3969 = vmatmul.mubr.f32.gmra.mxu0 %v3903
      %v3970 = vpop.f32.mrf.mxu0
      %v3971 = vadd.f32 %v3862, %v3970
      %v3972 = vpop.f32.mrf.mxu0
      %3973 = vmatprep.mubr.f32.mxu0 0.0
      %3974 = vmatmul.mubr.f32.gmra.mxu0 %v3906
      %v3975 = vpop.f32.mrf.mxu0
      %v3976 = vadd.f32 %v3867, %v3975
      %v3977 = vpop.f32.mrf.mxu0
      %3978 = vmatprep.mubr.f32.mxu0 0.0
      %3979 = vmatmul.mubr.f32.gmra.mxu0 %v3909
      %v3980 = vpop.f32.mrf.mxu0
      %v3981 = vadd.f32 %v3872, %v3980
      %v3982 = vpop.f32.mrf.mxu0
      %3983 = vdwg.mxu0
      %v3984 = vld [vmem:[%s3740 + $0x2] sm:$0xff]
      %v3985 = vld [vmem:[%s3740 + $0x12] sm:$0xff]
      %v3986 = vld [vmem:[%s3740 + $0x22] sm:$0xff]
      %v3987 = vld [vmem:[%s3740 + $0x32] sm:$0xff]
      %v3988 = vld [vmem:[%s3740 + $0x42] sm:$0xff]
      %v3989 = vld [vmem:[%s3740 + $0x52] sm:$0xff]
      %v3990 = vld [vmem:[%s3740 + $0x62] sm:$0xff]
      %v3991 = vld [vmem:[%s3740 + $0x72] sm:$0xff]
      %s3992 = scalar_lea.vmem %s4, 32
      %v3993 = vld [vmem:[%s3992] sm:$0xf]
      %v3994 = vld [vmem:[%s3992 + $0x4] sm:$0xf]
      %v3995 = vld [vmem:[%s3992 + $0x8] sm:$0xf]
      %v3996 = vld [vmem:[%s3992 + $0xc] sm:$0xf]
      %v4001 = vunpack.c.l.b16 %v3993
      %v4002 = vunpack.c.l.b16 %v3994
      %v4003 = vunpack.c.l.b16 %v3995
      %v4004 = vunpack.c.l.b16 %v3996
      %v4005 = vpack.c.b16 %v4002, %v4001
      %v4006 = vpack.c.b16 %v4004, %v4003
      %v4010 = vsel %vm368, %v3984, 0
      %v4013 = vsel %vm368, %v3985, 0
      %v4016 = vsel %vm368, %v3986, 0
      %v4019 = vsel %vm368, %v3987, 0
      %v4022 = vsel %vm368, %v3988, 0
      %v4025 = vsel %vm368, %v3989, 0
      %v4028 = vsel %vm368, %v3990, 0
      %v4031 = vsel %vm368, %v3991, 0
      %4033 = vmatprep.subr.bf16.mxu0 0
      %4034 = vmatpush1.bf16.msra.mxu0 0
      %4035 = vmatprep.subr.bf16.mxu0 0
      %4036 = vmatpush1.bf16.msra.mxu0 0
      %4037 = vmatprep.subr.bf16.mxu0 0
      %4038 = vmatpush1.bf16.msra.mxu0 0
      %4039 = vmatprep.subr.bf16.mxu0 0
      %4040 = vmatpush1.bf16.msra.mxu0 0
      %4041 = vmatprep.subr.bf16.mxu0 0
      %4042 = vmatpush1.bf16.msra.mxu0 0
      %4043 = vmatprep.subr.bf16.mxu0 0
      %4044 = vmatpush1.bf16.msra.mxu0 0
      %4045 = vmatprep.subr.bf16.mxu0 0
      %4046 = vmatpush1.bf16.msra.mxu0 %v4006
      %4047 = vmatprep.subr.bf16.mxu0 0
      %4048 = vmatpush1.bf16.msra.mxu0 %v4005
      %4049 = vmatprep.subr.bf16.mxu0 0
      %4050 = vmatpush2.bf16.msra.mxu0 0
      %4051 = vmatprep.subr.bf16.mxu0 0
      %4052 = vmatpush2.bf16.msra.mxu0 0
      %4053 = vmatprep.subr.bf16.mxu0 0
      %4054 = vmatpush2.bf16.msra.mxu0 0
      %4055 = vmatprep.subr.bf16.mxu0 0
      %4056 = vmatpush2.bf16.msra.mxu0 0
      %4057 = vmatprep.subr.bf16.mxu0 0
      %4058 = vmatpush2.bf16.msra.mxu0 0
      %4059 = vmatprep.subr.bf16.mxu0 0
      %4060 = vmatpush2.bf16.msra.mxu0 0
      %4061 = vmatprep.subr.bf16.mxu0 0
      %4062 = vmatpush2.bf16.msra.mxu0 0
      %4063 = vmatprep.subr.bf16.mxu0 0
      %4064 = vmatpush2.bf16.msra.mxu0 0
      %4065 = vmatprep.mubr.f32.mxu0 0.0
      %4066 = vmatmul.mubr.f32.gmra.mxu0 %v4010
      %v4067 = vpop.f32.mrf.mxu0
      %v4068 = vadd.f32 0.0, %v4067
      %v4069 = vpop.f32.mrf.mxu0
      %4070 = vmatprep.mubr.f32.mxu0 0.0
      %4071 = vmatmul.mubr.f32.gmra.mxu0 %v4013
      %v4072 = vpop.f32.mrf.mxu0
      %v4073 = vadd.f32 0.0, %v4072
      %v4074 = vpop.f32.mrf.mxu0
      %4075 = vmatprep.mubr.f32.mxu0 0.0
      %4076 = vmatmul.mubr.f32.gmra.mxu0 %v4016
      %v4077 = vpop.f32.mrf.mxu0
      %v4078 = vadd.f32 0.0, %v4077
      %v4079 = vpop.f32.mrf.mxu0
      %4080 = vmatprep.mubr.f32.mxu0 0.0
      %4081 = vmatmul.mubr.f32.gmra.mxu0 %v4019
      %v4082 = vpop.f32.mrf.mxu0
      %v4083 = vadd.f32 0.0, %v4082
      %v4084 = vpop.f32.mrf.mxu0
      %4085 = vmatprep.mubr.f32.mxu0 0.0
      %4086 = vmatmul.mubr.f32.gmra.mxu0 %v4022
      %v4087 = vpop.f32.mrf.mxu0
      %v4088 = vadd.f32 0.0, %v4087
      %v4089 = vpop.f32.mrf.mxu0
      %4090 = vmatprep.mubr.f32.mxu0 0.0
      %4091 = vmatmul.mubr.f32.gmra.mxu0 %v4025
      %v4092 = vpop.f32.mrf.mxu0
      %v4093 = vadd.f32 0.0, %v4092
      %v4094 = vpop.f32.mrf.mxu0
      %4095 = vmatprep.mubr.f32.mxu0 0.0
      %4096 = vmatmul.mubr.f32.gmra.mxu0 %v4028
      %v4097 = vpop.f32.mrf.mxu0
      %v4098 = vadd.f32 0.0, %v4097
      %v4099 = vpop.f32.mrf.mxu0
      %4100 = vmatprep.mubr.f32.mxu0 0.0
      %4101 = vmatmul.mubr.f32.gmra.mxu0 %v4031
      %v4102 = vpop.f32.mrf.mxu0
      %v4103 = vadd.f32 0.0, %v4102
      %v4104 = vpop.f32.mrf.mxu0
      %4105 = vdwg.mxu0
      %v4106 = vadd.f32 %v3946, %v4068
      %v4107 = vadd.f32 %v3951, %v4073
      %v4108 = vadd.f32 %v3956, %v4078
      %v4109 = vadd.f32 %v3961, %v4083
      %v4110 = vadd.f32 %v3966, %v4088
      %v4111 = vadd.f32 %v3971, %v4093
      %v4112 = vadd.f32 %v3976, %v4098
      %v4113 = vadd.f32 %v3981, %v4103
      %s4114 = sadd.s32 0, 1
      %s4115 = smul.u32 %s4114, 16
      %s4116 = scalar_lea.vmem [#allocation3], %s4115
      %v4117 = vld [vmem:[%s4116] sm:$0xff]
      %v4118 = vld [vmem:[%s4116 + $0x10] sm:$0xff]
      %v4119 = vld [vmem:[%s4116 + $0x20] sm:$0xff]
      %v4120 = vld [vmem:[%s4116 + $0x30] sm:$0xff]
      %v4121 = vld [vmem:[%s4116 + $0x40] sm:$0xff]
      %v4122 = vld [vmem:[%s4116 + $0x50] sm:$0xff]
      %v4123 = vld [vmem:[%s4116 + $0x60] sm:$0xff]
      %v4124 = vld [vmem:[%s4116 + $0x70] sm:$0xff]
      %s4125 = scalar_lea.vmem %s4, 48
      %v4126 = vld [vmem:[%s4125] sm:$0xf]
      %v4127 = vld [vmem:[%s4125 + $0x4] sm:$0xf]
      %v4128 = vld [vmem:[%s4125 + $0x8] sm:$0xf]
      %v4129 = vld [vmem:[%s4125 + $0xc] sm:$0xf]
      %v4134 = vunpack.c.l.b16 %v4126
      %v4135 = vunpack.c.l.b16 %v4127
      %v4136 = vunpack.c.l.b16 %v4128
      %v4137 = vunpack.c.l.b16 %v4129
      %v4138 = vpack.c.b16 %v4135, %v4134
      %v4139 = vpack.c.b16 %v4137, %v4136
      %v4143 = vsel %vm368, %v4117, 0
      %v4146 = vsel %vm368, %v4118, 0
      %v4149 = vsel %vm368, %v4119, 0
      %v4152 = vsel %vm368, %v4120, 0
      %v4155 = vsel %vm368, %v4121, 0
      %v4158 = vsel %vm368, %v4122, 0
      %v4161 = vsel %vm368, %v4123, 0
      %v4164 = vsel %vm368, %v4124, 0
      %4166 = vmatprep.subr.bf16.mxu0 0
      %4167 = vmatpush1.bf16.msra.mxu0 0
      %4168 = vmatprep.subr.bf16.mxu0 0
      %4169 = vmatpush1.bf16.msra.mxu0 0
      %4170 = vmatprep.subr.bf16.mxu0 0
      %4171 = vmatpush1.bf16.msra.mxu0 0
      %4172 = vmatprep.subr.bf16.mxu0 0
      %4173 = vmatpush1.bf16.msra.mxu0 0
      %4174 = vmatprep.subr.bf16.mxu0 0
      %4175 = vmatpush1.bf16.msra.mxu0 0
      %4176 = vmatprep.subr.bf16.mxu0 0
      %4177 = vmatpush1.bf16.msra.mxu0 0
      %4178 = vmatprep.subr.bf16.mxu0 0
      %4179 = vmatpush1.bf16.msra.mxu0 %v4139
      %4180 = vmatprep.subr.bf16.mxu0 0
      %4181 = vmatpush1.bf16.msra.mxu0 %v4138
      %4182 = vmatprep.subr.bf16.mxu0 0
      %4183 = vmatpush2.bf16.msra.mxu0 0
      %4184 = vmatprep.subr.bf16.mxu0 0
      %4185 = vmatpush2.bf16.msra.mxu0 0
      %4186 = vmatprep.subr.bf16.mxu0 0
      %4187 = vmatpush2.bf16.msra.mxu0 0
      %4188 = vmatprep.subr.bf16.mxu0 0
      %4189 = vmatpush2.bf16.msra.mxu0 0
      %4190 = vmatprep.subr.bf16.mxu0 0
      %4191 = vmatpush2.bf16.msra.mxu0 0
      %4192 = vmatprep.subr.bf16.mxu0 0
      %4193 = vmatpush2.bf16.msra.mxu0 0
      %4194 = vmatprep.subr.bf16.mxu0 0
      %4195 = vmatpush2.bf16.msra.mxu0 0
      %4196 = vmatprep.subr.bf16.mxu0 0
      %4197 = vmatpush2.bf16.msra.mxu0 0
      %4198 = vmatprep.mubr.f32.mxu0 0.0
      %4199 = vmatmul.mubr.f32.gmra.mxu0 %v4143
      %v4200 = vpop.f32.mrf.mxu0
      %v4201 = vadd.f32 0.0, %v4200
      %v4202 = vpop.f32.mrf.mxu0
      %4203 = vmatprep.mubr.f32.mxu0 0.0
      %4204 = vmatmul.mubr.f32.gmra.mxu0 %v4146
      %v4205 = vpop.f32.mrf.mxu0
      %v4206 = vadd.f32 0.0, %v4205
      %v4207 = vpop.f32.mrf.mxu0
      %4208 = vmatprep.mubr.f32.mxu0 0.0
      %4209 = vmatmul.mubr.f32.gmra.mxu0 %v4149
      %v4210 = vpop.f32.mrf.mxu0
      %v4211 = vadd.f32 0.0, %v4210
      %v4212 = vpop.f32.mrf.mxu0
      %4213 = vmatprep.mubr.f32.mxu0 0.0
      %4214 = vmatmul.mubr.f32.gmra.mxu0 %v4152
      %v4215 = vpop.f32.mrf.mxu0
      %v4216 = vadd.f32 0.0, %v4215
      %v4217 = vpop.f32.mrf.mxu0
      %4218 = vmatprep.mubr.f32.mxu0 0.0
      %4219 = vmatmul.mubr.f32.gmra.mxu0 %v4155
      %v4220 = vpop.f32.mrf.mxu0
      %v4221 = vadd.f32 0.0, %v4220
      %v4222 = vpop.f32.mrf.mxu0
      %4223 = vmatprep.mubr.f32.mxu0 0.0
      %4224 = vmatmul.mubr.f32.gmra.mxu0 %v4158
      %v4225 = vpop.f32.mrf.mxu0
      %v4226 = vadd.f32 0.0, %v4225
      %v4227 = vpop.f32.mrf.mxu0
      %4228 = vmatprep.mubr.f32.mxu0 0.0
      %4229 = vmatmul.mubr.f32.gmra.mxu0 %v4161
      %v4230 = vpop.f32.mrf.mxu0
      %v4231 = vadd.f32 0.0, %v4230
      %v4232 = vpop.f32.mrf.mxu0
      %4233 = vmatprep.mubr.f32.mxu0 0.0
      %4234 = vmatmul.mubr.f32.gmra.mxu0 %v4164
      %v4235 = vpop.f32.mrf.mxu0
      %v4236 = vadd.f32 0.0, %v4235
      %v4237 = vpop.f32.mrf.mxu0
      %4238 = vdwg.mxu0
      %v4239 = vadd.f32 %v4106, %v4201
      %v4240 = vadd.f32 %v4107, %v4206
      %v4241 = vadd.f32 %v4108, %v4211
      %v4242 = vadd.f32 %v4109, %v4216
      %v4243 = vadd.f32 %v4110, %v4221
      %v4244 = vadd.f32 %v4111, %v4226
      %v4245 = vadd.f32 %v4112, %v4231
      %v4246 = vadd.f32 %v4113, %v4236
      %v4247 = vld [vmem:[%s4116 + $0x1] sm:$0xff]
      %v4248 = vld [vmem:[%s4116 + $0x11] sm:$0xff]
      %v4249 = vld [vmem:[%s4116 + $0x21] sm:$0xff]
      %v4250 = vld [vmem:[%s4116 + $0x31] sm:$0xff]
      %v4251 = vld [vmem:[%s4116 + $0x41] sm:$0xff]
      %v4252 = vld [vmem:[%s4116 + $0x51] sm:$0xff]
      %v4253 = vld [vmem:[%s4116 + $0x61] sm:$0xff]
      %v4254 = vld [vmem:[%s4116 + $0x71] sm:$0xff]
      %s4255 = scalar_lea.vmem %s4, 64
      %v4256 = vld [vmem:[%s4255] sm:$0xf]
      %v4257 = vld [vmem:[%s4255 + $0x4] sm:$0xf]
      %v4258 = vld [vmem:[%s4255 + $0x8] sm:$0xf]
      %v4259 = vld [vmem:[%s4255 + $0xc] sm:$0xf]
      %v4264 = vunpack.c.l.b16 %v4256
      %v4265 = vunpack.c.l.b16 %v4257
      %v4266 = vunpack.c.l.b16 %v4258
      %v4267 = vunpack.c.l.b16 %v4259
      %v4268 = vpack.c.b16 %v4265, %v4264
      %v4269 = vpack.c.b16 %v4267, %v4266
      %v4273 = vsel %vm368, %v4247, 0
      %v4276 = vsel %vm368, %v4248, 0
      %v4279 = vsel %vm368, %v4249, 0
      %v4282 = vsel %vm368, %v4250, 0
      %v4285 = vsel %vm368, %v4251, 0
      %v4288 = vsel %vm368, %v4252, 0
      %v4291 = vsel %vm368, %v4253, 0
      %v4294 = vsel %vm368, %v4254, 0
      %4296 = vmatprep.subr.bf16.mxu0 0
      %4297 = vmatpush1.bf16.msra.mxu0 0
      %4298 = vmatprep.subr.bf16.mxu0 0
      %4299 = vmatpush1.bf16.msra.mxu0 0
      %4300 = vmatprep.subr.bf16.mxu0 0
      %4301 = vmatpush1.bf16.msra.mxu0 0
      %4302 = vmatprep.subr.bf16.mxu0 0
      %4303 = vmatpush1.bf16.msra.mxu0 0
      %4304 = vmatprep.subr.bf16.mxu0 0
      %4305 = vmatpush1.bf16.msra.mxu0 0
      %4306 = vmatprep.subr.bf16.mxu0 0
      %4307 = vmatpush1.bf16.msra.mxu0 0
      %4308 = vmatprep.subr.bf16.mxu0 0
      %4309 = vmatpush1.bf16.msra.mxu0 %v4269
      %4310 = vmatprep.subr.bf16.mxu0 0
      %4311 = vmatpush1.bf16.msra.mxu0 %v4268
      %4312 = vmatprep.subr.bf16.mxu0 0
      %4313 = vmatpush2.bf16.msra.mxu0 0
      %4314 = vmatprep.subr.bf16.mxu0 0
      %4315 = vmatpush2.bf16.msra.mxu0 0
      %4316 = vmatprep.subr.bf16.mxu0 0
      %4317 = vmatpush2.bf16.msra.mxu0 0
      %4318 = vmatprep.subr.bf16.mxu0 0
      %4319 = vmatpush2.bf16.msra.mxu0 0
      %4320 = vmatprep.subr.bf16.mxu0 0
      %4321 = vmatpush2.bf16.msra.mxu0 0
      %4322 = vmatprep.subr.bf16.mxu0 0
      %4323 = vmatpush2.bf16.msra.mxu0 0
      %4324 = vmatprep.subr.bf16.mxu0 0
      %4325 = vmatpush2.bf16.msra.mxu0 0
      %4326 = vmatprep.subr.bf16.mxu0 0
      %4327 = vmatpush2.bf16.msra.mxu0 0
      %4328 = vmatprep.mubr.f32.mxu0 0.0
      %4329 = vmatmul.mubr.f32.gmra.mxu0 %v4273
      %v4330 = vpop.f32.mrf.mxu0
      %v4331 = vadd.f32 0.0, %v4330
      %v4332 = vpop.f32.mrf.mxu0
      %4333 = vmatprep.mubr.f32.mxu0 0.0
      %4334 = vmatmul.mubr.f32.gmra.mxu0 %v4276
      %v4335 = vpop.f32.mrf.mxu0
      %v4336 = vadd.f32 0.0, %v4335
      %v4337 = vpop.f32.mrf.mxu0
      %4338 = vmatprep.mubr.f32.mxu0 0.0
      %4339 = vmatmul.mubr.f32.gmra.mxu0 %v4279
      %v4340 = vpop.f32.mrf.mxu0
      %v4341 = vadd.f32 0.0, %v4340
      %v4342 = vpop.f32.mrf.mxu0
      %4343 = vmatprep.mubr.f32.mxu0 0.0
      %4344 = vmatmul.mubr.f32.gmra.mxu0 %v4282
      %v4345 = vpop.f32.mrf.mxu0
      %v4346 = vadd.f32 0.0, %v4345
      %v4347 = vpop.f32.mrf.mxu0
      %4348 = vmatprep.mubr.f32.mxu0 0.0
      %4349 = vmatmul.mubr.f32.gmra.mxu0 %v4285
      %v4350 = vpop.f32.mrf.mxu0
      %v4351 = vadd.f32 0.0, %v4350
      %v4352 = vpop.f32.mrf.mxu0
      %4353 = vmatprep.mubr.f32.mxu0 0.0
      %4354 = vmatmul.mubr.f32.gmra.mxu0 %v4288
      %v4355 = vpop.f32.mrf.mxu0
      %v4356 = vadd.f32 0.0, %v4355
      %v4357 = vpop.f32.mrf.mxu0
      %4358 = vmatprep.mubr.f32.mxu0 0.0
      %4359 = vmatmul.mubr.f32.gmra.mxu0 %v4291
      %v4360 = vpop.f32.mrf.mxu0
      %v4361 = vadd.f32 0.0, %v4360
      %v4362 = vpop.f32.mrf.mxu0
      %4363 = vmatprep.mubr.f32.mxu0 0.0
      %4364 = vmatmul.mubr.f32.gmra.mxu0 %v4294
      %v4365 = vpop.f32.mrf.mxu0
      %v4366 = vadd.f32 0.0, %v4365
      %v4367 = vpop.f32.mrf.mxu0
      %4368 = vdwg.mxu0
      %v4369 = vadd.f32 %v4239, %v4331
      %v4370 = vadd.f32 %v4240, %v4336
      %v4371 = vadd.f32 %v4241, %v4341
      %v4372 = vadd.f32 %v4242, %v4346
      %v4373 = vadd.f32 %v4243, %v4351
      %v4374 = vadd.f32 %v4244, %v4356
      %v4375 = vadd.f32 %v4245, %v4361
      %v4376 = vadd.f32 %v4246, %v4366
      %v4377 = vld [vmem:[%s4116 + $0x2] sm:$0xff]
      %v4378 = vld [vmem:[%s4116 + $0x12] sm:$0xff]
      %v4379 = vld [vmem:[%s4116 + $0x22] sm:$0xff]
      %v4380 = vld [vmem:[%s4116 + $0x32] sm:$0xff]
      %v4381 = vld [vmem:[%s4116 + $0x42] sm:$0xff]
      %v4382 = vld [vmem:[%s4116 + $0x52] sm:$0xff]
      %v4383 = vld [vmem:[%s4116 + $0x62] sm:$0xff]
      %v4384 = vld [vmem:[%s4116 + $0x72] sm:$0xff]
      %s4385 = scalar_lea.vmem %s4, 80
      %v4386 = vld [vmem:[%s4385] sm:$0xf]
      %v4387 = vld [vmem:[%s4385 + $0x4] sm:$0xf]
      %v4388 = vld [vmem:[%s4385 + $0x8] sm:$0xf]
      %v4389 = vld [vmem:[%s4385 + $0xc] sm:$0xf]
      %v4394 = vunpack.c.l.b16 %v4386
      %v4395 = vunpack.c.l.b16 %v4387
      %v4396 = vunpack.c.l.b16 %v4388
      %v4397 = vunpack.c.l.b16 %v4389
      %v4398 = vpack.c.b16 %v4395, %v4394
      %v4399 = vpack.c.b16 %v4397, %v4396
      %v4403 = vsel %vm368, %v4377, 0
      %v4406 = vsel %vm368, %v4378, 0
      %v4409 = vsel %vm368, %v4379, 0
      %v4412 = vsel %vm368, %v4380, 0
      %v4415 = vsel %vm368, %v4381, 0
      %v4418 = vsel %vm368, %v4382, 0
      %v4421 = vsel %vm368, %v4383, 0
      %v4424 = vsel %vm368, %v4384, 0
      %4426 = vmatprep.subr.bf16.mxu0 0
      %4427 = vmatpush1.bf16.msra.mxu0 0
      %4428 = vmatprep.subr.bf16.mxu0 0
      %4429 = vmatpush1.bf16.msra.mxu0 0
      %4430 = vmatprep.subr.bf16.mxu0 0
      %4431 = vmatpush1.bf16.msra.mxu0 0
      %4432 = vmatprep.subr.bf16.mxu0 0
      %4433 = vmatpush1.bf16.msra.mxu0 0
      %4434 = vmatprep.subr.bf16.mxu0 0
      %4435 = vmatpush1.bf16.msra.mxu0 0
      %4436 = vmatprep.subr.bf16.mxu0 0
      %4437 = vmatpush1.bf16.msra.mxu0 0
      %4438 = vmatprep.subr.bf16.mxu0 0
      %4439 = vmatpush1.bf16.msra.mxu0 %v4399
      %4440 = vmatprep.subr.bf16.mxu0 0
      %4441 = vmatpush1.bf16.msra.mxu0 %v4398
      %4442 = vmatprep.subr.bf16.mxu0 0
      %4443 = vmatpush2.bf16.msra.mxu0 0
      %4444 = vmatprep.subr.bf16.mxu0 0
      %4445 = vmatpush2.bf16.msra.mxu0 0
      %4446 = vmatprep.subr.bf16.mxu0 0
      %4447 = vmatpush2.bf16.msra.mxu0 0
      %4448 = vmatprep.subr.bf16.mxu0 0
      %4449 = vmatpush2.bf16.msra.mxu0 0
      %4450 = vmatprep.subr.bf16.mxu0 0
      %4451 = vmatpush2.bf16.msra.mxu0 0
      %4452 = vmatprep.subr.bf16.mxu0 0
      %4453 = vmatpush2.bf16.msra.mxu0 0
      %4454 = vmatprep.subr.bf16.mxu0 0
      %4455 = vmatpush2.bf16.msra.mxu0 0
      %4456 = vmatprep.subr.bf16.mxu0 0
      %4457 = vmatpush2.bf16.msra.mxu0 0
      %4458 = vmatprep.mubr.f32.mxu0 0.0
      %4459 = vmatmul.mubr.f32.gmra.mxu0 %v4403
      %v4460 = vpop.f32.mrf.mxu0
      %v4461 = vadd.f32 0.0, %v4460
      %v4462 = vpop.f32.mrf.mxu0
      %4463 = vmatprep.mubr.f32.mxu0 0.0
      %4464 = vmatmul.mubr.f32.gmra.mxu0 %v4406
      %v4465 = vpop.f32.mrf.mxu0
      %v4466 = vadd.f32 0.0, %v4465
      %v4467 = vpop.f32.mrf.mxu0
      %4468 = vmatprep.mubr.f32.mxu0 0.0
      %4469 = vmatmul.mubr.f32.gmra.mxu0 %v4409
      %v4470 = vpop.f32.mrf.mxu0
      %v4471 = vadd.f32 0.0, %v4470
      %v4472 = vpop.f32.mrf.mxu0
      %4473 = vmatprep.mubr.f32.mxu0 0.0
      %4474 = vmatmul.mubr.f32.gmra.mxu0 %v4412
      %v4475 = vpop.f32.mrf.mxu0
      %v4476 = vadd.f32 0.0, %v4475
      %v4477 = vpop.f32.mrf.mxu0
      %4478 = vmatprep.mubr.f32.mxu0 0.0
      %4479 = vmatmul.mubr.f32.gmra.mxu0 %v4415
      %v4480 = vpop.f32.mrf.mxu0
      %v4481 = vadd.f32 0.0, %v4480
      %v4482 = vpop.f32.mrf.mxu0
      %4483 = vmatprep.mubr.f32.mxu0 0.0
      %4484 = vmatmul.mubr.f32.gmra.mxu0 %v4418
      %v4485 = vpop.f32.mrf.mxu0
      %v4486 = vadd.f32 0.0, %v4485
      %v4487 = vpop.f32.mrf.mxu0
      %4488 = vmatprep.mubr.f32.mxu0 0.0
      %4489 = vmatmul.mubr.f32.gmra.mxu0 %v4421
      %v4490 = vpop.f32.mrf.mxu0
      %v4491 = vadd.f32 0.0, %v4490
      %v4492 = vpop.f32.mrf.mxu0
      %4493 = vmatprep.mubr.f32.mxu0 0.0
      %4494 = vmatmul.mubr.f32.gmra.mxu0 %v4424
      %v4495 = vpop.f32.mrf.mxu0
      %v4496 = vadd.f32 0.0, %v4495
      %v4497 = vpop.f32.mrf.mxu0
      %4498 = vdwg.mxu0
      %v4499 = vadd.f32 %v4369, %v4461
      %v4500 = vadd.f32 %v4370, %v4466
      %v4501 = vadd.f32 %v4371, %v4471
      %v4502 = vadd.f32 %v4372, %v4476
      %v4503 = vadd.f32 %v4373, %v4481
      %v4504 = vadd.f32 %v4374, %v4486
      %v4505 = vadd.f32 %v4375, %v4491
      %v4506 = vadd.f32 %v4376, %v4496
      %s4507 = sadd.s32 0, 2
      %s4508 = smul.u32 %s4507, 16
      %s4509 = scalar_lea.vmem [#allocation3], %s4508
      %v4510 = vld [vmem:[%s4509] sm:$0xff]
      %v4511 = vld [vmem:[%s4509 + $0x10] sm:$0xff]
      %v4512 = vld [vmem:[%s4509 + $0x20] sm:$0xff]
      %v4513 = vld [vmem:[%s4509 + $0x30] sm:$0xff]
      %v4514 = vld [vmem:[%s4509 + $0x40] sm:$0xff]
      %v4515 = vld [vmem:[%s4509 + $0x50] sm:$0xff]
      %v4516 = vld [vmem:[%s4509 + $0x60] sm:$0xff]
      %v4517 = vld [vmem:[%s4509 + $0x70] sm:$0xff]
      %s4518 = scalar_lea.vmem %s4, 96
      %v4519 = vld [vmem:[%s4518] sm:$0xf]
      %v4520 = vld [vmem:[%s4518 + $0x4] sm:$0xf]
      %v4521 = vld [vmem:[%s4518 + $0x8] sm:$0xf]
      %v4522 = vld [vmem:[%s4518 + $0xc] sm:$0xf]
      %v4527 = vunpack.c.l.b16 %v4519
      %v4528 = vunpack.c.l.b16 %v4520
      %v4529 = vunpack.c.l.b16 %v4521
      %v4530 = vunpack.c.l.b16 %v4522
      %v4531 = vpack.c.b16 %v4528, %v4527
      %v4532 = vpack.c.b16 %v4530, %v4529
      %v4536 = vsel %vm368, %v4510, 0
      %v4539 = vsel %vm368, %v4511, 0
      %v4542 = vsel %vm368, %v4512, 0
      %v4545 = vsel %vm368, %v4513, 0
      %v4548 = vsel %vm368, %v4514, 0
      %v4551 = vsel %vm368, %v4515, 0
      %v4554 = vsel %vm368, %v4516, 0
      %v4557 = vsel %vm368, %v4517, 0
      %4559 = vmatprep.subr.bf16.mxu0 0
      %4560 = vmatpush1.bf16.msra.mxu0 0
      %4561 = vmatprep.subr.bf16.mxu0 0
      %4562 = vmatpush1.bf16.msra.mxu0 0
      %4563 = vmatprep.subr.bf16.mxu0 0
      %4564 = vmatpush1.bf16.msra.mxu0 0
      %4565 = vmatprep.subr.bf16.mxu0 0
      %4566 = vmatpush1.bf16.msra.mxu0 0
      %4567 = vmatprep.subr.bf16.mxu0 0
      %4568 = vmatpush1.bf16.msra.mxu0 0
      %4569 = vmatprep.subr.bf16.mxu0 0
      %4570 = vmatpush1.bf16.msra.mxu0 0
      %4571 = vmatprep.subr.bf16.mxu0 0
      %4572 = vmatpush1.bf16.msra.mxu0 %v4532
      %4573 = vmatprep.subr.bf16.mxu0 0
      %4574 = vmatpush1.bf16.msra.mxu0 %v4531
      %4575 = vmatprep.subr.bf16.mxu0 0
      %4576 = vmatpush2.bf16.msra.mxu0 0
      %4577 = vmatprep.subr.bf16.mxu0 0
      %4578 = vmatpush2.bf16.msra.mxu0 0
      %4579 = vmatprep.subr.bf16.mxu0 0
      %4580 = vmatpush2.bf16.msra.mxu0 0
      %4581 = vmatprep.subr.bf16.mxu0 0
      %4582 = vmatpush2.bf16.msra.mxu0 0
      %4583 = vmatprep.subr.bf16.mxu0 0
      %4584 = vmatpush2.bf16.msra.mxu0 0
      %4585 = vmatprep.subr.bf16.mxu0 0
      %4586 = vmatpush2.bf16.msra.mxu0 0
      %4587 = vmatprep.subr.bf16.mxu0 0
      %4588 = vmatpush2.bf16.msra.mxu0 0
      %4589 = vmatprep.subr.bf16.mxu0 0
      %4590 = vmatpush2.bf16.msra.mxu0 0
      %4591 = vmatprep.mubr.f32.mxu0 0.0
      %4592 = vmatmul.mubr.f32.gmra.mxu0 %v4536
      %v4593 = vpop.f32.mrf.mxu0
      %v4594 = vadd.f32 0.0, %v4593
      %v4595 = vpop.f32.mrf.mxu0
      %4596 = vmatprep.mubr.f32.mxu0 0.0
      %4597 = vmatmul.mubr.f32.gmra.mxu0 %v4539
      %v4598 = vpop.f32.mrf.mxu0
      %v4599 = vadd.f32 0.0, %v4598
      %v4600 = vpop.f32.mrf.mxu0
      %4601 = vmatprep.mubr.f32.mxu0 0.0
      %4602 = vmatmul.mubr.f32.gmra.mxu0 %v4542
      %v4603 = vpop.f32.mrf.mxu0
      %v4604 = vadd.f32 0.0, %v4603
      %v4605 = vpop.f32.mrf.mxu0
      %4606 = vmatprep.mubr.f32.mxu0 0.0
      %4607 = vmatmul.mubr.f32.gmra.mxu0 %v4545
      %v4608 = vpop.f32.mrf.mxu0
      %v4609 = vadd.f32 0.0, %v4608
      %v4610 = vpop.f32.mrf.mxu0
      %4611 = vmatprep.mubr.f32.mxu0 0.0
      %4612 = vmatmul.mubr.f32.gmra.mxu0 %v4548
      %v4613 = vpop.f32.mrf.mxu0
      %v4614 = vadd.f32 0.0, %v4613
      %v4615 = vpop.f32.mrf.mxu0
      %4616 = vmatprep.mubr.f32.mxu0 0.0
      %4617 = vmatmul.mubr.f32.gmra.mxu0 %v4551
      %v4618 = vpop.f32.mrf.mxu0
      %v4619 = vadd.f32 0.0, %v4618
      %v4620 = vpop.f32.mrf.mxu0
      %4621 = vmatprep.mubr.f32.mxu0 0.0
      %4622 = vmatmul.mubr.f32.gmra.mxu0 %v4554
      %v4623 = vpop.f32.mrf.mxu0
      %v4624 = vadd.f32 0.0, %v4623
      %v4625 = vpop.f32.mrf.mxu0
      %4626 = vmatprep.mubr.f32.mxu0 0.0
      %4627 = vmatmul.mubr.f32.gmra.mxu0 %v4557
      %v4628 = vpop.f32.mrf.mxu0
      %v4629 = vadd.f32 0.0, %v4628
      %v4630 = vpop.f32.mrf.mxu0
      %4631 = vdwg.mxu0
      %v4632 = vadd.f32 %v4499, %v4594
      %v4633 = vadd.f32 %v4500, %v4599
      %v4634 = vadd.f32 %v4501, %v4604
      %v4635 = vadd.f32 %v4502, %v4609
      %v4636 = vadd.f32 %v4503, %v4614
      %v4637 = vadd.f32 %v4504, %v4619
      %v4638 = vadd.f32 %v4505, %v4624
      %v4639 = vadd.f32 %v4506, %v4629
      %v4640 = vld [vmem:[%s4509 + $0x1] sm:$0xff]
      %v4641 = vld [vmem:[%s4509 + $0x11] sm:$0xff]
      %v4642 = vld [vmem:[%s4509 + $0x21] sm:$0xff]
      %v4643 = vld [vmem:[%s4509 + $0x31] sm:$0xff]
      %v4644 = vld [vmem:[%s4509 + $0x41] sm:$0xff]
      %v4645 = vld [vmem:[%s4509 + $0x51] sm:$0xff]
      %v4646 = vld [vmem:[%s4509 + $0x61] sm:$0xff]
      %v4647 = vld [vmem:[%s4509 + $0x71] sm:$0xff]
      %s4648 = scalar_lea.vmem %s4, 112
      %v4649 = vld [vmem:[%s4648] sm:$0xf]
      %v4650 = vld [vmem:[%s4648 + $0x4] sm:$0xf]
      %v4651 = vld [vmem:[%s4648 + $0x8] sm:$0xf]
      %v4652 = vld [vmem:[%s4648 + $0xc] sm:$0xf]
      %v4657 = vunpack.c.l.b16 %v4649
      %v4658 = vunpack.c.l.b16 %v4650
      %v4659 = vunpack.c.l.b16 %v4651
      %v4660 = vunpack.c.l.b16 %v4652
      %v4661 = vpack.c.b16 %v4658, %v4657
      %v4662 = vpack.c.b16 %v4660, %v4659
      %v4666 = vsel %vm368, %v4640, 0
      %v4669 = vsel %vm368, %v4641, 0
      %v4672 = vsel %vm368, %v4642, 0
      %v4675 = vsel %vm368, %v4643, 0
      %v4678 = vsel %vm368, %v4644, 0
      %v4681 = vsel %vm368, %v4645, 0
      %v4684 = vsel %vm368, %v4646, 0
      %v4687 = vsel %vm368, %v4647, 0
      %4689 = vmatprep.subr.bf16.mxu0 0
      %4690 = vmatpush1.bf16.msra.mxu0 0
      %4691 = vmatprep.subr.bf16.mxu0 0
      %4692 = vmatpush1.bf16.msra.mxu0 0
      %4693 = vmatprep.subr.bf16.mxu0 0
      %4694 = vmatpush1.bf16.msra.mxu0 0
      %4695 = vmatprep.subr.bf16.mxu0 0
      %4696 = vmatpush1.bf16.msra.mxu0 0
      %4697 = vmatprep.subr.bf16.mxu0 0
      %4698 = vmatpush1.bf16.msra.mxu0 0
      %4699 = vmatprep.subr.bf16.mxu0 0
      %4700 = vmatpush1.bf16.msra.mxu0 0
      %4701 = vmatprep.subr.bf16.mxu0 0
      %4702 = vmatpush1.bf16.msra.mxu0 %v4662
      %4703 = vmatprep.subr.bf16.mxu0 0
      %4704 = vmatpush1.bf16.msra.mxu0 %v4661
      %4705 = vmatprep.subr.bf16.mxu0 0
      %4706 = vmatpush2.bf16.msra.mxu0 0
      %4707 = vmatprep.subr.bf16.mxu0 0
      %4708 = vmatpush2.bf16.msra.mxu0 0
      %4709 = vmatprep.subr.bf16.mxu0 0
      %4710 = vmatpush2.bf16.msra.mxu0 0
      %4711 = vmatprep.subr.bf16.mxu0 0
      %4712 = vmatpush2.bf16.msra.mxu0 0
      %4713 = vmatprep.subr.bf16.mxu0 0
      %4714 = vmatpush2.bf16.msra.mxu0 0
      %4715 = vmatprep.subr.bf16.mxu0 0
      %4716 = vmatpush2.bf16.msra.mxu0 0
      %4717 = vmatprep.subr.bf16.mxu0 0
      %4718 = vmatpush2.bf16.msra.mxu0 0
      %4719 = vmatprep.subr.bf16.mxu0 0
      %4720 = vmatpush2.bf16.msra.mxu0 0
      %4721 = vmatprep.mubr.f32.mxu0 0.0
      %4722 = vmatmul.mubr.f32.gmra.mxu0 %v4666
      %v4723 = vpop.f32.mrf.mxu0
      %v4724 = vadd.f32 0.0, %v4723
      %v4725 = vpop.f32.mrf.mxu0
      %4726 = vmatprep.mubr.f32.mxu0 0.0
      %4727 = vmatmul.mubr.f32.gmra.mxu0 %v4669
      %v4728 = vpop.f32.mrf.mxu0
      %v4729 = vadd.f32 0.0, %v4728
      %v4730 = vpop.f32.mrf.mxu0
      %4731 = vmatprep.mubr.f32.mxu0 0.0
      %4732 = vmatmul.mubr.f32.gmra.mxu0 %v4672
      %v4733 = vpop.f32.mrf.mxu0
      %v4734 = vadd.f32 0.0, %v4733
      %v4735 = vpop.f32.mrf.mxu0
      %4736 = vmatprep.mubr.f32.mxu0 0.0
      %4737 = vmatmul.mubr.f32.gmra.mxu0 %v4675
      %v4738 = vpop.f32.mrf.mxu0
      %v4739 = vadd.f32 0.0, %v4738
      %v4740 = vpop.f32.mrf.mxu0
      %4741 = vmatprep.mubr.f32.mxu0 0.0
      %4742 = vmatmul.mubr.f32.gmra.mxu0 %v4678
      %v4743 = vpop.f32.mrf.mxu0
      %v4744 = vadd.f32 0.0, %v4743
      %v4745 = vpop.f32.mrf.mxu0
      %4746 = vmatprep.mubr.f32.mxu0 0.0
      %4747 = vmatmul.mubr.f32.gmra.mxu0 %v4681
      %v4748 = vpop.f32.mrf.mxu0
      %v4749 = vadd.f32 0.0, %v4748
      %v4750 = vpop.f32.mrf.mxu0
      %4751 = vmatprep.mubr.f32.mxu0 0.0
      %4752 = vmatmul.mubr.f32.gmra.mxu0 %v4684
      %v4753 = vpop.f32.mrf.mxu0
      %v4754 = vadd.f32 0.0, %v4753
      %v4755 = vpop.f32.mrf.mxu0
      %4756 = vmatprep.mubr.f32.mxu0 0.0
      %4757 = vmatmul.mubr.f32.gmra.mxu0 %v4687
      %v4758 = vpop.f32.mrf.mxu0
      %v4759 = vadd.f32 0.0, %v4758
      %v4760 = vpop.f32.mrf.mxu0
      %4761 = vdwg.mxu0
      %v4762 = vadd.f32 %v4632, %v4724
      %v4763 = vadd.f32 %v4633, %v4729
      %v4764 = vadd.f32 %v4634, %v4734
      %v4765 = vadd.f32 %v4635, %v4739
      %v4766 = vadd.f32 %v4636, %v4744
      %v4767 = vadd.f32 %v4637, %v4749
      %v4768 = vadd.f32 %v4638, %v4754
      %v4769 = vadd.f32 %v4639, %v4759
      %v4770 = vld [vmem:[%s4509 + $0x2] sm:$0xff]
      %v4771 = vld [vmem:[%s4509 + $0x12] sm:$0xff]
      %v4772 = vld [vmem:[%s4509 + $0x22] sm:$0xff]
      %v4773 = vld [vmem:[%s4509 + $0x32] sm:$0xff]
      %v4774 = vld [vmem:[%s4509 + $0x42] sm:$0xff]
      %v4775 = vld [vmem:[%s4509 + $0x52] sm:$0xff]
      %v4776 = vld [vmem:[%s4509 + $0x62] sm:$0xff]
      %v4777 = vld [vmem:[%s4509 + $0x72] sm:$0xff]
      %s4778 = scalar_lea.vmem %s4, 128
      %v4779 = vld [vmem:[%s4778] sm:$0xf]
      %v4780 = vld [vmem:[%s4778 + $0x4] sm:$0xf]
      %v4781 = vld [vmem:[%s4778 + $0x8] sm:$0xf]
      %v4782 = vld [vmem:[%s4778 + $0xc] sm:$0xf]
      %v4787 = vunpack.c.l.b16 %v4779
      %v4788 = vunpack.c.l.b16 %v4780
      %v4789 = vunpack.c.l.b16 %v4781
      %v4790 = vunpack.c.l.b16 %v4782
      %v4791 = vpack.c.b16 %v4788, %v4787
      %v4792 = vpack.c.b16 %v4790, %v4789
      %v4796 = vsel %vm368, %v4770, 0
      %v4799 = vsel %vm368, %v4771, 0
      %v4802 = vsel %vm368, %v4772, 0
      %v4805 = vsel %vm368, %v4773, 0
      %v4808 = vsel %vm368, %v4774, 0
      %v4811 = vsel %vm368, %v4775, 0
      %v4814 = vsel %vm368, %v4776, 0
      %v4817 = vsel %vm368, %v4777, 0
      %4819 = vmatprep.subr.bf16.mxu0 0
      %4820 = vmatpush1.bf16.msra.mxu0 0
      %4821 = vmatprep.subr.bf16.mxu0 0
      %4822 = vmatpush1.bf16.msra.mxu0 0
      %4823 = vmatprep.subr.bf16.mxu0 0
      %4824 = vmatpush1.bf16.msra.mxu0 0
      %4825 = vmatprep.subr.bf16.mxu0 0
      %4826 = vmatpush1.bf16.msra.mxu0 0
      %4827 = vmatprep.subr.bf16.mxu0 0
      %4828 = vmatpush1.bf16.msra.mxu0 0
      %4829 = vmatprep.subr.bf16.mxu0 0
      %4830 = vmatpush1.bf16.msra.mxu0 0
      %4831 = vmatprep.subr.bf16.mxu0 0
      %4832 = vmatpush1.bf16.msra.mxu0 %v4792
      %4833 = vmatprep.subr.bf16.mxu0 0
      %4834 = vmatpush1.bf16.msra.mxu0 %v4791
      %4835 = vmatprep.subr.bf16.mxu0 0
      %4836 = vmatpush2.bf16.msra.mxu0 0
      %4837 = vmatprep.subr.bf16.mxu0 0
      %4838 = vmatpush2.bf16.msra.mxu0 0
      %4839 = vmatprep.subr.bf16.mxu0 0
      %4840 = vmatpush2.bf16.msra.mxu0 0
      %4841 = vmatprep.subr.bf16.mxu0 0
      %4842 = vmatpush2.bf16.msra.mxu0 0
      %4843 = vmatprep.subr.bf16.mxu0 0
      %4844 = vmatpush2.bf16.msra.mxu0 0
      %4845 = vmatprep.subr.bf16.mxu0 0
      %4846 = vmatpush2.bf16.msra.mxu0 0
      %4847 = vmatprep.subr.bf16.mxu0 0
      %4848 = vmatpush2.bf16.msra.mxu0 0
      %4849 = vmatprep.subr.bf16.mxu0 0
      %4850 = vmatpush2.bf16.msra.mxu0 0
      %4851 = vmatprep.mubr.f32.mxu0 0.0
      %4852 = vmatmul.mubr.f32.gmra.mxu0 %v4796
      %v4853 = vpop.f32.mrf.mxu0
      %v4854 = vadd.f32 0.0, %v4853
      %v4855 = vpop.f32.mrf.mxu0
      %4856 = vmatprep.mubr.f32.mxu0 0.0
      %4857 = vmatmul.mubr.f32.gmra.mxu0 %v4799
      %v4858 = vpop.f32.mrf.mxu0
      %v4859 = vadd.f32 0.0, %v4858
      %v4860 = vpop.f32.mrf.mxu0
      %4861 = vmatprep.mubr.f32.mxu0 0.0
      %4862 = vmatmul.mubr.f32.gmra.mxu0 %v4802
      %v4863 = vpop.f32.mrf.mxu0
      %v4864 = vadd.f32 0.0, %v4863
      %v4865 = vpop.f32.mrf.mxu0
      %4866 = vmatprep.mubr.f32.mxu0 0.0
      %4867 = vmatmul.mubr.f32.gmra.mxu0 %v4805
      %v4868 = vpop.f32.mrf.mxu0
      %v4869 = vadd.f32 0.0, %v4868
      %v4870 = vpop.f32.mrf.mxu0
      %4871 = vmatprep.mubr.f32.mxu0 0.0
      %4872 = vmatmul.mubr.f32.gmra.mxu0 %v4808
      %v4873 = vpop.f32.mrf.mxu0
      %v4874 = vadd.f32 0.0, %v4873
      %v4875 = vpop.f32.mrf.mxu0
      %4876 = vmatprep.mubr.f32.mxu0 0.0
      %4877 = vmatmul.mubr.f32.gmra.mxu0 %v4811
      %v4878 = vpop.f32.mrf.mxu0
      %v4879 = vadd.f32 0.0, %v4878
      %v4880 = vpop.f32.mrf.mxu0
      %4881 = vmatprep.mubr.f32.mxu0 0.0
      %4882 = vmatmul.mubr.f32.gmra.mxu0 %v4814
      %v4883 = vpop.f32.mrf.mxu0
      %v4884 = vadd.f32 0.0, %v4883
      %v4885 = vpop.f32.mrf.mxu0
      %4886 = vmatprep.mubr.f32.mxu0 0.0
      %4887 = vmatmul.mubr.f32.gmra.mxu0 %v4817
      %v4888 = vpop.f32.mrf.mxu0
      %v4889 = vadd.f32 0.0, %v4888
      %v4890 = vpop.f32.mrf.mxu0
      %4891 = vdwg.mxu0
      %v4892 = vadd.f32 %v4762, %v4854
      %v4893 = vadd.f32 %v4763, %v4859
      %v4894 = vadd.f32 %v4764, %v4864
      %v4895 = vadd.f32 %v4765, %v4869
      %v4896 = vadd.f32 %v4766, %v4874
      %v4897 = vadd.f32 %v4767, %v4879
      %v4898 = vadd.f32 %v4768, %v4884
      %v4899 = vadd.f32 %v4769, %v4889
      %4900 = vst.msk [vmem:[#allocation5] sm:$0xff] %vm368, %v4892
      %4901 = vst.msk [vmem:[#allocation5 + $0x8] sm:$0xff] %vm368, %v4893
      %4902 = vst.msk [vmem:[#allocation5 + $0x10] sm:$0xff] %vm368, %v4894
      %4903 = vst.msk [vmem:[#allocation5 + $0x18] sm:$0xff] %vm368, %v4895
      %4904 = vst.msk [vmem:[#allocation5 + $0x20] sm:$0xff] %vm368, %v4896
      %4905 = vst.msk [vmem:[#allocation5 + $0x28] sm:$0xff] %vm368, %v4897
      %4906 = vst.msk [vmem:[#allocation5 + $0x30] sm:$0xff] %vm368, %v4898
      %4907 = vst.msk [vmem:[#allocation5 + $0x38] sm:$0xff] %vm368, %v4899
      %v4908 = vld [vmem:[#allocation5] ss:$2 sm:$0xf]
      %s4909 = scalar_lea.vmem [#allocation5], 8
      %v4910 = vld [vmem:[%s4909] ss:$2 sm:$0xf]
      %s4911 = scalar_lea.vmem [#allocation5], 16
      %v4912 = vld [vmem:[%s4911] ss:$2 sm:$0xf]
      %s4913 = scalar_lea.vmem [#allocation5], 24
      %v4914 = vld [vmem:[%s4913] ss:$2 sm:$0xf]
      %s4915 = scalar_lea.vmem [#allocation5], 32
      %v4916 = vld [vmem:[%s4915] ss:$2 sm:$0xf]
      %s4917 = scalar_lea.vmem [#allocation5], 40
      %v4918 = vld [vmem:[%s4917] ss:$2 sm:$0xf]
      %s4919 = scalar_lea.vmem [#allocation5], 48
      %v4920 = vld [vmem:[%s4919] ss:$2 sm:$0xf]
      %s4921 = scalar_lea.vmem [#allocation5], 56
      %v4922 = vld [vmem:[%s4921] ss:$2 sm:$0xf]
      %s4923 = scalar_lea.vmem [#allocation5], 1
      %v4924 = vld [vmem:[%s4923] ss:$2 sm:$0xf]
      %s4925 = scalar_lea.vmem [#allocation5], 9
      %v4926 = vld [vmem:[%s4925] ss:$2 sm:$0xf]
      %s4927 = scalar_lea.vmem [#allocation5], 17
      %v4928 = vld [vmem:[%s4927] ss:$2 sm:$0xf]
      %s4929 = scalar_lea.vmem [#allocation5], 25
      %v4930 = vld [vmem:[%s4929] ss:$2 sm:$0xf]
      %s4931 = scalar_lea.vmem [#allocation5], 33
      %v4932 = vld [vmem:[%s4931] ss:$2 sm:$0xf]
      %s4933 = scalar_lea.vmem [#allocation5], 41
      %v4934 = vld [vmem:[%s4933] ss:$2 sm:$0xf]
      %s4935 = scalar_lea.vmem [#allocation5], 49
      %v4936 = vld [vmem:[%s4935] ss:$2 sm:$0xf]
      %s4937 = scalar_lea.vmem [#allocation5], 57
      %v4938 = vld [vmem:[%s4937] ss:$2 sm:$0xf]
      %v4939 = vmax.f32 %v4908, %v4924
      %v4940 = vmax.f32 %v4910, %v4926
      %v4941 = vmax.f32 %v4912, %v4928
      %v4942 = vmax.f32 %v4914, %v4930
      %v4943 = vmax.f32 %v4916, %v4932
      %v4944 = vmax.f32 %v4918, %v4934
      %v4945 = vmax.f32 %v4920, %v4936
      %v4946 = vmax.f32 %v4922, %v4938
      %v4947 = vmax.f32 %v4939, %v4940
      %v4948 = vmax.f32 %v4941, %v4942
      %v4949 = vmax.f32 %v4943, %v4944
      %v4950 = vmax.f32 %v4945, %v4946
      %v4951 = vpack.c.bf16 %v4947, %v4947
      %v4952 = vpack.c.bf16 %v4948, %v4948
      %v4953 = vpack.c.bf16 %v4949, %v4949
      %v4954 = vpack.c.bf16 %v4950, %v4950
      %4955 = vst.msk [vmem:[%s244] sm:$0x3] %vm370, %v4951
      %4956 = vst.msk [vmem:[%s244 + $0x2] sm:$0x3] %vm370, %v4952
      %4957 = vst.msk [vmem:[%s244 + $0x4] sm:$0x3] %vm370, %v4953
      %4958 = vst.msk [vmem:[%s244 + $0x6] sm:$0x3] %vm370, %v4954
      %p4959 = scmp.lt.s32.totalorder %s16, 3
      %s4960 = scalar_select %p4959, %s16, 3
      %s4961 = smul.addr %s4960, 4
      %s4962 = smul.addr %s4961, 2
      %s4963 = scalar_lea.vmem %s5, %s4962
      // Predicated region
      $region55: #{model_forward.2} parent=39 // pred_check
        %p4964 = pneg %p149
      $region56: #{model_forward.2} parent=39 // pred_check_branch
        %4966 = sbr.rel (%p4964) target = $region58
      $region57: #{model_forward.2} parent=39 // pred_region
        _
      $region58: #{model_forward.2} parent=39 // pred_fallthru
        _
    $region40: #{model_forward.2} parent=5 // pred_fallthru
      _
    %p4967 = scmp.le.s32.totalorder 2, %s11
    // Predicated region
    $region59: #{model_forward.2} parent=5 // pred_check
      %p4968 = pneg %p4967
    $region60: #{model_forward.2} parent=5 // pred_check_branch
      %4970 = sbr.rel (%p4968) target = $region62
    $region61: #{model_forward.2} parent=5 // pred_region
      %s4971 = ssub.s32 %s11, 2
      // Predicated region
      $region63: #{model_forward.2} parent=61 // pred_check
        %p4972 = pneg %p155
      $region64: #{model_forward.2} parent=61 // pred_check_branch
        %4974 = sbr.rel (%p4972) target = $region66
      $region65: #{model_forward.2} parent=61 // pred_region
        %p4975 = scmp.lt.s32.totalorder %s17, 3
        %s4976 = scalar_select %p4975, %s17, 3
        %s4977 = smul.addr %s4976, 4
        %s4978 = smul.addr %s4977, 2
        %s4979 = scalar_lea.vmem %s5, %s4978
      $region66: #{model_forward.2} parent=61 // pred_fallthru
        _
    $region62: #{model_forward.2} parent=5 // pred_fallthru
      _
  $region6: #{model_forward.2} parent=0 // loop_footer
    %s15 = sadd.s32 1, %s11
  $region7: #{model_forward.2} parent=0 // loop_footer_branch
    %10 = sbr.rel target = $region3
  $region8: #{model_forward.2} parent=0 // loop_exit
    _

</llo_original>
